<compile_context>
chip_gen: v7x
topology: tpu7x:2x2x1
jax: 0.10.0
libtpu: 0.0.40
codegen_flags: <defaults>
</compile_context>

<pallas_src>
import functools
import math

import jax
import jax.numpy as jnp
from jax import lax
from jax.experimental import pallas as pl
from jax.experimental.pallas import tpu as pltpu

# ---------------- scaled-down ESM2 config ----------------
NUM_LAYERS = 2          # real: 33
D = 128                 # real: 1280
H = 4                   # real: 20
HD = D // H             # head dim
F = 4 * D               # ffn dim (real: 5120)
VOCAB = 33              # ESM alphabet size
NUM_LABELS = 2
OUT_PAD = 128           # classifier output padded to a full lane width
PAD_IDX = 1
MASK_IDX = 32
EPS = 1e-5
NEG_INF = -1e9


# ---------------- shared math helpers ----------------
def _layer_norm(x, g, b):
    mu = jnp.mean(x, axis=-1, keepdims=True)
    var = jnp.mean((x - mu) ** 2, axis=-1, keepdims=True)
    return (x - mu) * lax.rsqrt(var + EPS) * g + b


def _gelu(x):  # exact (erf) gelu, as used by fair-esm
    return 0.5 * x * (1.0 + lax.erf(x / jnp.float32(math.sqrt(2.0))))


def _bf16_dot(a, w):
    """Matmul with bf16 operands and f32 accumulation (reference-side helper)."""
    return jnp.dot(a.astype(jnp.bfloat16), w.astype(jnp.bfloat16),
                   preferred_element_type=jnp.float32)


def _rotate_half(x):  # classic per-head rotate_half, used by the reference
    half = x.shape[-1] // 2
    return jnp.concatenate([-x[:, half:], x[:, :half]], axis=-1)


def _rope_all_heads(x, cos, sin_neg, sin_pos):
    """RoPE on all heads at once: x is (rows, D); tables are (rows, D).

    sin_neg / sin_pos carry both the rotate_half sign and a per-lane mask, so
    two static XLU lane-rolls + elementwise math implement rotate_half for
    every head simultaneously (identical to the per-head formulation).
    pltpu.roll requires non-negative shifts, so the -half roll is expressed
    as D - half (circular)."""
    half = HD // 2
    return (x * cos
            + pltpu.roll(x, D - half, axis=1) * sin_neg
            + pltpu.roll(x, half, axis=1) * sin_pos)


# ---------------- kernel-side per-layer math (whole batch, flattened rows) ----
def _encoder_layer_math(x, cos, sneg, spos, attn_bias,
                        ln1_g, ln1_b, wq, bq, wk, bk, wv, bv, wo, bo,
                        ln2_g, ln2_b, w1, b1, w2, b2):
    """One ESM2 TransformerLayer on flattened rows x: (B*S, D) -> (B*S, D).

    attn_bias is a (B*S, B*S) additive bias: 0 for keys in the same sequence
    that are real tokens, -1e9 otherwise (block-diagonal + key-padding mask),
    which makes batched attention exactly equal to per-sequence attention."""
    bf = jnp.bfloat16
    scaling = 1.0 / math.sqrt(HD)

    # --- self-attention block (pre-LN, rotary embeddings) ---
    xn_bf = _layer_norm(x, ln1_g, ln1_b).astype(bf)          # cast hoisted once
    q = (jnp.dot(xn_bf, wq, preferred_element_type=jnp.float32) + bq) * scaling
    k = jnp.dot(xn_bf, wk, preferred_element_type=jnp.float32) + bk
    v = jnp.dot(xn_bf, wv, preferred_element_type=jnp.float32) + bv
    q_bf = _rope_all_heads(q, cos, sneg, spos).astype(bf)
    k_bf = _rope_all_heads(k, cos, sneg, spos).astype(bf)
    v_bf = v.astype(bf)

    ctx_heads = []
    for h in range(H):
        sl = slice(h * HD, (h + 1) * HD)
        # bf16 operands, f32 accumulation on the MXU
        s = jnp.einsum("qd,kd->qk", q_bf[:, sl], k_bf[:, sl],
                       preferred_element_type=jnp.float32)     # (BS, BS)
        s = s + attn_bias
        s = s - jnp.max(s, axis=-1, keepdims=True)
        p = jnp.exp(s)
        p = p * pl.reciprocal(jnp.sum(p, axis=-1, keepdims=True), approx=True)
        ctx_heads.append(jnp.dot(p.astype(bf), v_bf[:, sl],
                                 preferred_element_type=jnp.float32))  # (BS, HD)
    # fuse the output projection: one 128-deep matmul instead of 4x 32-deep
    ctx = jnp.concatenate(ctx_heads, axis=-1).astype(bf)       # (BS, D)
    attn = jnp.dot(ctx, wo, preferred_element_type=jnp.float32) + bo
    x = x + attn

    # --- feed-forward block (pre-LN) ---
    xn_bf = _layer_norm(x, ln2_g, ln2_b).astype(bf)
    h1 = _gelu(jnp.dot(xn_bf, w1, preferred_element_type=jnp.float32) + b1)
    ff = jnp.dot(h1.astype(bf), w2, preferred_element_type=jnp.float32) + b2
    return x + ff


# ---------------- the fused, layer-pipelined Pallas kernel ----------------
def esm2_kernel(B,  # python static: batch size (rows are b-major: b*S_pad + s)
                x_ref, cos_ref, sneg_ref, spos_ref, qseq_ref, kseq_ref,
                ln1g_ref, ln1b_ref, wq_ref, bq_ref, wk_ref, bk_ref,
                wv_ref, bv_ref, wo_ref, bo_ref, ln2g_ref, ln2b_ref,
                w1_ref, b1_ref, w2_ref, b2_ref,
                flng_ref, flnb_ref, wc_ref, bc_ref,
                o_ref, x_scr):
    layer = pl.program_id(0)

    # residual stream lives in VMEM scratch across the layer grid
    @pl.when(layer == 0)
    def _():
        x_scr[...] = x_ref[...]

    # per-position RoPE tables tiled across the batch (rows are b-major)
    cos = jnp.tile(cos_ref[...], (B, 1))
    sneg = jnp.tile(sneg_ref[...], (B, 1))
    spos = jnp.tile(spos_ref[...], (B, 1))

    # block-diagonal + key-padding additive bias built in-kernel from two tiny
    # sequence-id vectors (padded keys carry id -1, so they never match).
    attn_bias = jnp.where(qseq_ref[...] == kseq_ref[...], 0.0, NEG_INF)

    x = _encoder_layer_math(
        x_scr[...], cos, sneg, spos, attn_bias,
        ln1g_ref[0], ln1b_ref[0],
        wq_ref[0], bq_ref[0], wk_ref[0], bk_ref[0],
        wv_ref[0], bv_ref[0], wo_ref[0], bo_ref[0],
        ln2g_ref[0], ln2b_ref[0],
        w1_ref[0], b1_ref[0], w2_ref[0], b2_ref[0])
    x_scr[...] = x

    # final layer norm + classifier on the last layer step (lane-dense output)
    @pl.when(layer == pl.num_programs(0) - 1)
    def _():
        xn = _layer_norm(x, flng_ref[...], flnb_ref[...])
        logits = jnp.dot(xn.astype(jnp.bfloat16), wc_ref[...],
                         preferred_element_type=jnp.float32) + bc_ref[...]
        o_ref[...] = logits.astype(o_ref.dtype)


def _const_spec(a):
    nd = a.ndim
    return pl.BlockSpec(a.shape, lambda l, _nd=nd: (0,) * _nd)


def _layer_spec(a):
    nd = a.ndim
    return pl.BlockSpec((1,) + a.shape[1:],
                        lambda l, _nd=nd: (l,) + (0,) * (_nd - 1))


# ---------------- glue: embedding, rotary / mask tables, wrapper ----------------
def rotary_tables(S):
    inv_freq = 1.0 / (10000.0 ** (jnp.arange(0, HD, 2, dtype=jnp.float32) / HD))
    t = jnp.arange(S, dtype=jnp.float32)
    freqs = jnp.einsum("i,j->ij", t, inv_freq)          # (S, HD//2)
    emb = jnp.concatenate([freqs, freqs], axis=-1)      # (S, HD)
    return jnp.cos(emb), jnp.sin(emb)


def _rope_tables_for_kernel(S_pad):
    """(S_pad, D) cos / signed-sin tables (per position, tiled over batch in-kernel)."""
    cos_h, sin_h = rotary_tables(S_pad)                 # (S_pad, HD)
    cos_d = jnp.tile(cos_h, (1, H))                     # (S_pad, D)
    sin_d = jnp.tile(sin_h, (1, H))
    first = ((jnp.arange(D) % HD) < (HD // 2))[None, :]
    sin_neg = jnp.where(first, -sin_d, 0.0)             # -sin on first half of each head
    sin_pos = jnp.where(first, 0.0, sin_d)              # +sin on second half
    return cos_d, sin_neg, sin_pos


def _mask_vectors(token_ids, S_pad):
    """(BS,1) query seq-id and (1,BS) key seq-id (-1 for pad keys) vectors."""
    B, S = token_ids.shape
    BS = B * S_pad
    tok = jnp.pad(token_ids, ((0, 0), (0, S_pad - S)), constant_values=PAD_IDX)
    seq_id = jnp.repeat(jnp.arange(B, dtype=jnp.float32), S_pad)      # (BS,)
    q_seq = seq_id.reshape(BS, 1)
    key_ok = (tok != PAD_IDX).reshape(BS)
    k_seq = jnp.where(key_ok, seq_id, -1.0).reshape(1, BS)
    return q_seq, k_seq


def _embed_and_rescale(token_ids, embed_table):
    x = embed_table[token_ids]                          # (B, S, D), embed_scale = 1
    # ESM2 token-dropout rescale (applied in eval mode too).
    is_mask = token_ids == MASK_IDX
    x = jnp.where(is_mask[..., None], 0.0, x)
    # guards for degenerate all-pad / all-mask rows
    src_len = jnp.maximum(jnp.sum(token_ids != PAD_IDX, axis=-1), 1).astype(jnp.float32)
    mask_ratio_obs = is_mask.sum(-1).astype(jnp.float32) / src_len
    mask_ratio_obs = jnp.minimum(mask_ratio_obs, 1.0 - 1e-6)
    x = x * (1.0 - 0.15 * 0.8) / (1.0 - mask_ratio_obs)[:, None, None]
    return x


def esm2_forward(token_ids, params):
    B, S = token_ids.shape
    S_pad = max(8, ((S + 7) // 8) * 8)                  # sublane-aligned sequence
    BS = B * S_pad

    # embedding + token-dropout rescale stays in plain JAX (gather), then pad & flatten
    x = _embed_and_rescale(token_ids, params["embed"])          # (B, S, D) f32
    x = jnp.pad(x, ((0, 0), (0, S_pad - S), (0, 0)))
    x = x.reshape(BS, D)

    cos_t, sneg_t, spos_t = _rope_tables_for_kernel(S_pad)      # (S_pad, D) each
    q_seq, k_seq = _mask_vectors(token_ids, S_pad)              # (BS,1), (1,BS)

    # stack per-layer weights along a leading axis; matmul weights go in bf16
    bf = jnp.bfloat16

    def stack(name, dt=None):
        a = jnp.stack([lp[name] for lp in params["layers"]])
        return a.astype(dt) if dt is not None else a

    ln1_g, ln1_b = stack("ln1_g"), stack("ln1_b")
    wq, bq = stack("wq", bf), stack("bq")
    wk, bk = stack("wk", bf), stack("bk")
    wv, bv = stack("wv", bf), stack("bv")
    wo, bo = stack("wo", bf), stack("bo")
    ln2_g, ln2_b = stack("ln2_g"), stack("ln2_b")
    w1, b1 = stack("w1", bf), stack("b1")
    w2, b2 = stack("w2", bf), stack("b2")
    L = wq.shape[0]

    # lane-dense classifier: pad out features to 128 (sliced off below)
    wc_p = jnp.zeros((D, OUT_PAD), jnp.float32).at[:, :NUM_LABELS].set(params["wc"]).astype(bf)
    bc_p = jnp.zeros((1, OUT_PAD), jnp.float32).at[:, :NUM_LABELS].set(params["bc"])

    const_inputs = (x, cos_t, sneg_t, spos_t, q_seq, k_seq)
    layer_inputs = (ln1_g, ln1_b, wq, bq, wk, bk, wv, bv, wo, bo,
                    ln2_g, ln2_b, w1, b1, w2, b2)
    head_inputs = (params["final_ln_g"], params["final_ln_b"], wc_p, bc_p)

    in_specs = ([_const_spec(a) for a in const_inputs]
                + [_layer_spec(a) for a in layer_inputs]
                + [_const_spec(a) for a in head_inputs])

    # NOTE: a "parallel" batch grid axis (to use v7x's second TensorCore) and
    # pipeline_mode=pl.Buffered(1) on the grid-invariant inputs are further
    # VMEM/throughput levers at scale; at this toy size the flattened batch +
    # defaults are kept for simplicity.
    out = pl.pallas_call(
        functools.partial(esm2_kernel, B),
        out_shape=jax.ShapeDtypeStruct((BS, OUT_PAD), jnp.float32),
        grid_spec=pltpu.PrefetchScalarGridSpec(
            num_scalar_prefetch=0,
            grid=(L,),
            in_specs=in_specs,
            out_specs=pl.BlockSpec((BS, OUT_PAD), lambda l: (0, 0)),
            scratch_shapes=[pltpu.VMEM((BS, D), jnp.float32)]),
        compiler_params=pltpu.CompilerParams(
            dimension_semantics=("arbitrary",),
            vmem_limit_bytes=32 * 1024 * 1024),
    )(*const_inputs, *layer_inputs, *head_inputs)

    out = out.reshape(B, S_pad, OUT_PAD)
    return out[:, 1:S - 1, :NUM_LABELS]


# ---------------- pure-JAX reference (classic per-sequence / per-head math) ----
def _ref_encoder_layer(x, cos_h, sin_h, kbias_row,
                       ln1_g, ln1_b, wq, bq, wk, bk, wv, bv, wo, bo,
                       ln2_g, ln2_b, w1, b1, w2, b2):
    residual = x
    xn = _layer_norm(x, ln1_g, ln1_b)
    scaling = 1.0 / math.sqrt(HD)
    q = (_bf16_dot(xn, wq) + bq) * scaling
    k = _bf16_dot(xn, wk) + bk
    v = _bf16_dot(xn, wv) + bv

    heads = []
    for h in range(H):
        sl = slice(h * HD, (h + 1) * HD)
        qh, kh, vh = q[:, sl], k[:, sl], v[:, sl]
        qh = qh * cos_h + _rotate_half(qh) * sin_h
        kh = kh * cos_h + _rotate_half(kh) * sin_h
        # mirror the kernel numerics: bf16 operands, f32 accumulation
        s = jnp.einsum("qd,kd->qk", qh.astype(jnp.bfloat16), kh.astype(jnp.bfloat16),
                       preferred_element_type=jnp.float32)
        s = s + kbias_row
        p = jax.nn.softmax(s, axis=-1)
        heads.append(jnp.dot(p.astype(jnp.bfloat16), vh.astype(jnp.bfloat16),
                             preferred_element_type=jnp.float32))
    attn = jnp.concatenate(heads, axis=-1)
    attn = _bf16_dot(attn, wo) + bo
    x = residual + attn

    residual = x
    xn = _layer_norm(x, ln2_g, ln2_b)
    h1 = _gelu(_bf16_dot(xn, w1) + b1)
    ff = _bf16_dot(h1, w2) + b2
    return residual + ff


def _ref_head(x, ln_g, ln_b, wc, bc):
    xn = _layer_norm(x, ln_g, ln_b)
    return _bf16_dot(xn, wc) + bc


def ref_forward(token_ids, params):
    B, S = token_ids.shape
    x = _embed_and_rescale(token_ids, params["embed"])
    cos_h, sin_h = rotary_tables(S)
    kbias = jnp.where(token_ids == PAD_IDX, NEG_INF, 0.0).astype(jnp.float32)  # (B, S)
    for p in params["layers"]:
        ws = (p["ln1_g"], p["ln1_b"], p["wq"], p["bq"], p["wk"], p["bk"],
              p["wv"], p["bv"], p["wo"], p["bo"], p["ln2_g"], p["ln2_b"],
              p["w1"], p["b1"], p["w2"], p["b2"])
        x = jax.vmap(lambda xb, kb, _ws=ws: _ref_encoder_layer(
            xb, cos_h, sin_h, kb[None, :], *_ws))(x, kbias)
    x_inner = x[:, 1:-1, :]
    return jax.vmap(lambda xb: _ref_head(xb, params["final_ln_g"],
                                         params["final_ln_b"],
                                         params["wc"], params["bc"]))(x_inner)


# ---------------- deterministic parameter init ----------------
def init_params(key):
    keys = jax.random.split(key, 8 * NUM_LAYERS * 12 + 16)
    it = iter(keys)

    def nrm(shape, std=0.02):
        return (std * jax.random.normal(next(it), shape)).astype(jnp.float32)

    embed = nrm((VOCAB, D)).at[PAD_IDX].set(0.0)
    layers = []
    for _ in range(NUM_LAYERS):
        layers.append(dict(
            ln1_g=jnp.ones((1, D), jnp.float32), ln1_b=jnp.zeros((1, D), jnp.float32),
            wq=nrm((D, D)), bq=nrm((1, D)),
            wk=nrm((D, D)), bk=nrm((1, D)),
            wv=nrm((D, D)), bv=nrm((1, D)),
            wo=nrm((D, D)), bo=nrm((1, D)),
            ln2_g=jnp.ones((1, D), jnp.float32), ln2_b=jnp.zeros((1, D), jnp.float32),
            w1=nrm((D, F)), b1=nrm((1, F)),
            w2=nrm((F, D)), b2=nrm((1, D)),
        ))
    return dict(
        embed=embed, layers=layers,
        final_ln_g=jnp.ones((1, D), jnp.float32),
        final_ln_b=jnp.zeros((1, D), jnp.float32),
        wc=nrm((D, NUM_LABELS)), bc=nrm((1, NUM_LABELS)),
    )


if __name__ == "__main__":
    key = jax.random.PRNGKey(0)
    pkey, tkey = jax.random.split(key)
    params = init_params(pkey)

    B, n_res = 2, 8
    # token ids follow the ESM alphabet convention: <cls>=0, <eos>=2, residues 4..29.
    residues = jax.random.randint(tkey, (B, n_res), 4, 30).astype(jnp.int32)
    bos = jnp.zeros((B, 1), jnp.int32)
    eos = jnp.full((B, 1), 2, jnp.int32)
    token_ids = jnp.concatenate([bos, residues, eos], axis=1)   # (2, 10)

    logits = esm2_forward(token_ids, params)
    logits = jax.block_until_ready(logits)

    assert logits.shape == (B, n_res, NUM_LABELS), logits.shape
    ref = ref_forward(token_ids, params)
    # bf16 matmul operands on both sides; kernel additionally uses an
    # approximate (EUP) reciprocal in the softmax -> loosened tolerance.
    assert jnp.allclose(logits, ref, rtol=1e-2, atol=3e-3), \
        float(jnp.max(jnp.abs(logits - ref)))

    print("KERNEL_OK")
</pallas_src>

<mosaic_0001>
module attributes {stable_mosaic.version = 11 : i64} {
  func.func @esm2_kernel(%arg0: i32, %arg1: memref<32x128xf32, #tpu.memory_space<vmem>>, %arg2: memref<16x128xf32, #tpu.memory_space<vmem>>, %arg3: memref<16x128xf32, #tpu.memory_space<vmem>>, %arg4: memref<16x128xf32, #tpu.memory_space<vmem>>, %arg5: memref<32x1xf32, #tpu.memory_space<vmem>>, %arg6: memref<1x32xf32, #tpu.memory_space<vmem>>, %arg7: memref<1x1x128xf32, #tpu.memory_space<vmem>>, %arg8: memref<1x1x128xf32, #tpu.memory_space<vmem>>, %arg9: memref<1x128x128xbf16, #tpu.memory_space<vmem>>, %arg10: memref<1x1x128xf32, #tpu.memory_space<vmem>>, %arg11: memref<1x128x128xbf16, #tpu.memory_space<vmem>>, %arg12: memref<1x1x128xf32, #tpu.memory_space<vmem>>, %arg13: memref<1x128x128xbf16, #tpu.memory_space<vmem>>, %arg14: memref<1x1x128xf32, #tpu.memory_space<vmem>>, %arg15: memref<1x128x128xbf16, #tpu.memory_space<vmem>>, %arg16: memref<1x1x128xf32, #tpu.memory_space<vmem>>, %arg17: memref<1x1x128xf32, #tpu.memory_space<vmem>>, %arg18: memref<1x1x128xf32, #tpu.memory_space<vmem>>, %arg19: memref<1x128x512xbf16, #tpu.memory_space<vmem>>, %arg20: memref<1x1x512xf32, #tpu.memory_space<vmem>>, %arg21: memref<1x512x128xbf16, #tpu.memory_space<vmem>>, %arg22: memref<1x1x128xf32, #tpu.memory_space<vmem>>, %arg23: memref<1x128xf32, #tpu.memory_space<vmem>>, %arg24: memref<1x128xf32, #tpu.memory_space<vmem>>, %arg25: memref<128x128xbf16, #tpu.memory_space<vmem>>, %arg26: memref<1x128xf32, #tpu.memory_space<vmem>>, %arg27: memref<32x128xf32, #tpu.memory_space<vmem>>, %arg28: memref<32x128xf32, #tpu.memory_space<vmem>>) attributes {dimension_semantics = [#tpu.dimension_semantics<arbitrary>], iteration_bounds = array<i64: 2>, scalar_prefetch = 0 : i64, scratch_operands = 1 : i64, tpu.core_type = #tpu.core_type<tc>, window_params = [{pipeline_mode = #tpu.pipeline_mode<synchronous>, transform_indices = @transform_0, window_bounds = array<i64: 32, 128>}, {pipeline_mode = #tpu.pipeline_mode<synchronous>, transform_indices = @transform_1, window_bounds = array<i64: 16, 128>}, {pipeline_mode = #tpu.pipeline_mode<synchronous>, transform_indices = @transform_2, window_bounds = array<i64: 16, 128>}, {pipeline_mode = #tpu.pipeline_mode<synchronous>, transform_indices = @transform_3, window_bounds = array<i64: 16, 128>}, {pipeline_mode = #tpu.pipeline_mode<synchronous>, transform_indices = @transform_4, window_bounds = array<i64: 32, 1>}, {pipeline_mode = #tpu.pipeline_mode<synchronous>, transform_indices = @transform_5, window_bounds = array<i64: 1, 32>}, {transform_indices = @transform_6, window_bounds = array<i64: 1, 1, 128>}, {transform_indices = @transform_7, window_bounds = array<i64: 1, 1, 128>}, {transform_indices = @transform_8, window_bounds = array<i64: 1, 128, 128>}, {transform_indices = @transform_9, window_bounds = array<i64: 1, 1, 128>}, {transform_indices = @transform_10, window_bounds = array<i64: 1, 128, 128>}, {transform_indices = @transform_11, window_bounds = array<i64: 1, 1, 128>}, {transform_indices = @transform_12, window_bounds = array<i64: 1, 128, 128>}, {transform_indices = @transform_13, window_bounds = array<i64: 1, 1, 128>}, {transform_indices = @transform_14, window_bounds = array<i64: 1, 128, 128>}, {transform_indices = @transform_15, window_bounds = array<i64: 1, 1, 128>}, {transform_indices = @transform_16, window_bounds = array<i64: 1, 1, 128>}, {transform_indices = @transform_17, window_bounds = array<i64: 1, 1, 128>}, {transform_indices = @transform_18, window_bounds = array<i64: 1, 128, 512>}, {transform_indices = @transform_19, window_bounds = array<i64: 1, 1, 512>}, {transform_indices = @transform_20, window_bounds = array<i64: 1, 512, 128>}, {transform_indices = @transform_21, window_bounds = array<i64: 1, 1, 128>}, {pipeline_mode = #tpu.pipeline_mode<synchronous>, transform_indices = @transform_22, window_bounds = array<i64: 1, 128>}, {pipeline_mode = #tpu.pipeline_mode<synchronous>, transform_indices = @transform_23, window_bounds = array<i64: 1, 128>}, {pipeline_mode = #tpu.pipeline_mode<synchronous>, transform_indices = @transform_24, window_bounds = array<i64: 128, 128>}, {pipeline_mode = #tpu.pipeline_mode<synchronous>, transform_indices = @transform_25, window_bounds = array<i64: 1, 128>}, {pipeline_mode = #tpu.pipeline_mode<synchronous>, transform_indices = @transform_26, window_bounds = array<i64: 32, 128>}]} {
    %c0_i32 = arith.constant 0 : i32
    %0 = arith.cmpi eq, %arg0, %c0_i32 : i32
    %1 = arith.extui %0 : i1 to i32
    %c0_i32_0 = arith.constant 0 : i32
    %2 = arith.cmpi ne, %1, %c0_i32_0 : i32
    scf.if %2 {
      %c0_102 = arith.constant 0 : index
      %c0_103 = arith.constant 0 : index
      %218 = vector.load %arg1[%c0_102, %c0_103] : memref<32x128xf32, #tpu.memory_space<vmem>>, vector<32x128xf32>
      %c0_104 = arith.constant 0 : index
      %c0_105 = arith.constant 0 : index
      %219 = vector.load %arg28[%c0_104, %c0_105] : memref<32x128xf32, #tpu.memory_space<vmem>>, vector<32x128xf32>
      tpu.vector_store %arg28[%c0_104, %c0_105], %218 {strides = array<i32>} : memref<32x128xf32, #tpu.memory_space<vmem>>, vector<32x128xf32>,
    } else {
    }
    %c0 = arith.constant 0 : index
    %c0_1 = arith.constant 0 : index
    %3 = vector.load %arg2[%c0, %c0_1] : memref<16x128xf32, #tpu.memory_space<vmem>>, vector<16x128xf32>
    %4 = tpu.concatenate %3, %3 in 0 : vector<16x128xf32>, vector<16x128xf32> -> vector<32x128xf32>
    %c0_2 = arith.constant 0 : index
    %c0_3 = arith.constant 0 : index
    %5 = vector.load %arg3[%c0_2, %c0_3] : memref<16x128xf32, #tpu.memory_space<vmem>>, vector<16x128xf32>
    %6 = tpu.concatenate %5, %5 in 0 : vector<16x128xf32>, vector<16x128xf32> -> vector<32x128xf32>
    %c0_4 = arith.constant 0 : index
    %c0_5 = arith.constant 0 : index
    %7 = vector.load %arg4[%c0_4, %c0_5] : memref<16x128xf32, #tpu.memory_space<vmem>>, vector<16x128xf32>
    %8 = tpu.concatenate %7, %7 in 0 : vector<16x128xf32>, vector<16x128xf32> -> vector<32x128xf32>
    %c0_6 = arith.constant 0 : index
    %c0_7 = arith.constant 0 : index
    %9 = vector.load %arg5[%c0_6, %c0_7] : memref<32x1xf32, #tpu.memory_space<vmem>>, vector<32x1xf32>
    %c0_8 = arith.constant 0 : index
    %c0_9 = arith.constant 0 : index
    %10 = vector.load %arg6[%c0_8, %c0_9] : memref<1x32xf32, #tpu.memory_space<vmem>>, vector<1x32xf32>
    %11 = vector.broadcast %9 : vector<32x1xf32> to vector<32x32xf32>
    %12 = vector.broadcast %10 : vector<1x32xf32> to vector<32x32xf32>
    %13 = arith.cmpf oeq, %11, %12 : vector<32x32xf32>
    %cst = arith.constant 0.000000e+00 : f32
    %cst_10 = arith.constant -1.000000e+09 : f32
    %14 = vector.broadcast %cst : f32 to vector<32x32xf32>
    %15 = vector.broadcast %cst_10 : f32 to vector<32x32xf32>
    %16 = arith.select %13, %14, %15 : vector<32x32xi1>, vector<32x32xf32>
    %c0_11 = arith.constant 0 : index
    %c0_12 = arith.constant 0 : index
    %17 = vector.load %arg28[%c0_11, %c0_12] : memref<32x128xf32, #tpu.memory_space<vmem>>, vector<32x128xf32>
    %c0_13 = arith.constant 0 : index
    %c0_14 = arith.constant 0 : index
    %c0_15 = arith.constant 0 : index
    %18 = vector.load %arg7[%c0_13, %c0_14, %c0_15] : memref<1x1x128xf32, #tpu.memory_space<vmem>>, vector<1x1x128xf32>
    %19 = vector.shape_cast %18 : vector<1x1x128xf32> to vector<1x128xf32>
    %c0_16 = arith.constant 0 : index
    %c0_17 = arith.constant 0 : index
    %c0_18 = arith.constant 0 : index
    %20 = vector.load %arg8[%c0_16, %c0_17, %c0_18] : memref<1x1x128xf32, #tpu.memory_space<vmem>>, vector<1x1x128xf32>
    %21 = vector.shape_cast %20 : vector<1x1x128xf32> to vector<1x128xf32>
    %c0_19 = arith.constant 0 : index
    %c0_20 = arith.constant 0 : index
    %c0_21 = arith.constant 0 : index
    %22 = vector.load %arg9[%c0_19, %c0_20, %c0_21] : memref<1x128x128xbf16, #tpu.memory_space<vmem>>, vector<1x128x128xbf16>
    %23 = vector.shape_cast %22 : vector<1x128x128xbf16> to vector<128x128xbf16>
    %c0_22 = arith.constant 0 : index
    %c0_23 = arith.constant 0 : index
    %c0_24 = arith.constant 0 : index
    %24 = vector.load %arg10[%c0_22, %c0_23, %c0_24] : memref<1x1x128xf32, #tpu.memory_space<vmem>>, vector<1x1x128xf32>
    %25 = vector.shape_cast %24 : vector<1x1x128xf32> to vector<1x128xf32>
    %c0_25 = arith.constant 0 : index
    %c0_26 = arith.constant 0 : index
    %c0_27 = arith.constant 0 : index
    %26 = vector.load %arg11[%c0_25, %c0_26, %c0_27] : memref<1x128x128xbf16, #tpu.memory_space<vmem>>, vector<1x128x128xbf16>
    %27 = vector.shape_cast %26 : vector<1x128x128xbf16> to vector<128x128xbf16>
    %c0_28 = arith.constant 0 : index
    %c0_29 = arith.constant 0 : index
    %c0_30 = arith.constant 0 : index
    %28 = vector.load %arg12[%c0_28, %c0_29, %c0_30] : memref<1x1x128xf32, #tpu.memory_space<vmem>>, vector<1x1x128xf32>
    %29 = vector.shape_cast %28 : vector<1x1x128xf32> to vector<1x128xf32>
    %c0_31 = arith.constant 0 : index
    %c0_32 = arith.constant 0 : index
    %c0_33 = arith.constant 0 : index
    %30 = vector.load %arg13[%c0_31, %c0_32, %c0_33] : memref<1x128x128xbf16, #tpu.memory_space<vmem>>, vector<1x128x128xbf16>
    %31 = vector.shape_cast %30 : vector<1x128x128xbf16> to vector<128x128xbf16>
    %c0_34 = arith.constant 0 : index
    %c0_35 = arith.constant 0 : index
    %c0_36 = arith.constant 0 : index
    %32 = vector.load %arg14[%c0_34, %c0_35, %c0_36] : memref<1x1x128xf32, #tpu.memory_space<vmem>>, vector<1x1x128xf32>
    %33 = vector.shape_cast %32 : vector<1x1x128xf32> to vector<1x128xf32>
    %c0_37 = arith.constant 0 : index
    %c0_38 = arith.constant 0 : index
    %c0_39 = arith.constant 0 : index
    %34 = vector.load %arg15[%c0_37, %c0_38, %c0_39] : memref<1x128x128xbf16, #tpu.memory_space<vmem>>, vector<1x128x128xbf16>
    %35 = vector.shape_cast %34 : vector<1x128x128xbf16> to vector<128x128xbf16>
    %c0_40 = arith.constant 0 : index
    %c0_41 = arith.constant 0 : index
    %c0_42 = arith.constant 0 : index
    %36 = vector.load %arg16[%c0_40, %c0_41, %c0_42] : memref<1x1x128xf32, #tpu.memory_space<vmem>>, vector<1x1x128xf32>
    %37 = vector.shape_cast %36 : vector<1x1x128xf32> to vector<1x128xf32>
    %c0_43 = arith.constant 0 : index
    %c0_44 = arith.constant 0 : index
    %c0_45 = arith.constant 0 : index
    %38 = vector.load %arg17[%c0_43, %c0_44, %c0_45] : memref<1x1x128xf32, #tpu.memory_space<vmem>>, vector<1x1x128xf32>
    %39 = vector.shape_cast %38 : vector<1x1x128xf32> to vector<1x128xf32>
    %c0_46 = arith.constant 0 : index
    %c0_47 = arith.constant 0 : index
    %c0_48 = arith.constant 0 : index
    %40 = vector.load %arg18[%c0_46, %c0_47, %c0_48] : memref<1x1x128xf32, #tpu.memory_space<vmem>>, vector<1x1x128xf32>
    %41 = vector.shape_cast %40 : vector<1x1x128xf32> to vector<1x128xf32>
    %c0_49 = arith.constant 0 : index
    %c0_50 = arith.constant 0 : index
    %c0_51 = arith.constant 0 : index
    %42 = vector.load %arg19[%c0_49, %c0_50, %c0_51] : memref<1x128x512xbf16, #tpu.memory_space<vmem>>, vector<1x128x512xbf16>
    %43 = vector.shape_cast %42 : vector<1x128x512xbf16> to vector<128x512xbf16>
    %c0_52 = arith.constant 0 : index
    %c0_53 = arith.constant 0 : index
    %c0_54 = arith.constant 0 : index
    %44 = vector.load %arg20[%c0_52, %c0_53, %c0_54] : memref<1x1x512xf32, #tpu.memory_space<vmem>>, vector<1x1x512xf32>
    %45 = vector.shape_cast %44 : vector<1x1x512xf32> to vector<1x512xf32>
    %c0_55 = arith.constant 0 : index
    %c0_56 = arith.constant 0 : index
    %c0_57 = arith.constant 0 : index
    %46 = vector.load %arg21[%c0_55, %c0_56, %c0_57] : memref<1x512x128xbf16, #tpu.memory_space<vmem>>, vector<1x512x128xbf16>
    %47 = vector.shape_cast %46 : vector<1x512x128xbf16> to vector<512x128xbf16>
    %c0_58 = arith.constant 0 : index
    %c0_59 = arith.constant 0 : index
    %c0_60 = arith.constant 0 : index
    %48 = vector.load %arg22[%c0_58, %c0_59, %c0_60] : memref<1x1x128xf32, #tpu.memory_space<vmem>>, vector<1x1x128xf32>
    %49 = vector.shape_cast %48 : vector<1x1x128xf32> to vector<1x128xf32>
    %cst_61 = arith.constant dense<0.000000e+00> : vector<32xf32>
    %50 = vector.multi_reduction <add>, %17, %cst_61 [1] : vector<32x128xf32> to vector<32xf32>
    %51 = vector.shape_cast %50 : vector<32xf32> to vector<32x1xf32>
    %cst_62 = arith.constant 1.280000e+02 : f32
    %52 = vector.broadcast %cst_62 : f32 to vector<32x1xf32>
    %53 = arith.divf %51, %52 : vector<32x1xf32>
    %54 = vector.broadcast %53 : vector<32x1xf32> to vector<32x128xf32>
    %55 = arith.subf %17, %54 : vector<32x128xf32>
    %56 = arith.mulf %55, %55 : vector<32x128xf32>
    %cst_63 = arith.constant dense<0.000000e+00> : vector<32xf32>
    %57 = vector.multi_reduction <add>, %56, %cst_63 [1] : vector<32x128xf32> to vector<32xf32>
    %58 = vector.shape_cast %57 : vector<32xf32> to vector<32x1xf32>
    %cst_64 = arith.constant 1.280000e+02 : f32
    %59 = vector.broadcast %cst_64 : f32 to vector<32x1xf32>
    %60 = arith.divf %58, %59 : vector<32x1xf32>
    %61 = vector.broadcast %53 : vector<32x1xf32> to vector<32x128xf32>
    %62 = arith.subf %17, %61 : vector<32x128xf32>
    %cst_65 = arith.constant 9.99999974E-6 : f32
    %63 = vector.broadcast %cst_65 : f32 to vector<32x1xf32>
    %64 = arith.addf %60, %63 : vector<32x1xf32>
    %65 = math.rsqrt %64 : vector<32x1xf32>
    %66 = vector.broadcast %65 : vector<32x1xf32> to vector<32x128xf32>
    %67 = arith.mulf %62, %66 : vector<32x128xf32>
    %68 = vector.broadcast %19 : vector<1x128xf32> to vector<32x128xf32>
    %69 = arith.mulf %67, %68 : vector<32x128xf32>
    %70 = vector.broadcast %21 : vector<1x128xf32> to vector<32x128xf32>
    %71 = arith.addf %69, %70 : vector<32x128xf32>
    %72 = arith.truncf %71 : vector<32x128xf32> to vector<32x128xbf16>
    %cst_66 = arith.constant dense<0.000000e+00> : vector<32x128xf32>
    %73 = tpu.matmul %72, %23, %cst_66 {dimension_numbers = #tpu.dot_dimension_numbers<[1], [0], [0], [1], [0, 0, 1, 1], [], []>} : vector<32x128xbf16>, vector<128x128xbf16>, vector<32x128xf32> -> vector<32x128xf32>
    %74 = vector.broadcast %25 : vector<1x128xf32> to vector<32x128xf32>
    %75 = arith.addf %73, %74 : vector<32x128xf32>
    %cst_67 = arith.constant 0.176776692 : f32
    %76 = vector.broadcast %cst_67 : f32 to vector<32x128xf32>
    %77 = arith.mulf %75, %76 : vector<32x128xf32>
    %cst_68 = arith.constant dense<0.000000e+00> : vector<32x128xf32>
    %78 = tpu.matmul %72, %27, %cst_68 {dimension_numbers = #tpu.dot_dimension_numbers<[1], [0], [0], [1], [0, 0, 1, 1], [], []>} : vector<32x128xbf16>, vector<128x128xbf16>, vector<32x128xf32> -> vector<32x128xf32>
    %79 = vector.broadcast %29 : vector<1x128xf32> to vector<32x128xf32>
    %80 = arith.addf %78, %79 : vector<32x128xf32>
    %cst_69 = arith.constant dense<0.000000e+00> : vector<32x128xf32>
    %81 = tpu.matmul %72, %31, %cst_69 {dimension_numbers = #tpu.dot_dimension_numbers<[1], [0], [0], [1], [0, 0, 1, 1], [], []>} : vector<32x128xbf16>, vector<128x128xbf16>, vector<32x128xf32> -> vector<32x128xf32>
    %82 = vector.broadcast %33 : vector<1x128xf32> to vector<32x128xf32>
    %83 = arith.addf %81, %82 : vector<32x128xf32>
    %84 = arith.mulf %77, %4 : vector<32x128xf32>
    %c112_i32 = arith.constant 112 : i32
    %85 = tpu.dynamic_rotate %77 by %c112_i32 dim 1 : vector<32x128xf32>, i32 -> vector<32x128xf32>
    %86 = arith.mulf %85, %6 : vector<32x128xf32>
    %87 = arith.addf %84, %86 : vector<32x128xf32>
    %c16_i32 = arith.constant 16 : i32
    %88 = tpu.dynamic_rotate %77 by %c16_i32 dim 1 : vector<32x128xf32>, i32 -> vector<32x128xf32>
    %89 = arith.mulf %88, %8 : vector<32x128xf32>
    %90 = arith.addf %87, %89 : vector<32x128xf32>
    %91 = arith.truncf %90 : vector<32x128xf32> to vector<32x128xbf16>
    %92 = arith.mulf %80, %4 : vector<32x128xf32>
    %c112_i32_70 = arith.constant 112 : i32
    %93 = tpu.dynamic_rotate %80 by %c112_i32_70 dim 1 : vector<32x128xf32>, i32 -> vector<32x128xf32>
    %94 = arith.mulf %93, %6 : vector<32x128xf32>
    %95 = arith.addf %92, %94 : vector<32x128xf32>
    %c16_i32_71 = arith.constant 16 : i32
    %96 = tpu.dynamic_rotate %80 by %c16_i32_71 dim 1 : vector<32x128xf32>, i32 -> vector<32x128xf32>
    %97 = arith.mulf %96, %8 : vector<32x128xf32>
    %98 = arith.addf %95, %97 : vector<32x128xf32>
    %99 = arith.truncf %98 : vector<32x128xf32> to vector<32x128xbf16>
    %100 = arith.truncf %83 : vector<32x128xf32> to vector<32x128xbf16>
    %101 = vector.extract_strided_slice %91 {offsets = [0, 0], sizes = [32, 32], strides = [1, 1]} : vector<32x128xbf16> to vector<32x32xbf16>
    %102 = vector.extract_strided_slice %99 {offsets = [0, 0], sizes = [32, 32], strides = [1, 1]} : vector<32x128xbf16> to vector<32x32xbf16>
    "tpu.trace_start"() <{level = 10 : i32, message = "qd,kd->qk"}> : () -> ()
    %cst_72 = arith.constant dense<0.000000e+00> : vector<32x32xf32>
    %103 = tpu.matmul %101, %102, %cst_72 {dimension_numbers = #tpu.dot_dimension_numbers<[1], [1], [0], [0], [0, 0, 1, 0], [], []>} : vector<32x32xbf16>, vector<32x32xbf16>, vector<32x32xf32> -> vector<32x32xf32>
    "tpu.trace_stop"() : () -> ()
    %104 = arith.addf %103, %16 : vector<32x32xf32>
    %cst_73 = arith.constant dense<0xFF800000> : vector<32xf32>
    %105 = vector.multi_reduction <maximumf>, %104, %cst_73 [1] : vector<32x32xf32> to vector<32xf32>
    %106 = vector.shape_cast %105 : vector<32xf32> to vector<32x1xf32>
    %107 = vector.broadcast %106 : vector<32x1xf32> to vector<32x32xf32>
    %108 = arith.subf %104, %107 : vector<32x32xf32>
    %109 = math.exp %108 : vector<32x32xf32>
    %cst_74 = arith.constant dense<0.000000e+00> : vector<32xf32>
    %110 = vector.multi_reduction <add>, %109, %cst_74 [1] : vector<32x32xf32> to vector<32xf32>
    %111 = vector.shape_cast %110 : vector<32xf32> to vector<32x1xf32>
    %112 = tpu.reciprocal %111 {approx = true} : vector<32x1xf32> -> vector<32x1xf32>
    %113 = vector.broadcast %112 : vector<32x1xf32> to vector<32x32xf32>
    %114 = arith.mulf %109, %113 : vector<32x32xf32>
    %115 = arith.truncf %114 : vector<32x32xf32> to vector<32x32xbf16>
    %116 = vector.extract_strided_slice %100 {offsets = [0, 0], sizes = [32, 32], strides = [1, 1]} : vector<32x128xbf16> to vector<32x32xbf16>
    %cst_75 = arith.constant dense<0.000000e+00> : vector<32x32xf32>
    %117 = tpu.matmul %115, %116, %cst_75 {dimension_numbers = #tpu.dot_dimension_numbers<[1], [0], [0], [1], [0, 0, 1, 1], [], []>} : vector<32x32xbf16>, vector<32x32xbf16>, vector<32x32xf32> -> vector<32x32xf32>
    %118 = vector.extract_strided_slice %91 {offsets = [0, 32], sizes = [32, 32], strides = [1, 1]} : vector<32x128xbf16> to vector<32x32xbf16>
    %119 = vector.extract_strided_slice %99 {offsets = [0, 32], sizes = [32, 32], strides = [1, 1]} : vector<32x128xbf16> to vector<32x32xbf16>
    "tpu.trace_start"() <{level = 10 : i32, message = "qd,kd->qk"}> : () -> ()
    %cst_76 = arith.constant dense<0.000000e+00> : vector<32x32xf32>
    %120 = tpu.matmul %118, %119, %cst_76 {dimension_numbers = #tpu.dot_dimension_numbers<[1], [1], [0], [0], [0, 0, 1, 0], [], []>} : vector<32x32xbf16>, vector<32x32xbf16>, vector<32x32xf32> -> vector<32x32xf32>
    "tpu.trace_stop"() : () -> ()
    %121 = arith.addf %120, %16 : vector<32x32xf32>
    %cst_77 = arith.constant dense<0xFF800000> : vector<32xf32>
    %122 = vector.multi_reduction <maximumf>, %121, %cst_77 [1] : vector<32x32xf32> to vector<32xf32>
    %123 = vector.shape_cast %122 : vector<32xf32> to vector<32x1xf32>
    %124 = vector.broadcast %123 : vector<32x1xf32> to vector<32x32xf32>
    %125 = arith.subf %121, %124 : vector<32x32xf32>
    %126 = math.exp %125 : vector<32x32xf32>
    %cst_78 = arith.constant dense<0.000000e+00> : vector<32xf32>
    %127 = vector.multi_reduction <add>, %126, %cst_78 [1] : vector<32x32xf32> to vector<32xf32>
    %128 = vector.shape_cast %127 : vector<32xf32> to vector<32x1xf32>
    %129 = tpu.reciprocal %128 {approx = true} : vector<32x1xf32> -> vector<32x1xf32>
    %130 = vector.broadcast %129 : vector<32x1xf32> to vector<32x32xf32>
    %131 = arith.mulf %126, %130 : vector<32x32xf32>
    %132 = arith.truncf %131 : vector<32x32xf32> to vector<32x32xbf16>
    %133 = vector.extract_strided_slice %100 {offsets = [0, 32], sizes = [32, 32], strides = [1, 1]} : vector<32x128xbf16> to vector<32x32xbf16>
    %cst_79 = arith.constant dense<0.000000e+00> : vector<32x32xf32>
    %134 = tpu.matmul %132, %133, %cst_79 {dimension_numbers = #tpu.dot_dimension_numbers<[1], [0], [0], [1], [0, 0, 1, 1], [], []>} : vector<32x32xbf16>, vector<32x32xbf16>, vector<32x32xf32> -> vector<32x32xf32>
    %135 = vector.extract_strided_slice %91 {offsets = [0, 64], sizes = [32, 32], strides = [1, 1]} : vector<32x128xbf16> to vector<32x32xbf16>
    %136 = vector.extract_strided_slice %99 {offsets = [0, 64], sizes = [32, 32], strides = [1, 1]} : vector<32x128xbf16> to vector<32x32xbf16>
    "tpu.trace_start"() <{level = 10 : i32, message = "qd,kd->qk"}> : () -> ()
    %cst_80 = arith.constant dense<0.000000e+00> : vector<32x32xf32>
    %137 = tpu.matmul %135, %136, %cst_80 {dimension_numbers = #tpu.dot_dimension_numbers<[1], [1], [0], [0], [0, 0, 1, 0], [], []>} : vector<32x32xbf16>, vector<32x32xbf16>, vector<32x32xf32> -> vector<32x32xf32>
    "tpu.trace_stop"() : () -> ()
    %138 = arith.addf %137, %16 : vector<32x32xf32>
    %cst_81 = arith.constant dense<0xFF800000> : vector<32xf32>
    %139 = vector.multi_reduction <maximumf>, %138, %cst_81 [1] : vector<32x32xf32> to vector<32xf32>
    %140 = vector.shape_cast %139 : vector<32xf32> to vector<32x1xf32>
    %141 = vector.broadcast %140 : vector<32x1xf32> to vector<32x32xf32>
    %142 = arith.subf %138, %141 : vector<32x32xf32>
    %143 = math.exp %142 : vector<32x32xf32>
    %cst_82 = arith.constant dense<0.000000e+00> : vector<32xf32>
    %144 = vector.multi_reduction <add>, %143, %cst_82 [1] : vector<32x32xf32> to vector<32xf32>
    %145 = vector.shape_cast %144 : vector<32xf32> to vector<32x1xf32>
    %146 = tpu.reciprocal %145 {approx = true} : vector<32x1xf32> -> vector<32x1xf32>
    %147 = vector.broadcast %146 : vector<32x1xf32> to vector<32x32xf32>
    %148 = arith.mulf %143, %147 : vector<32x32xf32>
    %149 = arith.truncf %148 : vector<32x32xf32> to vector<32x32xbf16>
    %150 = vector.extract_strided_slice %100 {offsets = [0, 64], sizes = [32, 32], strides = [1, 1]} : vector<32x128xbf16> to vector<32x32xbf16>
    %cst_83 = arith.constant dense<0.000000e+00> : vector<32x32xf32>
    %151 = tpu.matmul %149, %150, %cst_83 {dimension_numbers = #tpu.dot_dimension_numbers<[1], [0], [0], [1], [0, 0, 1, 1], [], []>} : vector<32x32xbf16>, vector<32x32xbf16>, vector<32x32xf32> -> vector<32x32xf32>
    %152 = vector.extract_strided_slice %91 {offsets = [0, 96], sizes = [32, 32], strides = [1, 1]} : vector<32x128xbf16> to vector<32x32xbf16>
    %153 = vector.extract_strided_slice %99 {offsets = [0, 96], sizes = [32, 32], strides = [1, 1]} : vector<32x128xbf16> to vector<32x32xbf16>
    "tpu.trace_start"() <{level = 10 : i32, message = "qd,kd->qk"}> : () -> ()
    %cst_84 = arith.constant dense<0.000000e+00> : vector<32x32xf32>
    %154 = tpu.matmul %152, %153, %cst_84 {dimension_numbers = #tpu.dot_dimension_numbers<[1], [1], [0], [0], [0, 0, 1, 0], [], []>} : vector<32x32xbf16>, vector<32x32xbf16>, vector<32x32xf32> -> vector<32x32xf32>
    "tpu.trace_stop"() : () -> ()
    %155 = arith.addf %154, %16 : vector<32x32xf32>
    %cst_85 = arith.constant dense<0xFF800000> : vector<32xf32>
    %156 = vector.multi_reduction <maximumf>, %155, %cst_85 [1] : vector<32x32xf32> to vector<32xf32>
    %157 = vector.shape_cast %156 : vector<32xf32> to vector<32x1xf32>
    %158 = vector.broadcast %157 : vector<32x1xf32> to vector<32x32xf32>
    %159 = arith.subf %155, %158 : vector<32x32xf32>
    %160 = math.exp %159 : vector<32x32xf32>
    %cst_86 = arith.constant dense<0.000000e+00> : vector<32xf32>
    %161 = vector.multi_reduction <add>, %160, %cst_86 [1] : vector<32x32xf32> to vector<32xf32>
    %162 = vector.shape_cast %161 : vector<32xf32> to vector<32x1xf32>
    %163 = tpu.reciprocal %162 {approx = true} : vector<32x1xf32> -> vector<32x1xf32>
    %164 = vector.broadcast %163 : vector<32x1xf32> to vector<32x32xf32>
    %165 = arith.mulf %160, %164 : vector<32x32xf32>
    %166 = arith.truncf %165 : vector<32x32xf32> to vector<32x32xbf16>
    %167 = vector.extract_strided_slice %100 {offsets = [0, 96], sizes = [32, 32], strides = [1, 1]} : vector<32x128xbf16> to vector<32x32xbf16>
    %cst_87 = arith.constant dense<0.000000e+00> : vector<32x32xf32>
    %168 = tpu.matmul %166, %167, %cst_87 {dimension_numbers = #tpu.dot_dimension_numbers<[1], [0], [0], [1], [0, 0, 1, 1], [], []>} : vector<32x32xbf16>, vector<32x32xbf16>, vector<32x32xf32> -> vector<32x32xf32>
    %169 = tpu.concatenate %117, %134, %151, %168 in 1 : vector<32x32xf32>, vector<32x32xf32>, vector<32x32xf32>, vector<32x32xf32> -> vector<32x128xf32>
    %170 = arith.truncf %169 : vector<32x128xf32> to vector<32x128xbf16>
    %cst_88 = arith.constant dense<0.000000e+00> : vector<32x128xf32>
    %171 = tpu.matmul %170, %35, %cst_88 {dimension_numbers = #tpu.dot_dimension_numbers<[1], [0], [0], [1], [0, 0, 1, 1], [], []>} : vector<32x128xbf16>, vector<128x128xbf16>, vector<32x128xf32> -> vector<32x128xf32>
    %172 = vector.broadcast %37 : vector<1x128xf32> to vector<32x128xf32>
    %173 = arith.addf %171, %172 : vector<32x128xf32>
    %174 = arith.addf %17, %173 : vector<32x128xf32>
    %cst_89 = arith.constant dense<0.000000e+00> : vector<32xf32>
    %175 = vector.multi_reduction <add>, %174, %cst_89 [1] : vector<32x128xf32> to vector<32xf32>
    %176 = vector.shape_cast %175 : vector<32xf32> to vector<32x1xf32>
    %cst_90 = arith.constant 1.280000e+02 : f32
    %177 = vector.broadcast %cst_90 : f32 to vector<32x1xf32>
    %178 = arith.divf %176, %177 : vector<32x1xf32>
    %179 = vector.broadcast %178 : vector<32x1xf32> to vector<32x128xf32>
    %180 = arith.subf %174, %179 : vector<32x128xf32>
    %181 = arith.mulf %180, %180 : vector<32x128xf32>
    %cst_91 = arith.constant dense<0.000000e+00> : vector<32xf32>
    %182 = vector.multi_reduction <add>, %181, %cst_91 [1] : vector<32x128xf32> to vector<32xf32>
    %183 = vector.shape_cast %182 : vector<32xf32> to vector<32x1xf32>
    %cst_92 = arith.constant 1.280000e+02 : f32
    %184 = vector.broadcast %cst_92 : f32 to vector<32x1xf32>
    %185 = arith.divf %183, %184 : vector<32x1xf32>
    %186 = vector.broadcast %178 : vector<32x1xf32> to vector<32x128xf32>
    %187 = arith.subf %174, %186 : vector<32x128xf32>
    %cst_93 = arith.constant 9.99999974E-6 : f32
    %188 = vector.broadcast %cst_93 : f32 to vector<32x1xf32>
    %189 = arith.addf %185, %188 : vector<32x1xf32>
    %190 = math.rsqrt %189 : vector<32x1xf32>
    %191 = vector.broadcast %190 : vector<32x1xf32> to vector<32x128xf32>
    %192 = arith.mulf %187, %191 : vector<32x128xf32>
    %193 = vector.broadcast %39 : vector<1x128xf32> to vector<32x128xf32>
    %194 = arith.mulf %192, %193 : vector<32x128xf32>
    %195 = vector.broadcast %41 : vector<1x128xf32> to vector<32x128xf32>
    %196 = arith.addf %194, %195 : vector<32x128xf32>
    %197 = arith.truncf %196 : vector<32x128xf32> to vector<32x128xbf16>
    %cst_94 = arith.constant dense<0.000000e+00> : vector<32x512xf32>
    %198 = tpu.matmul %197, %43, %cst_94 {dimension_numbers = #tpu.dot_dimension_numbers<[1], [0], [0], [1], [0, 0, 1, 1], [], []>} : vector<32x128xbf16>, vector<128x512xbf16>, vector<32x512xf32> -> vector<32x512xf32>
    %199 = vector.broadcast %45 : vector<1x512xf32> to vector<32x512xf32>
    %200 = arith.addf %198, %199 : vector<32x512xf32>
    %cst_95 = arith.constant 5.000000e-01 : f32
    %201 = vector.broadcast %cst_95 : f32 to vector<32x512xf32>
    %202 = arith.mulf %201, %200 : vector<32x512xf32>
    %cst_96 = arith.constant 1.41421354 : f32
    %203 = vector.broadcast %cst_96 : f32 to vector<32x512xf32>
    %204 = arith.divf %200, %203 : vector<32x512xf32>
    %205 = math.erf %204 : vector<32x512xf32>
    %cst_97 = arith.constant 1.000000e+00 : f32
    %206 = vector.broadcast %cst_97 : f32 to vector<32x512xf32>
    %207 = arith.addf %206, %205 : vector<32x512xf32>
    %208 = arith.mulf %202, %207 : vector<32x512xf32>
    %209 = arith.truncf %208 : vector<32x512xf32> to vector<32x512xbf16>
    %cst_98 = arith.constant dense<0.000000e+00> : vector<32x128xf32>
    %210 = tpu.matmul %209, %47, %cst_98 {dimension_numbers = #tpu.dot_dimension_numbers<[1], [0], [0], [1], [0, 0, 1, 1], [], []>} : vector<32x512xbf16>, vector<512x128xbf16>, vector<32x128xf32> -> vector<32x128xf32>
    %211 = vector.broadcast %49 : vector<1x128xf32> to vector<32x128xf32>
    %212 = arith.addf %210, %211 : vector<32x128xf32>
    %213 = arith.addf %174, %212 : vector<32x128xf32>
    %c0_99 = arith.constant 0 : index
    %c0_100 = arith.constant 0 : index
    %214 = vector.load %arg28[%c0_99, %c0_100] : memref<32x128xf32, #tpu.memory_space<vmem>>, vector<32x128xf32>
    tpu.vector_store %arg28[%c0_99, %c0_100], %213 {strides = array<i32>} : memref<32x128xf32, #tpu.memory_space<vmem>>, vector<32x128xf32>,
    %c1_i32 = arith.constant 1 : i32
    %215 = arith.cmpi eq, %arg0, %c1_i32 : i32
    %216 = arith.extui %215 : i1 to i32
    %c0_i32_101 = arith.constant 0 : i32
    %217 = arith.cmpi ne, %216, %c0_i32_101 : i32
    scf.if %217 {
      %c0_102 = arith.constant 0 : index
      %c0_103 = arith.constant 0 : index
      %218 = vector.load %arg23[%c0_102, %c0_103] : memref<1x128xf32, #tpu.memory_space<vmem>>, vector<1x128xf32>
      %c0_104 = arith.constant 0 : index
      %c0_105 = arith.constant 0 : index
      %219 = vector.load %arg24[%c0_104, %c0_105] : memref<1x128xf32, #tpu.memory_space<vmem>>, vector<1x128xf32>
      %cst_106 = arith.constant dense<0.000000e+00> : vector<32xf32>
      %220 = vector.multi_reduction <add>, %213, %cst_106 [1] : vector<32x128xf32> to vector<32xf32>
      %221 = vector.shape_cast %220 : vector<32xf32> to vector<32x1xf32>
      %cst_107 = arith.constant 1.280000e+02 : f32
      %222 = vector.broadcast %cst_107 : f32 to vector<32x1xf32>
      %223 = arith.divf %221, %222 : vector<32x1xf32>
      %224 = vector.broadcast %223 : vector<32x1xf32> to vector<32x128xf32>
      %225 = arith.subf %213, %224 : vector<32x128xf32>
      %226 = arith.mulf %225, %225 : vector<32x128xf32>
      %cst_108 = arith.constant dense<0.000000e+00> : vector<32xf32>
      %227 = vector.multi_reduction <add>, %226, %cst_108 [1] : vector<32x128xf32> to vector<32xf32>
      %228 = vector.shape_cast %227 : vector<32xf32> to vector<32x1xf32>
      %cst_109 = arith.constant 1.280000e+02 : f32
      %229 = vector.broadcast %cst_109 : f32 to vector<32x1xf32>
      %230 = arith.divf %228, %229 : vector<32x1xf32>
      %231 = vector.broadcast %223 : vector<32x1xf32> to vector<32x128xf32>
      %232 = arith.subf %213, %231 : vector<32x128xf32>
      %cst_110 = arith.constant 9.99999974E-6 : f32
      %233 = vector.broadcast %cst_110 : f32 to vector<32x1xf32>
      %234 = arith.addf %230, %233 : vector<32x1xf32>
      %235 = math.rsqrt %234 : vector<32x1xf32>
      %236 = vector.broadcast %235 : vector<32x1xf32> to vector<32x128xf32>
      %237 = arith.mulf %232, %236 : vector<32x128xf32>
      %238 = vector.broadcast %218 : vector<1x128xf32> to vector<32x128xf32>
      %239 = arith.mulf %237, %238 : vector<32x128xf32>
      %240 = vector.broadcast %219 : vector<1x128xf32> to vector<32x128xf32>
      %241 = arith.addf %239, %240 : vector<32x128xf32>
      %242 = arith.truncf %241 : vector<32x128xf32> to vector<32x128xbf16>
      %c0_111 = arith.constant 0 : index
      %c0_112 = arith.constant 0 : index
      %243 = vector.load %arg25[%c0_111, %c0_112] : memref<128x128xbf16, #tpu.memory_space<vmem>>, vector<128x128xbf16>
      %cst_113 = arith.constant dense<0.000000e+00> : vector<32x128xf32>
      %244 = tpu.matmul %242, %243, %cst_113 {dimension_numbers = #tpu.dot_dimension_numbers<[1], [0], [0], [1], [0, 0, 1, 1], [], []>} : vector<32x128xbf16>, vector<128x128xbf16>, vector<32x128xf32> -> vector<32x128xf32>
      %c0_114 = arith.constant 0 : index
      %c0_115 = arith.constant 0 : index
      %245 = vector.load %arg26[%c0_114, %c0_115] : memref<1x128xf32, #tpu.memory_space<vmem>>, vector<1x128xf32>
      %246 = vector.broadcast %245 : vector<1x128xf32> to vector<32x128xf32>
      %247 = arith.addf %244, %246 : vector<32x128xf32>
      %c0_116 = arith.constant 0 : index
      %c0_117 = arith.constant 0 : index
      %248 = vector.load %arg27[%c0_116, %c0_117] : memref<32x128xf32, #tpu.memory_space<vmem>>, vector<32x128xf32>
      tpu.vector_store %arg27[%c0_116, %c0_117], %247 {strides = array<i32>} : memref<32x128xf32, #tpu.memory_space<vmem>>, vector<32x128xf32>,
    } else {
    }
    return
  }
  func.func @transform_0(%arg0: i32) -> (i32, i32) {
    %c0_i32 = arith.constant 0 : i32
    %c0_i32_0 = arith.constant 0 : i32
    %c0_i32_1 = arith.constant 0 : i32
    return %c0_i32, %c0_i32_0 : i32, i32
  }
  func.func @transform_1(%arg0: i32) -> (i32, i32) {
    %c0_i32 = arith.constant 0 : i32
    %c0_i32_0 = arith.constant 0 : i32
    %c0_i32_1 = arith.constant 0 : i32
    return %c0_i32, %c0_i32_0 : i32, i32
  }
  func.func @transform_2(%arg0: i32) -> (i32, i32) {
    %c0_i32 = arith.constant 0 : i32
    %c0_i32_0 = arith.constant 0 : i32
    %c0_i32_1 = arith.constant 0 : i32
    return %c0_i32, %c0_i32_0 : i32, i32
  }
  func.func @transform_3(%arg0: i32) -> (i32, i32) {
    %c0_i32 = arith.constant 0 : i32
    %c0_i32_0 = arith.constant 0 : i32
    %c0_i32_1 = arith.constant 0 : i32
    return %c0_i32, %c0_i32_0 : i32, i32
  }
  func.func @transform_4(%arg0: i32) -> (i32, i32) {
    %c0_i32 = arith.constant 0 : i32
    %c0_i32_0 = arith.constant 0 : i32
    %c0_i32_1 = arith.constant 0 : i32
    return %c0_i32, %c0_i32_0 : i32, i32
  }
  func.func @transform_5(%arg0: i32) -> (i32, i32) {
    %c0_i32 = arith.constant 0 : i32
    %c0_i32_0 = arith.constant 0 : i32
    %c0_i32_1 = arith.constant 0 : i32
    return %c0_i32, %c0_i32_0 : i32, i32
  }
  func.func @transform_6(%arg0: i32) -> (i32, i32, i32) {
    %c0_i32 = arith.constant 0 : i32
    %c0_i32_0 = arith.constant 0 : i32
    %c0_i32_1 = arith.constant 0 : i32
    return %arg0, %c0_i32, %c0_i32_0 : i32, i32, i32
  }
  func.func @transform_7(%arg0: i32) -> (i32, i32, i32) {
    %c0_i32 = arith.constant 0 : i32
    %c0_i32_0 = arith.constant 0 : i32
    %c0_i32_1 = arith.constant 0 : i32
    return %arg0, %c0_i32, %c0_i32_0 : i32, i32, i32
  }
  func.func @transform_8(%arg0: i32) -> (i32, i32, i32) {
    %c0_i32 = arith.constant 0 : i32
    %c0_i32_0 = arith.constant 0 : i32
    %c0_i32_1 = arith.constant 0 : i32
    return %arg0, %c0_i32, %c0_i32_0 : i32, i32, i32
  }
  func.func @transform_9(%arg0: i32) -> (i32, i32, i32) {
    %c0_i32 = arith.constant 0 : i32
    %c0_i32_0 = arith.constant 0 : i32
    %c0_i32_1 = arith.constant 0 : i32
    return %arg0, %c0_i32, %c0_i32_0 : i32, i32, i32
  }
  func.func @transform_10(%arg0: i32) -> (i32, i32, i32) {
    %c0_i32 = arith.constant 0 : i32
    %c0_i32_0 = arith.constant 0 : i32
    %c0_i32_1 = arith.constant 0 : i32
    return %arg0, %c0_i32, %c0_i32_0 : i32, i32, i32
  }
  func.func @transform_11(%arg0: i32) -> (i32, i32, i32) {
    %c0_i32 = arith.constant 0 : i32
    %c0_i32_0 = arith.constant 0 : i32
    %c0_i32_1 = arith.constant 0 : i32
    return %arg0, %c0_i32, %c0_i32_0 : i32, i32, i32
  }
  func.func @transform_12(%arg0: i32) -> (i32, i32, i32) {
    %c0_i32 = arith.constant 0 : i32
    %c0_i32_0 = arith.constant 0 : i32
    %c0_i32_1 = arith.constant 0 : i32
    return %arg0, %c0_i32, %c0_i32_0 : i32, i32, i32
  }
  func.func @transform_13(%arg0: i32) -> (i32, i32, i32) {
    %c0_i32 = arith.constant 0 : i32
    %c0_i32_0 = arith.constant 0 : i32
    %c0_i32_1 = arith.constant 0 : i32
    return %arg0, %c0_i32, %c0_i32_0 : i32, i32, i32
  }
  func.func @transform_14(%arg0: i32) -> (i32, i32, i32) {
    %c0_i32 = arith.constant 0 : i32
    %c0_i32_0 = arith.constant 0 : i32
    %c0_i32_1 = arith.constant 0 : i32
    return %arg0, %c0_i32, %c0_i32_0 : i32, i32, i32
  }
  func.func @transform_15(%arg0: i32) -> (i32, i32, i32) {
    %c0_i32 = arith.constant 0 : i32
    %c0_i32_0 = arith.constant 0 : i32
    %c0_i32_1 = arith.constant 0 : i32
    return %arg0, %c0_i32, %c0_i32_0 : i32, i32, i32
  }
  func.func @transform_16(%arg0: i32) -> (i32, i32, i32) {
    %c0_i32 = arith.constant 0 : i32
    %c0_i32_0 = arith.constant 0 : i32
    %c0_i32_1 = arith.constant 0 : i32
    return %arg0, %c0_i32, %c0_i32_0 : i32, i32, i32
  }
  func.func @transform_17(%arg0: i32) -> (i32, i32, i32) {
    %c0_i32 = arith.constant 0 : i32
    %c0_i32_0 = arith.constant 0 : i32
    %c0_i32_1 = arith.constant 0 : i32
    return %arg0, %c0_i32, %c0_i32_0 : i32, i32, i32
  }
  func.func @transform_18(%arg0: i32) -> (i32, i32, i32) {
    %c0_i32 = arith.constant 0 : i32
    %c0_i32_0 = arith.constant 0 : i32
    %c0_i32_1 = arith.constant 0 : i32
    return %arg0, %c0_i32, %c0_i32_0 : i32, i32, i32
  }
  func.func @transform_19(%arg0: i32) -> (i32, i32, i32) {
    %c0_i32 = arith.constant 0 : i32
    %c0_i32_0 = arith.constant 0 : i32
    %c0_i32_1 = arith.constant 0 : i32
    return %arg0, %c0_i32, %c0_i32_0 : i32, i32, i32
  }
  func.func @transform_20(%arg0: i32) -> (i32, i32, i32) {
    %c0_i32 = arith.constant 0 : i32
    %c0_i32_0 = arith.constant 0 : i32
    %c0_i32_1 = arith.constant 0 : i32
    return %arg0, %c0_i32, %c0_i32_0 : i32, i32, i32
  }
  func.func @transform_21(%arg0: i32) -> (i32, i32, i32) {
    %c0_i32 = arith.constant 0 : i32
    %c0_i32_0 = arith.constant 0 : i32
    %c0_i32_1 = arith.constant 0 : i32
    return %arg0, %c0_i32, %c0_i32_0 : i32, i32, i32
  }
  func.func @transform_22(%arg0: i32) -> (i32, i32) {
    %c0_i32 = arith.constant 0 : i32
    %c0_i32_0 = arith.constant 0 : i32
    %c0_i32_1 = arith.constant 0 : i32
    return %c0_i32, %c0_i32_0 : i32, i32
  }
  func.func @transform_23(%arg0: i32) -> (i32, i32) {
    %c0_i32 = arith.constant 0 : i32
    %c0_i32_0 = arith.constant 0 : i32
    %c0_i32_1 = arith.constant 0 : i32
    return %c0_i32, %c0_i32_0 : i32, i32
  }
  func.func @transform_24(%arg0: i32) -> (i32, i32) {
    %c0_i32 = arith.constant 0 : i32
    %c0_i32_0 = arith.constant 0 : i32
    %c0_i32_1 = arith.constant 0 : i32
    return %c0_i32, %c0_i32_0 : i32, i32
  }
  func.func @transform_25(%arg0: i32) -> (i32, i32) {
    %c0_i32 = arith.constant 0 : i32
    %c0_i32_0 = arith.constant 0 : i32
    %c0_i32_1 = arith.constant 0 : i32
    return %c0_i32, %c0_i32_0 : i32, i32
  }
  func.func @transform_26(%arg0: i32) -> (i32, i32) {
    %c0_i32 = arith.constant 0 : i32
    %c0_i32_0 = arith.constant 0 : i32
    %c0_i32_1 = arith.constant 0 : i32
    return %c0_i32, %c0_i32_0 : i32, i32
  }
}

</mosaic_0001>

<llo_original>
// kernel: tpu_custom_call.1
$region0: #{tpu_custom_call.1}
  #allocation0 [shape = 'u32[]', space=smem, size = 0x4, offset = 0x4, fixed_abs, tag = 'smem constant byte address 0x4 - core index']
  #allocation1 [shape = 'u32[144,128]{1,0:T(1,128)}', space=vmem, size = 0x12000, scoped, tag = 'internal scratch']
  #allocation2 [shape = 'f32[32,128]{1,0:T(8,128)}', space=vmem, size = 0x4000, scoped, tag = 'scratch operand']
  %s0 = inlined_call_operand.vmem [shape: f32[32,128], index: 0, kind: input, shape index: {}]
  %s1 = inlined_call_operand.hbm [shape: f32[16,128], index: 1, kind: input, shape index: {}]
  %s2 = inlined_call_operand.hbm [shape: f32[16,128], index: 2, kind: input, shape index: {}]
  %s3 = inlined_call_operand.hbm [shape: f32[16,128], index: 3, kind: input, shape index: {}]
  %s4 = inlined_call_operand.vmem [shape: f32[32,1], index: 4, kind: input, shape index: {}]
  %s5 = inlined_call_operand.vmem [shape: f32[1,32], index: 5, kind: input, shape index: {}]
  %s6 = inlined_call_operand.vmem [shape: f32[2,1,128], index: 6, kind: input, shape index: {}]
  %s7 = inlined_call_operand.vmem [shape: f32[2,1,128], index: 7, kind: input, shape index: {}]
  %s8 = inlined_call_operand.hbm [shape: bf16[2,128,128], index: 8, kind: input, shape index: {}]
  %s9 = inlined_call_operand.vmem [shape: f32[2,1,128], index: 9, kind: input, shape index: {}]
  %s10 = inlined_call_operand.hbm [shape: bf16[2,128,128], index: 10, kind: input, shape index: {}]
  %s11 = inlined_call_operand.vmem [shape: f32[2,1,128], index: 11, kind: input, shape index: {}]
  %s12 = inlined_call_operand.hbm [shape: bf16[2,128,128], index: 12, kind: input, shape index: {}]
  %s13 = inlined_call_operand.vmem [shape: f32[2,1,128], index: 13, kind: input, shape index: {}]
  %s14 = inlined_call_operand.hbm [shape: bf16[2,128,128], index: 14, kind: input, shape index: {}]
  %s15 = inlined_call_operand.vmem [shape: f32[2,1,128], index: 15, kind: input, shape index: {}]
  %s16 = inlined_call_operand.vmem [shape: f32[2,1,128], index: 16, kind: input, shape index: {}]
  %s17 = inlined_call_operand.vmem [shape: f32[2,1,128], index: 17, kind: input, shape index: {}]
  %s18 = inlined_call_operand.hbm [shape: bf16[2,128,512], index: 18, kind: input, shape index: {}]
  %s19 = inlined_call_operand.vmem [shape: f32[2,1,512], index: 19, kind: input, shape index: {}]
  %s20 = inlined_call_operand.hbm [shape: bf16[2,512,128], index: 20, kind: input, shape index: {}]
  %s21 = inlined_call_operand.vmem [shape: f32[2,1,128], index: 21, kind: input, shape index: {}]
  %s22 = inlined_call_operand.hbm [shape: f32[1,128], index: 22, kind: input, shape index: {}]
  %s23 = inlined_call_operand.hbm [shape: f32[1,128], index: 23, kind: input, shape index: {}]
  %s24 = inlined_call_operand.vmem [shape: bf16[128,128], index: 24, kind: input, shape index: {}]
  %s25 = inlined_call_operand.vmem [shape: f32[1,128], index: 25, kind: input, shape index: {}]
  %s26 = inlined_call_operand.hbm [shape: f32[32,128], index: 26, kind: output, shape index: {}]
  %s27 = sld [smem:[#allocation0]]
  $region189: #{tpu_custom_call.1} parent=0
    _
  %s29 = ssub.s32 1, %s27
  %s30 = scalar_select 0, %s29, %s27
  $region1: #{tpu_custom_call.1} parent=0
    #allocation3 [shape = 'u8[8192]{0}', space=vmem, size = 0x2000, scoped, tag = 'input window, operand 1, single buffered']
    #allocation4 [shape = 's32[2]{0}', space=sflag, size = 0x8, scoped, tag = 'scoped memory for tpu_custom_call.1']
    #allocation5 [shape = 's32[2]{0}', space=sflag, size = 0x8, scoped, tag = 'scoped memory for tpu_custom_call.1']
    #allocation6 [shape = 'u8[8192]{0}', space=vmem, size = 0x2000, scoped, tag = 'input window, operand 2, single buffered']
    #allocation7 [shape = 's32[1]{0}', space=sflag, size = 0x4, scoped, tag = 'scoped memory for tpu_custom_call.1']
    #allocation8 [shape = 'u8[8192]{0}', space=vmem, size = 0x2000, scoped, tag = 'input window, operand 3, single buffered']
    #allocation9 [shape = 'u8[65536]{0}', space=vmem, size = 0x10000, scoped, tag = 'input window, operand 8']
    #allocation10 [shape = 's32[2]{0}', space=sflag, size = 0x8, scoped, tag = 'scoped memory for tpu_custom_call.1']
    #allocation11 [shape = 'u8[65536]{0}', space=vmem, size = 0x10000, scoped, tag = 'input window, operand 10']
    #allocation12 [shape = 'u8[65536]{0}', space=vmem, size = 0x10000, scoped, tag = 'input window, operand 12']
    #allocation13 [shape = 's32[2]{0}', space=sflag, size = 0x8, scoped, tag = 'scoped memory for tpu_custom_call.1']
    #allocation14 [shape = 'u8[65536]{0}', space=vmem, size = 0x10000, scoped, tag = 'input window, operand 14']
    #allocation15 [shape = 'u8[262144]{0}', space=vmem, size = 0x40000, scoped, tag = 'input window, operand 18']
    #allocation16 [shape = 's32[2]{0}', space=sflag, size = 0x8, scoped, tag = 'scoped memory for tpu_custom_call.1']
    #allocation17 [shape = 'u8[262144]{0}', space=vmem, size = 0x40000, scoped, tag = 'input window, operand 20']
    #allocation18 [shape = 'u8[512]{0}', space=vmem, size = 0x400, scoped, tag = 'input window, operand 22, single buffered']
    #allocation19 [shape = 's32[1]{0}', space=sflag, size = 0x4, scoped, tag = 'scoped memory for tpu_custom_call.1']
    #allocation20 [shape = 'u8[512]{0}', space=vmem, size = 0x400, scoped, tag = 'input window, operand 23, single buffered']
    #allocation21 [shape = 'u8[16384]{0}', space=vmem, size = 0x4000, scoped, tag = 'output window, operand 0, single buffered']
    %31 = vsyncpa [#allocation4], 0
    %32 = vsyncpa [#allocation7], 0
    %33 = vsyncpa [#allocation10], 0
    %s34 = scalar_lea.sflag [#allocation10], 1
    %35 = vsyncpa %s34, 0
    %36 = vsyncpa [#allocation13], 0
    %s37 = scalar_lea.sflag [#allocation13], 1
    %38 = vsyncpa %s37, 0
    %39 = vsyncpa [#allocation16], 0
    %s40 = scalar_lea.sflag [#allocation16], 1
    %41 = vsyncpa %s40, 0
    %42 = vsyncpa [#allocation19], 0
    %43 = vsyncpa [#allocation5], 0
    loop: start=0, step=1, limit=4
    $region2: #{tpu_custom_call.1} parent=1 // loop_pre_header
      _
    $region3: #{tpu_custom_call.1} parent=1 // loop_header
      %s45 = sphi 0, %s49
      %p46 = scmp.ge.s32.totalorder %s45, 4
      %s53 = sphi 0, %s53
      %s55 = sphi 0, %s53
      %s56 = sphi 0, %s55
      %s70 = sphi 0, %s56
      %s74 = sphi 0, %s74
      %s76 = sphi 0, %s74
      %s77 = sphi 0, %s76
      %s91 = sphi 0, %s77
      %s95 = sphi 0, %s95
      %s97 = sphi 0, %s95
      %s98 = sphi 0, %s97
      %s112 = sphi 0, %s98
      %s116 = sphi 0, %s116
      %s118 = sphi 0, %s116
      %s119 = sphi 0, %s118
      %s133 = sphi 0, %s119
      %s137 = sphi 0, %s137
      %s139 = sphi 0, %s137
      %s140 = sphi 0, %s139
      %s154 = sphi 0, %s140
      %s158 = sphi 0, %s158
      %s160 = sphi 0, %s158
      %s161 = sphi 0, %s160
      %s175 = sphi 0, %s161
      %s181 = sphi 0, %s183
      %s184 = sphi 0, %s181
      %s185 = sphi 0, %s184
      %s201 = sphi 0, %s185
      %s207 = sphi 0, %s209
      %s210 = sphi 0, %s207
      %s211 = sphi 0, %s210
      %s227 = sphi 0, %s211
      %s233 = sphi 0, %s235
      %s236 = sphi 0, %s233
      %s237 = sphi 0, %s236
      %s253 = sphi 0, %s237
      %s259 = sphi 0, %s261
      %s262 = sphi 0, %s259
      %s263 = sphi 0, %s262
      %s279 = sphi 0, %s263
      %s285 = sphi 0, %s287
      %s288 = sphi 0, %s285
      %s289 = sphi 0, %s288
      %s305 = sphi 0, %s289
      %s311 = sphi 0, %s313
      %s314 = sphi 0, %s311
      %s315 = sphi 0, %s314
      %s331 = sphi 0, %s315
      %s337 = sphi 0, %s339
      %s340 = sphi 0, %s337
      %s341 = sphi 0, %s340
      %s357 = sphi 0, %s341
      %s363 = sphi 0, %s365
      %s366 = sphi 0, %s363
      %s367 = sphi 0, %s366
      %s383 = sphi 0, %s367
      %s389 = sphi 0, %s391
      %s392 = sphi 0, %s389
      %s393 = sphi 0, %s392
      %s409 = sphi 0, %s393
      %s415 = sphi 0, %s417
      %s418 = sphi 0, %s415
      %s419 = sphi 0, %s418
      %s435 = sphi 0, %s419
      %s441 = sphi 0, %s443
      %s444 = sphi 0, %s441
      %s445 = sphi 0, %s444
      %s461 = sphi 0, %s445
      %s467 = sphi 0, %s469
      %s470 = sphi 0, %s467
      %s471 = sphi 0, %s470
      %s487 = sphi 0, %s471
      %s493 = sphi 0, %s495
      %s496 = sphi 0, %s493
      %s497 = sphi 0, %s496
      %s513 = sphi 0, %s497
      %s519 = sphi 0, %s521
      %s522 = sphi 0, %s519
      %s523 = sphi 0, %s522
      %s539 = sphi 0, %s523
      %s545 = sphi 0, %s547
      %s548 = sphi 0, %s545
      %s549 = sphi 0, %s548
      %s565 = sphi 0, %s549
      %s571 = sphi 0, %s573
      %s574 = sphi 0, %s571
      %s575 = sphi 0, %s574
      %s591 = sphi 0, %s575
      %s595 = sphi 0, %s595
      %s597 = sphi 0, %s595
      %s598 = sphi 0, %s597
      %s612 = sphi 0, %s598
      %s616 = sphi 0, %s616
      %s618 = sphi 0, %s616
      %s619 = sphi 0, %s618
      %s633 = sphi 0, %s619
      %s637 = sphi 0, %s637
      %s639 = sphi 0, %s637
      %s640 = sphi 0, %s639
      %s654 = sphi 0, %s640
      %s658 = sphi 0, %s658
      %s660 = sphi 0, %s658
      %s661 = sphi 0, %s660
      %s675 = sphi 0, %s661
      %s679 = sphi 0, %s679
      %s681 = sphi 0, %s679
      %s682 = sphi 0, %s681
      %s696 = sphi 0, %s682
    $region4: #{tpu_custom_call.1} parent=1 // loop_header_branch
      %48 = sbr.rel (%p46) target = $region8
    $region5: #{tpu_custom_call.1} parent=1 // loop_body
      %s50 = ssub.s32 %s45, 1
      %s51 = ssub.s32 %s45, 2
      %s52 = sadd.s32 %s45, 1
      %s54 = sadd.s32 %s53, 1
      %p57 = scmp.eq.s32.totalorder %s45, 1
      %p58 = scmp.ne.s32.totalorder %s53, %s55
      %p59 = scmp.eq.s32.totalorder %s45, 0
      %p60 = por %p58, %p59
      %p61 = scmp.ne.s32.totalorder %s53, %s55
      %p62 = scmp.eq.s32.totalorder %s50, 1
      %p63 = por %p61, %p62
      %p64 = scmp.ne.s32.totalorder %s55, %s56
      %p65 = scmp.eq.s32.totalorder %s50, 0
      %p66 = por %p64, %p65
      %p67 = scmp.ne.s32.totalorder %s55, %s56
      %p68 = scmp.eq.s32.totalorder %s51, 1
      %p69 = por %p67, %p68
      %p71 = scmp.ne.s32.totalorder %s56, %s70
      %p72 = scmp.eq.s32.totalorder %s51, 0
      %p73 = por %p71, %p72
      %s75 = sadd.s32 %s74, 1
      %p78 = scmp.eq.s32.totalorder %s45, 1
      %p79 = scmp.ne.s32.totalorder %s74, %s76
      %p80 = scmp.eq.s32.totalorder %s45, 0
      %p81 = por %p79, %p80
      %p82 = scmp.ne.s32.totalorder %s74, %s76
      %p83 = scmp.eq.s32.totalorder %s50, 1
      %p84 = por %p82, %p83
      %p85 = scmp.ne.s32.totalorder %s76, %s77
      %p86 = scmp.eq.s32.totalorder %s50, 0
      %p87 = por %p85, %p86
      %p88 = scmp.ne.s32.totalorder %s76, %s77
      %p89 = scmp.eq.s32.totalorder %s51, 1
      %p90 = por %p88, %p89
      %p92 = scmp.ne.s32.totalorder %s77, %s91
      %p93 = scmp.eq.s32.totalorder %s51, 0
      %p94 = por %p92, %p93
      %s96 = sadd.s32 %s95, 1
      %p99 = scmp.eq.s32.totalorder %s45, 1
      %p100 = scmp.ne.s32.totalorder %s95, %s97
      %p101 = scmp.eq.s32.totalorder %s45, 0
      %p102 = por %p100, %p101
      %p103 = scmp.ne.s32.totalorder %s95, %s97
      %p104 = scmp.eq.s32.totalorder %s50, 1
      %p105 = por %p103, %p104
      %p106 = scmp.ne.s32.totalorder %s97, %s98
      %p107 = scmp.eq.s32.totalorder %s50, 0
      %p108 = por %p106, %p107
      %p109 = scmp.ne.s32.totalorder %s97, %s98
      %p110 = scmp.eq.s32.totalorder %s51, 1
      %p111 = por %p109, %p110
      %p113 = scmp.ne.s32.totalorder %s98, %s112
      %p114 = scmp.eq.s32.totalorder %s51, 0
      %p115 = por %p113, %p114
      %s117 = sadd.s32 %s116, 1
      %p120 = scmp.eq.s32.totalorder %s45, 1
      %p121 = scmp.ne.s32.totalorder %s116, %s118
      %p122 = scmp.eq.s32.totalorder %s45, 0
      %p123 = por %p121, %p122
      %p124 = scmp.ne.s32.totalorder %s116, %s118
      %p125 = scmp.eq.s32.totalorder %s50, 1
      %p126 = por %p124, %p125
      %p127 = scmp.ne.s32.totalorder %s118, %s119
      %p128 = scmp.eq.s32.totalorder %s50, 0
      %p129 = por %p127, %p128
      %p130 = scmp.ne.s32.totalorder %s118, %s119
      %p131 = scmp.eq.s32.totalorder %s51, 1
      %p132 = por %p130, %p131
      %p134 = scmp.ne.s32.totalorder %s119, %s133
      %p135 = scmp.eq.s32.totalorder %s51, 0
      %p136 = por %p134, %p135
      %s138 = sadd.s32 %s137, 1
      %p141 = scmp.eq.s32.totalorder %s45, 1
      %p142 = scmp.ne.s32.totalorder %s137, %s139
      %p143 = scmp.eq.s32.totalorder %s45, 0
      %p144 = por %p142, %p143
      %p145 = scmp.ne.s32.totalorder %s137, %s139
      %p146 = scmp.eq.s32.totalorder %s50, 1
      %p147 = por %p145, %p146
      %p148 = scmp.ne.s32.totalorder %s139, %s140
      %p149 = scmp.eq.s32.totalorder %s50, 0
      %p150 = por %p148, %p149
      %p151 = scmp.ne.s32.totalorder %s139, %s140
      %p152 = scmp.eq.s32.totalorder %s51, 1
      %p153 = por %p151, %p152
      %p155 = scmp.ne.s32.totalorder %s140, %s154
      %p156 = scmp.eq.s32.totalorder %s51, 0
      %p157 = por %p155, %p156
      %s159 = sadd.s32 %s158, 1
      %p162 = scmp.eq.s32.totalorder %s45, 1
      %p163 = scmp.ne.s32.totalorder %s158, %s160
      %p164 = scmp.eq.s32.totalorder %s45, 0
      %p165 = por %p163, %p164
      %p166 = scmp.ne.s32.totalorder %s158, %s160
      %p167 = scmp.eq.s32.totalorder %s50, 1
      %p168 = por %p166, %p167
      %p169 = scmp.ne.s32.totalorder %s160, %s161
      %p170 = scmp.eq.s32.totalorder %s50, 0
      %p171 = por %p169, %p170
      %p172 = scmp.ne.s32.totalorder %s160, %s161
      %p173 = scmp.eq.s32.totalorder %s51, 1
      %p174 = por %p172, %p173
      %p176 = scmp.ne.s32.totalorder %s161, %s175
      %p177 = scmp.eq.s32.totalorder %s51, 0
      %p178 = por %p176, %p177
      %s179 = ssub.s32 %s45, %s52
      %p180 = scmp.eq.s32.totalorder %s179, 0
      %s182 = sadd.s32 %s181, 1
      %s183 = scalar_select %p180, %s181, %s182
      %p186 = pneg %p180
      %p187 = scmp.eq.s32.totalorder %s45, 1
      %p188 = por %p186, %p187
      %p189 = scmp.ne.s32.totalorder %s181, %s184
      %p190 = scmp.eq.s32.totalorder %s45, 0
      %p191 = por %p189, %p190
      %p192 = scmp.ne.s32.totalorder %s181, %s184
      %p193 = scmp.eq.s32.totalorder %s50, 1
      %p194 = por %p192, %p193
      %p195 = scmp.ne.s32.totalorder %s184, %s185
      %p196 = scmp.eq.s32.totalorder %s50, 0
      %p197 = por %p195, %p196
      %p198 = scmp.ne.s32.totalorder %s184, %s185
      %p199 = scmp.eq.s32.totalorder %s51, 1
      %p200 = por %p198, %p199
      %p202 = scmp.ne.s32.totalorder %s185, %s201
      %p203 = scmp.eq.s32.totalorder %s51, 0
      %p204 = por %p202, %p203
      %s205 = ssub.s32 %s45, %s52
      %p206 = scmp.eq.s32.totalorder %s205, 0
      %s208 = sadd.s32 %s207, 1
      %s209 = scalar_select %p206, %s207, %s208
      %p212 = pneg %p206
      %p213 = scmp.eq.s32.totalorder %s45, 1
      %p214 = por %p212, %p213
      %p215 = scmp.ne.s32.totalorder %s207, %s210
      %p216 = scmp.eq.s32.totalorder %s45, 0
      %p217 = por %p215, %p216
      %p218 = scmp.ne.s32.totalorder %s207, %s210
      %p219 = scmp.eq.s32.totalorder %s50, 1
      %p220 = por %p218, %p219
      %p221 = scmp.ne.s32.totalorder %s210, %s211
      %p222 = scmp.eq.s32.totalorder %s50, 0
      %p223 = por %p221, %p222
      %p224 = scmp.ne.s32.totalorder %s210, %s211
      %p225 = scmp.eq.s32.totalorder %s51, 1
      %p226 = por %p224, %p225
      %p228 = scmp.ne.s32.totalorder %s211, %s227
      %p229 = scmp.eq.s32.totalorder %s51, 0
      %p230 = por %p228, %p229
      %s231 = ssub.s32 %s45, %s52
      %p232 = scmp.eq.s32.totalorder %s231, 0
      %s234 = sadd.s32 %s233, 1
      %s235 = scalar_select %p232, %s233, %s234
      %p238 = pneg %p232
      %p239 = scmp.eq.s32.totalorder %s45, 1
      %p240 = por %p238, %p239
      %p241 = scmp.ne.s32.totalorder %s233, %s236
      %p242 = scmp.eq.s32.totalorder %s45, 0
      %p243 = por %p241, %p242
      %p244 = scmp.ne.s32.totalorder %s233, %s236
      %p245 = scmp.eq.s32.totalorder %s50, 1
      %p246 = por %p244, %p245
      %p247 = scmp.ne.s32.totalorder %s236, %s237
      %p248 = scmp.eq.s32.totalorder %s50, 0
      %p249 = por %p247, %p248
      %p250 = scmp.ne.s32.totalorder %s236, %s237
      %p251 = scmp.eq.s32.totalorder %s51, 1
      %p252 = por %p250, %p251
      %p254 = scmp.ne.s32.totalorder %s237, %s253
      %p255 = scmp.eq.s32.totalorder %s51, 0
      %p256 = por %p254, %p255
      %s257 = ssub.s32 %s45, %s52
      %p258 = scmp.eq.s32.totalorder %s257, 0
      %s260 = sadd.s32 %s259, 1
      %s261 = scalar_select %p258, %s259, %s260
      %p264 = pneg %p258
      %p265 = scmp.eq.s32.totalorder %s45, 1
      %p266 = por %p264, %p265
      %p267 = scmp.ne.s32.totalorder %s259, %s262
      %p268 = scmp.eq.s32.totalorder %s45, 0
      %p269 = por %p267, %p268
      %p270 = scmp.ne.s32.totalorder %s259, %s262
      %p271 = scmp.eq.s32.totalorder %s50, 1
      %p272 = por %p270, %p271
      %p273 = scmp.ne.s32.totalorder %s262, %s263
      %p274 = scmp.eq.s32.totalorder %s50, 0
      %p275 = por %p273, %p274
      %p276 = scmp.ne.s32.totalorder %s262, %s263
      %p277 = scmp.eq.s32.totalorder %s51, 1
      %p278 = por %p276, %p277
      %p280 = scmp.ne.s32.totalorder %s263, %s279
      %p281 = scmp.eq.s32.totalorder %s51, 0
      %p282 = por %p280, %p281
      %s283 = ssub.s32 %s45, %s52
      %p284 = scmp.eq.s32.totalorder %s283, 0
      %s286 = sadd.s32 %s285, 1
      %s287 = scalar_select %p284, %s285, %s286
      %p290 = pneg %p284
      %p291 = scmp.eq.s32.totalorder %s45, 1
      %p292 = por %p290, %p291
      %p293 = scmp.ne.s32.totalorder %s285, %s288
      %p294 = scmp.eq.s32.totalorder %s45, 0
      %p295 = por %p293, %p294
      %p296 = scmp.ne.s32.totalorder %s285, %s288
      %p297 = scmp.eq.s32.totalorder %s50, 1
      %p298 = por %p296, %p297
      %p299 = scmp.ne.s32.totalorder %s288, %s289
      %p300 = scmp.eq.s32.totalorder %s50, 0
      %p301 = por %p299, %p300
      %p302 = scmp.ne.s32.totalorder %s288, %s289
      %p303 = scmp.eq.s32.totalorder %s51, 1
      %p304 = por %p302, %p303
      %p306 = scmp.ne.s32.totalorder %s289, %s305
      %p307 = scmp.eq.s32.totalorder %s51, 0
      %p308 = por %p306, %p307
      %s309 = ssub.s32 %s45, %s52
      %p310 = scmp.eq.s32.totalorder %s309, 0
      %s312 = sadd.s32 %s311, 1
      %s313 = scalar_select %p310, %s311, %s312
      %p316 = pneg %p310
      %p317 = scmp.eq.s32.totalorder %s45, 1
      %p318 = por %p316, %p317
      %p319 = scmp.ne.s32.totalorder %s311, %s314
      %p320 = scmp.eq.s32.totalorder %s45, 0
      %p321 = por %p319, %p320
      %p322 = scmp.ne.s32.totalorder %s311, %s314
      %p323 = scmp.eq.s32.totalorder %s50, 1
      %p324 = por %p322, %p323
      %p325 = scmp.ne.s32.totalorder %s314, %s315
      %p326 = scmp.eq.s32.totalorder %s50, 0
      %p327 = por %p325, %p326
      %p328 = scmp.ne.s32.totalorder %s314, %s315
      %p329 = scmp.eq.s32.totalorder %s51, 1
      %p330 = por %p328, %p329
      %p332 = scmp.ne.s32.totalorder %s315, %s331
      %p333 = scmp.eq.s32.totalorder %s51, 0
      %p334 = por %p332, %p333
      %s335 = ssub.s32 %s45, %s52
      %p336 = scmp.eq.s32.totalorder %s335, 0
      %s338 = sadd.s32 %s337, 1
      %s339 = scalar_select %p336, %s337, %s338
      %p342 = pneg %p336
      %p343 = scmp.eq.s32.totalorder %s45, 1
      %p344 = por %p342, %p343
      %p345 = scmp.ne.s32.totalorder %s337, %s340
      %p346 = scmp.eq.s32.totalorder %s45, 0
      %p347 = por %p345, %p346
      %p348 = scmp.ne.s32.totalorder %s337, %s340
      %p349 = scmp.eq.s32.totalorder %s50, 1
      %p350 = por %p348, %p349
      %p351 = scmp.ne.s32.totalorder %s340, %s341
      %p352 = scmp.eq.s32.totalorder %s50, 0
      %p353 = por %p351, %p352
      %p354 = scmp.ne.s32.totalorder %s340, %s341
      %p355 = scmp.eq.s32.totalorder %s51, 1
      %p356 = por %p354, %p355
      %p358 = scmp.ne.s32.totalorder %s341, %s357
      %p359 = scmp.eq.s32.totalorder %s51, 0
      %p360 = por %p358, %p359
      %s361 = ssub.s32 %s45, %s52
      %p362 = scmp.eq.s32.totalorder %s361, 0
      %s364 = sadd.s32 %s363, 1
      %s365 = scalar_select %p362, %s363, %s364
      %p368 = pneg %p362
      %p369 = scmp.eq.s32.totalorder %s45, 1
      %p370 = por %p368, %p369
      %p371 = scmp.ne.s32.totalorder %s363, %s366
      %p372 = scmp.eq.s32.totalorder %s45, 0
      %p373 = por %p371, %p372
      %p374 = scmp.ne.s32.totalorder %s363, %s366
      %p375 = scmp.eq.s32.totalorder %s50, 1
      %p376 = por %p374, %p375
      %p377 = scmp.ne.s32.totalorder %s366, %s367
      %p378 = scmp.eq.s32.totalorder %s50, 0
      %p379 = por %p377, %p378
      %p380 = scmp.ne.s32.totalorder %s366, %s367
      %p381 = scmp.eq.s32.totalorder %s51, 1
      %p382 = por %p380, %p381
      %p384 = scmp.ne.s32.totalorder %s367, %s383
      %p385 = scmp.eq.s32.totalorder %s51, 0
      %p386 = por %p384, %p385
      %s387 = ssub.s32 %s45, %s52
      %p388 = scmp.eq.s32.totalorder %s387, 0
      %s390 = sadd.s32 %s389, 1
      %s391 = scalar_select %p388, %s389, %s390
      %p394 = pneg %p388
      %p395 = scmp.eq.s32.totalorder %s45, 1
      %p396 = por %p394, %p395
      %p397 = scmp.ne.s32.totalorder %s389, %s392
      %p398 = scmp.eq.s32.totalorder %s45, 0
      %p399 = por %p397, %p398
      %p400 = scmp.ne.s32.totalorder %s389, %s392
      %p401 = scmp.eq.s32.totalorder %s50, 1
      %p402 = por %p400, %p401
      %p403 = scmp.ne.s32.totalorder %s392, %s393
      %p404 = scmp.eq.s32.totalorder %s50, 0
      %p405 = por %p403, %p404
      %p406 = scmp.ne.s32.totalorder %s392, %s393
      %p407 = scmp.eq.s32.totalorder %s51, 1
      %p408 = por %p406, %p407
      %p410 = scmp.ne.s32.totalorder %s393, %s409
      %p411 = scmp.eq.s32.totalorder %s51, 0
      %p412 = por %p410, %p411
      %s413 = ssub.s32 %s45, %s52
      %p414 = scmp.eq.s32.totalorder %s413, 0
      %s416 = sadd.s32 %s415, 1
      %s417 = scalar_select %p414, %s415, %s416
      %p420 = pneg %p414
      %p421 = scmp.eq.s32.totalorder %s45, 1
      %p422 = por %p420, %p421
      %p423 = scmp.ne.s32.totalorder %s415, %s418
      %p424 = scmp.eq.s32.totalorder %s45, 0
      %p425 = por %p423, %p424
      %p426 = scmp.ne.s32.totalorder %s415, %s418
      %p427 = scmp.eq.s32.totalorder %s50, 1
      %p428 = por %p426, %p427
      %p429 = scmp.ne.s32.totalorder %s418, %s419
      %p430 = scmp.eq.s32.totalorder %s50, 0
      %p431 = por %p429, %p430
      %p432 = scmp.ne.s32.totalorder %s418, %s419
      %p433 = scmp.eq.s32.totalorder %s51, 1
      %p434 = por %p432, %p433
      %p436 = scmp.ne.s32.totalorder %s419, %s435
      %p437 = scmp.eq.s32.totalorder %s51, 0
      %p438 = por %p436, %p437
      %s439 = ssub.s32 %s45, %s52
      %p440 = scmp.eq.s32.totalorder %s439, 0
      %s442 = sadd.s32 %s441, 1
      %s443 = scalar_select %p440, %s441, %s442
      %p446 = pneg %p440
      %p447 = scmp.eq.s32.totalorder %s45, 1
      %p448 = por %p446, %p447
      %p449 = scmp.ne.s32.totalorder %s441, %s444
      %p450 = scmp.eq.s32.totalorder %s45, 0
      %p451 = por %p449, %p450
      %p452 = scmp.ne.s32.totalorder %s441, %s444
      %p453 = scmp.eq.s32.totalorder %s50, 1
      %p454 = por %p452, %p453
      %p455 = scmp.ne.s32.totalorder %s444, %s445
      %p456 = scmp.eq.s32.totalorder %s50, 0
      %p457 = por %p455, %p456
      %p458 = scmp.ne.s32.totalorder %s444, %s445
      %p459 = scmp.eq.s32.totalorder %s51, 1
      %p460 = por %p458, %p459
      %p462 = scmp.ne.s32.totalorder %s445, %s461
      %p463 = scmp.eq.s32.totalorder %s51, 0
      %p464 = por %p462, %p463
      %s465 = ssub.s32 %s45, %s52
      %p466 = scmp.eq.s32.totalorder %s465, 0
      %s468 = sadd.s32 %s467, 1
      %s469 = scalar_select %p466, %s467, %s468
      %p472 = pneg %p466
      %p473 = scmp.eq.s32.totalorder %s45, 1
      %p474 = por %p472, %p473
      %p475 = scmp.ne.s32.totalorder %s467, %s470
      %p476 = scmp.eq.s32.totalorder %s45, 0
      %p477 = por %p475, %p476
      %p478 = scmp.ne.s32.totalorder %s467, %s470
      %p479 = scmp.eq.s32.totalorder %s50, 1
      %p480 = por %p478, %p479
      %p481 = scmp.ne.s32.totalorder %s470, %s471
      %p482 = scmp.eq.s32.totalorder %s50, 0
      %p483 = por %p481, %p482
      %p484 = scmp.ne.s32.totalorder %s470, %s471
      %p485 = scmp.eq.s32.totalorder %s51, 1
      %p486 = por %p484, %p485
      %p488 = scmp.ne.s32.totalorder %s471, %s487
      %p489 = scmp.eq.s32.totalorder %s51, 0
      %p490 = por %p488, %p489
      %s491 = ssub.s32 %s45, %s52
      %p492 = scmp.eq.s32.totalorder %s491, 0
      %s494 = sadd.s32 %s493, 1
      %s495 = scalar_select %p492, %s493, %s494
      %p498 = pneg %p492
      %p499 = scmp.eq.s32.totalorder %s45, 1
      %p500 = por %p498, %p499
      %p501 = scmp.ne.s32.totalorder %s493, %s496
      %p502 = scmp.eq.s32.totalorder %s45, 0
      %p503 = por %p501, %p502
      %p504 = scmp.ne.s32.totalorder %s493, %s496
      %p505 = scmp.eq.s32.totalorder %s50, 1
      %p506 = por %p504, %p505
      %p507 = scmp.ne.s32.totalorder %s496, %s497
      %p508 = scmp.eq.s32.totalorder %s50, 0
      %p509 = por %p507, %p508
      %p510 = scmp.ne.s32.totalorder %s496, %s497
      %p511 = scmp.eq.s32.totalorder %s51, 1
      %p512 = por %p510, %p511
      %p514 = scmp.ne.s32.totalorder %s497, %s513
      %p515 = scmp.eq.s32.totalorder %s51, 0
      %p516 = por %p514, %p515
      %s517 = ssub.s32 %s45, %s52
      %p518 = scmp.eq.s32.totalorder %s517, 0
      %s520 = sadd.s32 %s519, 1
      %s521 = scalar_select %p518, %s519, %s520
      %p524 = pneg %p518
      %p525 = scmp.eq.s32.totalorder %s45, 1
      %p526 = por %p524, %p525
      %p527 = scmp.ne.s32.totalorder %s519, %s522
      %p528 = scmp.eq.s32.totalorder %s45, 0
      %p529 = por %p527, %p528
      %p530 = scmp.ne.s32.totalorder %s519, %s522
      %p531 = scmp.eq.s32.totalorder %s50, 1
      %p532 = por %p530, %p531
      %p533 = scmp.ne.s32.totalorder %s522, %s523
      %p534 = scmp.eq.s32.totalorder %s50, 0
      %p535 = por %p533, %p534
      %p536 = scmp.ne.s32.totalorder %s522, %s523
      %p537 = scmp.eq.s32.totalorder %s51, 1
      %p538 = por %p536, %p537
      %p540 = scmp.ne.s32.totalorder %s523, %s539
      %p541 = scmp.eq.s32.totalorder %s51, 0
      %p542 = por %p540, %p541
      %s543 = ssub.s32 %s45, %s52
      %p544 = scmp.eq.s32.totalorder %s543, 0
      %s546 = sadd.s32 %s545, 1
      %s547 = scalar_select %p544, %s545, %s546
      %p550 = pneg %p544
      %p551 = scmp.eq.s32.totalorder %s45, 1
      %p552 = por %p550, %p551
      %p553 = scmp.ne.s32.totalorder %s545, %s548
      %p554 = scmp.eq.s32.totalorder %s45, 0
      %p555 = por %p553, %p554
      %p556 = scmp.ne.s32.totalorder %s545, %s548
      %p557 = scmp.eq.s32.totalorder %s50, 1
      %p558 = por %p556, %p557
      %p559 = scmp.ne.s32.totalorder %s548, %s549
      %p560 = scmp.eq.s32.totalorder %s50, 0
      %p561 = por %p559, %p560
      %p562 = scmp.ne.s32.totalorder %s548, %s549
      %p563 = scmp.eq.s32.totalorder %s51, 1
      %p564 = por %p562, %p563
      %p566 = scmp.ne.s32.totalorder %s549, %s565
      %p567 = scmp.eq.s32.totalorder %s51, 0
      %p568 = por %p566, %p567
      %s569 = ssub.s32 %s45, %s52
      %p570 = scmp.eq.s32.totalorder %s569, 0
      %s572 = sadd.s32 %s571, 1
      %s573 = scalar_select %p570, %s571, %s572
      %p576 = pneg %p570
      %p577 = scmp.eq.s32.totalorder %s45, 1
      %p578 = por %p576, %p577
      %p579 = scmp.ne.s32.totalorder %s571, %s574
      %p580 = scmp.eq.s32.totalorder %s45, 0
      %p581 = por %p579, %p580
      %p582 = scmp.ne.s32.totalorder %s571, %s574
      %p583 = scmp.eq.s32.totalorder %s50, 1
      %p584 = por %p582, %p583
      %p585 = scmp.ne.s32.totalorder %s574, %s575
      %p586 = scmp.eq.s32.totalorder %s50, 0
      %p587 = por %p585, %p586
      %p588 = scmp.ne.s32.totalorder %s574, %s575
      %p589 = scmp.eq.s32.totalorder %s51, 1
      %p590 = por %p588, %p589
      %p592 = scmp.ne.s32.totalorder %s575, %s591
      %p593 = scmp.eq.s32.totalorder %s51, 0
      %p594 = por %p592, %p593
      %s596 = sadd.s32 %s595, 1
      %p599 = scmp.eq.s32.totalorder %s45, 1
      %p600 = scmp.ne.s32.totalorder %s595, %s597
      %p601 = scmp.eq.s32.totalorder %s45, 0
      %p602 = por %p600, %p601
      %p603 = scmp.ne.s32.totalorder %s595, %s597
      %p604 = scmp.eq.s32.totalorder %s50, 1
      %p605 = por %p603, %p604
      %p606 = scmp.ne.s32.totalorder %s597, %s598
      %p607 = scmp.eq.s32.totalorder %s50, 0
      %p608 = por %p606, %p607
      %p609 = scmp.ne.s32.totalorder %s597, %s598
      %p610 = scmp.eq.s32.totalorder %s51, 1
      %p611 = por %p609, %p610
      %p613 = scmp.ne.s32.totalorder %s598, %s612
      %p614 = scmp.eq.s32.totalorder %s51, 0
      %p615 = por %p613, %p614
      %s617 = sadd.s32 %s616, 1
      %p620 = scmp.eq.s32.totalorder %s45, 1
      %p621 = scmp.ne.s32.totalorder %s616, %s618
      %p622 = scmp.eq.s32.totalorder %s45, 0
      %p623 = por %p621, %p622
      %p624 = scmp.ne.s32.totalorder %s616, %s618
      %p625 = scmp.eq.s32.totalorder %s50, 1
      %p626 = por %p624, %p625
      %p627 = scmp.ne.s32.totalorder %s618, %s619
      %p628 = scmp.eq.s32.totalorder %s50, 0
      %p629 = por %p627, %p628
      %p630 = scmp.ne.s32.totalorder %s618, %s619
      %p631 = scmp.eq.s32.totalorder %s51, 1
      %p632 = por %p630, %p631
      %p634 = scmp.ne.s32.totalorder %s619, %s633
      %p635 = scmp.eq.s32.totalorder %s51, 0
      %p636 = por %p634, %p635
      %s638 = sadd.s32 %s637, 1
      %p641 = scmp.eq.s32.totalorder %s45, 1
      %p642 = scmp.ne.s32.totalorder %s637, %s639
      %p643 = scmp.eq.s32.totalorder %s45, 0
      %p644 = por %p642, %p643
      %p645 = scmp.ne.s32.totalorder %s637, %s639
      %p646 = scmp.eq.s32.totalorder %s50, 1
      %p647 = por %p645, %p646
      %p648 = scmp.ne.s32.totalorder %s639, %s640
      %p649 = scmp.eq.s32.totalorder %s50, 0
      %p650 = por %p648, %p649
      %p651 = scmp.ne.s32.totalorder %s639, %s640
      %p652 = scmp.eq.s32.totalorder %s51, 1
      %p653 = por %p651, %p652
      %p655 = scmp.ne.s32.totalorder %s640, %s654
      %p656 = scmp.eq.s32.totalorder %s51, 0
      %p657 = por %p655, %p656
      %s659 = sadd.s32 %s658, 1
      %p662 = scmp.eq.s32.totalorder %s45, 1
      %p663 = scmp.ne.s32.totalorder %s658, %s660
      %p664 = scmp.eq.s32.totalorder %s45, 0
      %p665 = por %p663, %p664
      %p666 = scmp.ne.s32.totalorder %s658, %s660
      %p667 = scmp.eq.s32.totalorder %s50, 1
      %p668 = por %p666, %p667
      %p669 = scmp.ne.s32.totalorder %s660, %s661
      %p670 = scmp.eq.s32.totalorder %s50, 0
      %p671 = por %p669, %p670
      %p672 = scmp.ne.s32.totalorder %s660, %s661
      %p673 = scmp.eq.s32.totalorder %s51, 1
      %p674 = por %p672, %p673
      %p676 = scmp.ne.s32.totalorder %s661, %s675
      %p677 = scmp.eq.s32.totalorder %s51, 0
      %p678 = por %p676, %p677
      %s680 = sadd.s32 %s679, 1
      %p683 = scmp.eq.s32.totalorder %s45, 1
      %p684 = scmp.ne.s32.totalorder %s679, %s681
      %p685 = scmp.eq.s32.totalorder %s45, 0
      %p686 = por %p684, %p685
      %p687 = scmp.ne.s32.totalorder %s679, %s681
      %p688 = scmp.eq.s32.totalorder %s50, 1
      %p689 = por %p687, %p688
      %p690 = scmp.ne.s32.totalorder %s681, %s682
      %p691 = scmp.eq.s32.totalorder %s50, 0
      %p692 = por %p690, %p691
      %p693 = scmp.ne.s32.totalorder %s681, %s682
      %p694 = scmp.eq.s32.totalorder %s51, 1
      %p695 = por %p693, %p694
      %p697 = scmp.ne.s32.totalorder %s682, %s696
      %p698 = scmp.eq.s32.totalorder %s51, 0
      %p699 = por %p697, %p698
      %p700 = scmp.le.s32.totalorder 1, %s45
      %p701 = scmp.lt.s32.totalorder %s45, 3
      %p702 = pnand %p700, %p701
      %p703 = pneg %p702
      // Predicated region
      $region9: #{tpu_custom_call.1} parent=5 // pred_check
        _
      $region10: #{tpu_custom_call.1} parent=5 // pred_check_branch
        %705 = sbr.rel (%p702) target = $region12
      $region11: #{tpu_custom_call.1} parent=5 // pred_region
        %s706 = ssub.s32 %s45, 1
        // Predicated region
        $region13: #{tpu_custom_call.1} parent=11 // pred_check
          %p707 = pneg %p66
        $region14: #{tpu_custom_call.1} parent=11 // pred_check_branch
          %709 = sbr.rel (%p707) target = $region16
        $region15: #{tpu_custom_call.1} parent=11 // pred_region
          _
        $region16: #{tpu_custom_call.1} parent=11 // pred_fallthru
          _
        // Predicated region
        $region17: #{tpu_custom_call.1} parent=11 // pred_check
          %p710 = pneg %p87
        $region18: #{tpu_custom_call.1} parent=11 // pred_check_branch
          %712 = sbr.rel (%p710) target = $region20
        $region19: #{tpu_custom_call.1} parent=11 // pred_region
          %s714 = ssub.s32 256, 256
          %715 = vsyncadd [#allocation4], %s714
          %s716 = sshll.u32 [#allocation3], 4
          %s717 = int_to_ptr.vmem [resolvable:$true] %s716
          %722 = dma.hbm_to_vmem [thread:$0]  %s1, 256, %s717, [#allocation4], 128, 128, 8
        $region20: #{tpu_custom_call.1} parent=11 // pred_fallthru
          _
        // Predicated region
        $region21: #{tpu_custom_call.1} parent=11 // pred_check
          %p723 = pneg %p108
        $region22: #{tpu_custom_call.1} parent=11 // pred_check_branch
          %725 = sbr.rel (%p723) target = $region24
        $region23: #{tpu_custom_call.1} parent=11 // pred_region
          %s727 = ssub.s32 256, 256
          %728 = vsyncadd [#allocation7], %s727
          %s729 = sshll.u32 [#allocation6], 4
          %s730 = int_to_ptr.vmem [resolvable:$true] %s729
          %735 = dma.hbm_to_vmem [thread:$0]  %s2, 256, %s730, [#allocation7], 128, 128, 8
        $region24: #{tpu_custom_call.1} parent=11 // pred_fallthru
          _
        // Predicated region
        $region25: #{tpu_custom_call.1} parent=11 // pred_check
          %p736 = pneg %p129
        $region26: #{tpu_custom_call.1} parent=11 // pred_check_branch
          %738 = sbr.rel (%p736) target = $region28
        $region27: #{tpu_custom_call.1} parent=11 // pred_region
          %s740 = ssub.s32 256, 256
          %741 = vsyncadd [#allocation7], %s740
          %s742 = sshll.u32 [#allocation8], 4
          %s743 = int_to_ptr.vmem [resolvable:$true] %s742
          %748 = dma.hbm_to_vmem [thread:$0]  %s3, 256, %s743, [#allocation7], 128, 128, 8
        $region28: #{tpu_custom_call.1} parent=11 // pred_fallthru
          _
        // Predicated region
        $region29: #{tpu_custom_call.1} parent=11 // pred_check
          %p749 = pneg %p150
        $region30: #{tpu_custom_call.1} parent=11 // pred_check_branch
          %751 = sbr.rel (%p749) target = $region32
        $region31: #{tpu_custom_call.1} parent=11 // pred_region
          _
        $region32: #{tpu_custom_call.1} parent=11 // pred_fallthru
          _
        // Predicated region
        $region33: #{tpu_custom_call.1} parent=11 // pred_check
          %p752 = pneg %p171
        $region34: #{tpu_custom_call.1} parent=11 // pred_check_branch
          %754 = sbr.rel (%p752) target = $region36
        $region35: #{tpu_custom_call.1} parent=11 // pred_region
          _
        $region36: #{tpu_custom_call.1} parent=11 // pred_fallthru
          _
        // Predicated region
        $region37: #{tpu_custom_call.1} parent=11 // pred_check
          %p755 = pneg %p608
        $region38: #{tpu_custom_call.1} parent=11 // pred_check_branch
          %757 = sbr.rel (%p755) target = $region40
        $region39: #{tpu_custom_call.1} parent=11 // pred_region
          %s759 = ssub.s32 16, 16
          %760 = vsyncadd [#allocation19], %s759
          %s762 = sshll.u32 [#allocation18], 4
          %s763 = int_to_ptr.vmem [resolvable:$true] %s762
          %765 = dma.hbm_to_vmem [thread:$0]  %s22, 16, %s763, [#allocation19]
        $region40: #{tpu_custom_call.1} parent=11 // pred_fallthru
          _
        // Predicated region
        $region41: #{tpu_custom_call.1} parent=11 // pred_check
          %p766 = pneg %p629
        $region42: #{tpu_custom_call.1} parent=11 // pred_check_branch
          %768 = sbr.rel (%p766) target = $region44
        $region43: #{tpu_custom_call.1} parent=11 // pred_region
          %s770 = ssub.s32 16, 16
          %771 = vsyncadd [#allocation19], %s770
          %s773 = sshll.u32 [#allocation20], 4
          %s774 = int_to_ptr.vmem [resolvable:$true] %s773
          %776 = dma.hbm_to_vmem [thread:$0]  %s23, 16, %s774, [#allocation19]
        $region44: #{tpu_custom_call.1} parent=11 // pred_fallthru
          _
        // Predicated region
        $region45: #{tpu_custom_call.1} parent=11 // pred_check
          %p777 = pneg %p650
        $region46: #{tpu_custom_call.1} parent=11 // pred_check_branch
          %779 = sbr.rel (%p777) target = $region48
        $region47: #{tpu_custom_call.1} parent=11 // pred_region
          _
        $region48: #{tpu_custom_call.1} parent=11 // pred_fallthru
          _
        // Predicated region
        $region49: #{tpu_custom_call.1} parent=11 // pred_check
          %p780 = pneg %p671
        $region50: #{tpu_custom_call.1} parent=11 // pred_check_branch
          %782 = sbr.rel (%p780) target = $region52
        $region51: #{tpu_custom_call.1} parent=11 // pred_region
          _
        $region52: #{tpu_custom_call.1} parent=11 // pred_fallthru
          _
      $region12: #{tpu_custom_call.1} parent=5 // pred_fallthru
        _
      %p783 = scmp.lt.s32.totalorder %s45, 2
      // Predicated region
      $region53: #{tpu_custom_call.1} parent=5 // pred_check
        %p784 = pneg %p783
      $region54: #{tpu_custom_call.1} parent=5 // pred_check_branch
        %786 = sbr.rel (%p784) target = $region56
      $region55: #{tpu_custom_call.1} parent=5 // pred_region
        // Predicated region
        $region57: #{tpu_custom_call.1} parent=55 // pred_check
          %p787 = pneg %p191
        $region58: #{tpu_custom_call.1} parent=55 // pred_check_branch
          %789 = sbr.rel (%p787) target = $region60
        $region59: #{tpu_custom_call.1} parent=55 // pred_region
          %p790 = scmp.lt.s32.totalorder %s45, 1
          %s791 = scalar_select %p790, %s45, 1
          %s792 = scalar_lea.vmem %s6, %s791
        $region60: #{tpu_custom_call.1} parent=55 // pred_fallthru
          _
        // Predicated region
        $region61: #{tpu_custom_call.1} parent=55 // pred_check
          %p793 = pneg %p217
        $region62: #{tpu_custom_call.1} parent=55 // pred_check_branch
          %795 = sbr.rel (%p793) target = $region64
        $region63: #{tpu_custom_call.1} parent=55 // pred_region
          %p796 = scmp.lt.s32.totalorder %s45, 1
          %s797 = scalar_select %p796, %s45, 1
          %s798 = scalar_lea.vmem %s7, %s797
        $region64: #{tpu_custom_call.1} parent=55 // pred_fallthru
          _
        // Predicated region
        $region65: #{tpu_custom_call.1} parent=55 // pred_check
          %p799 = pneg %p243
        $region66: #{tpu_custom_call.1} parent=55 // pred_check_branch
          %801 = sbr.rel (%p799) target = $region68
        $region67: #{tpu_custom_call.1} parent=55 // pred_region
          %s802 = sand.u32 %s45, 1
          %s803 = scalar_lea.sflag [#allocation10], %s802
          %s804 = sand.u32 %s233, 1
          %s805 = smul.addr %s804, 64
          %s806 = scalar_lea.vmem [#allocation9], %s805
          %s808 = ssub.s32 1024, 1024
          %809 = vsyncadd %s803, %s808
          %s810 = smul.addr %s45, 16
          %s811 = smul.addr %s810, 64
          %s812 = scalar_lea.hbm %s8, %s811
          %s813 = sshll.u32 %s806, 4
          %s814 = int_to_ptr.vmem [resolvable:$true] %s813
          %819 = dma.hbm_to_vmem [thread:$0]  %s812, 1024, %s814, %s803, 64, 64, 4
        $region68: #{tpu_custom_call.1} parent=55 // pred_fallthru
          _
        // Predicated region
        $region69: #{tpu_custom_call.1} parent=55 // pred_check
          %p820 = pneg %p269
        $region70: #{tpu_custom_call.1} parent=55 // pred_check_branch
          %822 = sbr.rel (%p820) target = $region72
        $region71: #{tpu_custom_call.1} parent=55 // pred_region
          %p823 = scmp.lt.s32.totalorder %s45, 1
          %s824 = scalar_select %p823, %s45, 1
          %s825 = scalar_lea.vmem %s9, %s824
        $region72: #{tpu_custom_call.1} parent=55 // pred_fallthru
          _
        // Predicated region
        $region73: #{tpu_custom_call.1} parent=55 // pred_check
          %p826 = pneg %p295
        $region74: #{tpu_custom_call.1} parent=55 // pred_check_branch
          %828 = sbr.rel (%p826) target = $region76
        $region75: #{tpu_custom_call.1} parent=55 // pred_region
          %s829 = sand.u32 %s45, 1
          %s830 = scalar_lea.sflag [#allocation10], %s829
          %s831 = sand.u32 %s285, 1
          %s832 = smul.addr %s831, 64
          %s833 = scalar_lea.vmem [#allocation11], %s832
          %s835 = ssub.s32 1024, 1024
          %836 = vsyncadd %s830, %s835
          %s837 = smul.addr %s45, 16
          %s838 = smul.addr %s837, 64
          %s839 = scalar_lea.hbm %s10, %s838
          %s840 = sshll.u32 %s833, 4
          %s841 = int_to_ptr.vmem [resolvable:$true] %s840
          %846 = dma.hbm_to_vmem [thread:$0]  %s839, 1024, %s841, %s830, 64, 64, 4
        $region76: #{tpu_custom_call.1} parent=55 // pred_fallthru
          _
        // Predicated region
        $region77: #{tpu_custom_call.1} parent=55 // pred_check
          %p847 = pneg %p321
        $region78: #{tpu_custom_call.1} parent=55 // pred_check_branch
          %849 = sbr.rel (%p847) target = $region80
        $region79: #{tpu_custom_call.1} parent=55 // pred_region
          %p850 = scmp.lt.s32.totalorder %s45, 1
          %s851 = scalar_select %p850, %s45, 1
          %s852 = scalar_lea.vmem %s11, %s851
        $region80: #{tpu_custom_call.1} parent=55 // pred_fallthru
          _
        // Predicated region
        $region81: #{tpu_custom_call.1} parent=55 // pred_check
          %p853 = pneg %p347
        $region82: #{tpu_custom_call.1} parent=55 // pred_check_branch
          %855 = sbr.rel (%p853) target = $region84
        $region83: #{tpu_custom_call.1} parent=55 // pred_region
          %s856 = sand.u32 %s45, 1
          %s857 = scalar_lea.sflag [#allocation13], %s856
          %s858 = sand.u32 %s337, 1
          %s859 = smul.addr %s858, 64
          %s860 = scalar_lea.vmem [#allocation12], %s859
          %s862 = ssub.s32 1024, 1024
          %863 = vsyncadd %s857, %s862
          %s864 = smul.addr %s45, 16
          %s865 = smul.addr %s864, 64
          %s866 = scalar_lea.hbm %s12, %s865
          %s867 = sshll.u32 %s860, 4
          %s868 = int_to_ptr.vmem [resolvable:$true] %s867
          %873 = dma.hbm_to_vmem [thread:$0]  %s866, 1024, %s868, %s857, 64, 64, 4
        $region84: #{tpu_custom_call.1} parent=55 // pred_fallthru
          _
        // Predicated region
        $region85: #{tpu_custom_call.1} parent=55 // pred_check
          %p874 = pneg %p373
        $region86: #{tpu_custom_call.1} parent=55 // pred_check_branch
          %876 = sbr.rel (%p874) target = $region88
        $region87: #{tpu_custom_call.1} parent=55 // pred_region
          %p877 = scmp.lt.s32.totalorder %s45, 1
          %s878 = scalar_select %p877, %s45, 1
          %s879 = scalar_lea.vmem %s13, %s878
        $region88: #{tpu_custom_call.1} parent=55 // pred_fallthru
          _
        // Predicated region
        $region89: #{tpu_custom_call.1} parent=55 // pred_check
          %p880 = pneg %p399
        $region90: #{tpu_custom_call.1} parent=55 // pred_check_branch
          %882 = sbr.rel (%p880) target = $region92
        $region91: #{tpu_custom_call.1} parent=55 // pred_region
          %s883 = sand.u32 %s45, 1
          %s884 = scalar_lea.sflag [#allocation13], %s883
          %s885 = sand.u32 %s389, 1
          %s886 = smul.addr %s885, 64
          %s887 = scalar_lea.vmem [#allocation14], %s886
          %s889 = ssub.s32 1024, 1024
          %890 = vsyncadd %s884, %s889
          %s891 = smul.addr %s45, 16
          %s892 = smul.addr %s891, 64
          %s893 = scalar_lea.hbm %s14, %s892
          %s894 = sshll.u32 %s887, 4
          %s895 = int_to_ptr.vmem [resolvable:$true] %s894
          %900 = dma.hbm_to_vmem [thread:$0]  %s893, 1024, %s895, %s884, 64, 64, 4
        $region92: #{tpu_custom_call.1} parent=55 // pred_fallthru
          _
        // Predicated region
        $region93: #{tpu_custom_call.1} parent=55 // pred_check
          %p901 = pneg %p425
        $region94: #{tpu_custom_call.1} parent=55 // pred_check_branch
          %903 = sbr.rel (%p901) target = $region96
        $region95: #{tpu_custom_call.1} parent=55 // pred_region
          %p904 = scmp.lt.s32.totalorder %s45, 1
          %s905 = scalar_select %p904, %s45, 1
          %s906 = scalar_lea.vmem %s15, %s905
        $region96: #{tpu_custom_call.1} parent=55 // pred_fallthru
          _
        // Predicated region
        $region97: #{tpu_custom_call.1} parent=55 // pred_check
          %p907 = pneg %p451
        $region98: #{tpu_custom_call.1} parent=55 // pred_check_branch
          %909 = sbr.rel (%p907) target = $region100
        $region99: #{tpu_custom_call.1} parent=55 // pred_region
          %p910 = scmp.lt.s32.totalorder %s45, 1
          %s911 = scalar_select %p910, %s45, 1
          %s912 = scalar_lea.vmem %s16, %s911
        $region100: #{tpu_custom_call.1} parent=55 // pred_fallthru
          _
        // Predicated region
        $region101: #{tpu_custom_call.1} parent=55 // pred_check
          %p913 = pneg %p477
        $region102: #{tpu_custom_call.1} parent=55 // pred_check_branch
          %915 = sbr.rel (%p913) target = $region104
        $region103: #{tpu_custom_call.1} parent=55 // pred_region
          %p916 = scmp.lt.s32.totalorder %s45, 1
          %s917 = scalar_select %p916, %s45, 1
          %s918 = scalar_lea.vmem %s17, %s917
        $region104: #{tpu_custom_call.1} parent=55 // pred_fallthru
          _
        // Predicated region
        $region105: #{tpu_custom_call.1} parent=55 // pred_check
          %p919 = pneg %p503
        $region106: #{tpu_custom_call.1} parent=55 // pred_check_branch
          %921 = sbr.rel (%p919) target = $region108
        $region107: #{tpu_custom_call.1} parent=55 // pred_region
          %s922 = sand.u32 %s45, 1
          %s923 = scalar_lea.sflag [#allocation16], %s922
          %s924 = sand.u32 %s493, 1
          %s925 = smul.addr %s924, 256
          %s926 = scalar_lea.vmem [#allocation15], %s925
          %s928 = ssub.s32 4096, 4096
          %929 = vsyncadd %s923, %s928
          %s930 = smul.addr %s45, 64
          %s931 = smul.addr %s930, 64
          %s932 = scalar_lea.hbm %s18, %s931
          %s933 = sshll.u32 %s926, 4
          %s934 = int_to_ptr.vmem [resolvable:$true] %s933
          %939 = dma.hbm_to_vmem [thread:$0]  %s932, 4096, %s934, %s923, 256, 256, 16
        $region108: #{tpu_custom_call.1} parent=55 // pred_fallthru
          _
        // Predicated region
        $region109: #{tpu_custom_call.1} parent=55 // pred_check
          %p940 = pneg %p529
        $region110: #{tpu_custom_call.1} parent=55 // pred_check_branch
          %942 = sbr.rel (%p940) target = $region112
        $region111: #{tpu_custom_call.1} parent=55 // pred_region
          %p943 = scmp.lt.s32.totalorder %s45, 1
          %s944 = scalar_select %p943, %s45, 1
          %s945 = smul.addr %s944, 4
          %s946 = scalar_lea.vmem %s19, %s945
        $region112: #{tpu_custom_call.1} parent=55 // pred_fallthru
          _
        // Predicated region
        $region113: #{tpu_custom_call.1} parent=55 // pred_check
          %p947 = pneg %p555
        $region114: #{tpu_custom_call.1} parent=55 // pred_check_branch
          %949 = sbr.rel (%p947) target = $region116
        $region115: #{tpu_custom_call.1} parent=55 // pred_region
          %s950 = sand.u32 %s45, 1
          %s951 = scalar_lea.sflag [#allocation16], %s950
          %s952 = sand.u32 %s545, 1
          %s953 = smul.addr %s952, 256
          %s954 = scalar_lea.vmem [#allocation17], %s953
          %s956 = ssub.s32 4096, 4096
          %957 = vsyncadd %s951, %s956
          %s958 = smul.addr %s45, 64
          %s959 = smul.addr %s958, 64
          %s960 = scalar_lea.hbm %s20, %s959
          %s961 = sshll.u32 %s954, 4
          %s962 = int_to_ptr.vmem [resolvable:$true] %s961
          %967 = dma.hbm_to_vmem [thread:$0]  %s960, 4096, %s962, %s951, 64, 64, 4
        $region116: #{tpu_custom_call.1} parent=55 // pred_fallthru
          _
        // Predicated region
        $region117: #{tpu_custom_call.1} parent=55 // pred_check
          %p968 = pneg %p581
        $region118: #{tpu_custom_call.1} parent=55 // pred_check_branch
          %970 = sbr.rel (%p968) target = $region120
        $region119: #{tpu_custom_call.1} parent=55 // pred_region
          %p971 = scmp.lt.s32.totalorder %s45, 1
          %s972 = scalar_select %p971, %s45, 1
          %s973 = scalar_lea.vmem %s21, %s972
        $region120: #{tpu_custom_call.1} parent=55 // pred_fallthru
          _
      $region56: #{tpu_custom_call.1} parent=5 // pred_fallthru
        _
      %p974 = scmp.le.s32.totalorder 1, %s45
      %p975 = scmp.lt.s32.totalorder %s45, 3
      %p976 = pnand %p974, %p975
      %p977 = pneg %p976
      // Predicated region
      $region121: #{tpu_custom_call.1} parent=5 // pred_check
        _
      $region122: #{tpu_custom_call.1} parent=5 // pred_check_branch
        %979 = sbr.rel (%p976) target = $region124
      $region123: #{tpu_custom_call.1} parent=5 // pred_region
        %s980 = ssub.s32 %s45, 1
        // Predicated region
        $region125: #{tpu_custom_call.1} parent=123 // pred_check
          %p981 = pneg %p87
        $region126: #{tpu_custom_call.1} parent=123 // pred_check_branch
          %983 = sbr.rel (%p981) target = $region128
        $region127: #{tpu_custom_call.1} parent=123 // pred_region
          %984 = dma.done [#allocation4], 256
        $region128: #{tpu_custom_call.1} parent=123 // pred_fallthru
          _
        // Predicated region
        $region129: #{tpu_custom_call.1} parent=123 // pred_check
          %p985 = pneg %p108
        $region130: #{tpu_custom_call.1} parent=123 // pred_check_branch
          %987 = sbr.rel (%p985) target = $region132
        $region131: #{tpu_custom_call.1} parent=123 // pred_region
          %988 = dma.done [#allocation7], 256
        $region132: #{tpu_custom_call.1} parent=123 // pred_fallthru
          _
        // Predicated region
        $region133: #{tpu_custom_call.1} parent=123 // pred_check
          %p989 = pneg %p129
        $region134: #{tpu_custom_call.1} parent=123 // pred_check_branch
          %991 = sbr.rel (%p989) target = $region136
        $region135: #{tpu_custom_call.1} parent=123 // pred_region
          %992 = dma.done [#allocation7], 256
        $region136: #{tpu_custom_call.1} parent=123 // pred_fallthru
          _
        %s993 = sand.u32 %s50, 1
        %s994 = scalar_lea.sflag [#allocation10], %s993
        %s995 = sand.u32 %s236, 1
        %s996 = smul.addr %s995, 64
        %s997 = scalar_lea.vmem [#allocation9], %s996
        // Predicated region
        $region137: #{tpu_custom_call.1} parent=123 // pred_check
          %p998 = pneg %p249
        $region138: #{tpu_custom_call.1} parent=123 // pred_check_branch
          %1000 = sbr.rel (%p998) target = $region140
        $region139: #{tpu_custom_call.1} parent=123 // pred_region
          %1001 = dma.done %s994, 1024
        $region140: #{tpu_custom_call.1} parent=123 // pred_fallthru
          _
        %s1002 = sand.u32 %s50, 1
        %s1003 = scalar_lea.sflag [#allocation10], %s1002
        %s1004 = sand.u32 %s288, 1
        %s1005 = smul.addr %s1004, 64
        %s1006 = scalar_lea.vmem [#allocation11], %s1005
        // Predicated region
        $region141: #{tpu_custom_call.1} parent=123 // pred_check
          %p1007 = pneg %p301
        $region142: #{tpu_custom_call.1} parent=123 // pred_check_branch
          %1009 = sbr.rel (%p1007) target = $region144
        $region143: #{tpu_custom_call.1} parent=123 // pred_region
          %1010 = dma.done %s1003, 1024
        $region144: #{tpu_custom_call.1} parent=123 // pred_fallthru
          _
        %s1011 = sand.u32 %s50, 1
        %s1012 = scalar_lea.sflag [#allocation13], %s1011
        %s1013 = sand.u32 %s340, 1
        %s1014 = smul.addr %s1013, 64
        %s1015 = scalar_lea.vmem [#allocation12], %s1014
        // Predicated region
        $region145: #{tpu_custom_call.1} parent=123 // pred_check
          %p1016 = pneg %p353
        $region146: #{tpu_custom_call.1} parent=123 // pred_check_branch
          %1018 = sbr.rel (%p1016) target = $region148
        $region147: #{tpu_custom_call.1} parent=123 // pred_region
          %1019 = dma.done %s1012, 1024
        $region148: #{tpu_custom_call.1} parent=123 // pred_fallthru
          _
        %s1020 = sand.u32 %s50, 1
        %s1021 = scalar_lea.sflag [#allocation13], %s1020
        %s1022 = sand.u32 %s392, 1
        %s1023 = smul.addr %s1022, 64
        %s1024 = scalar_lea.vmem [#allocation14], %s1023
        // Predicated region
        $region149: #{tpu_custom_call.1} parent=123 // pred_check
          %p1025 = pneg %p405
        $region150: #{tpu_custom_call.1} parent=123 // pred_check_branch
          %1027 = sbr.rel (%p1025) target = $region152
        $region151: #{tpu_custom_call.1} parent=123 // pred_region
          %1028 = dma.done %s1021, 1024
        $region152: #{tpu_custom_call.1} parent=123 // pred_fallthru
          _
        %s1029 = sand.u32 %s50, 1
        %s1030 = scalar_lea.sflag [#allocation16], %s1029
        %s1031 = sand.u32 %s496, 1
        %s1032 = smul.addr %s1031, 256
        %s1033 = scalar_lea.vmem [#allocation15], %s1032
        // Predicated region
        $region153: #{tpu_custom_call.1} parent=123 // pred_check
          %p1034 = pneg %p509
        $region154: #{tpu_custom_call.1} parent=123 // pred_check_branch
          %1036 = sbr.rel (%p1034) target = $region156
        $region155: #{tpu_custom_call.1} parent=123 // pred_region
          %1037 = dma.done %s1030, 4096
        $region156: #{tpu_custom_call.1} parent=123 // pred_fallthru
          _
        %s1038 = sand.u32 %s50, 1
        %s1039 = scalar_lea.sflag [#allocation16], %s1038
        %s1040 = sand.u32 %s548, 1
        %s1041 = smul.addr %s1040, 256
        %s1042 = scalar_lea.vmem [#allocation17], %s1041
        // Predicated region
        $region157: #{tpu_custom_call.1} parent=123 // pred_check
          %p1043 = pneg %p561
        $region158: #{tpu_custom_call.1} parent=123 // pred_check_branch
          %1045 = sbr.rel (%p1043) target = $region160
        $region159: #{tpu_custom_call.1} parent=123 // pred_region
          %1046 = dma.done %s1039, 4096
        $region160: #{tpu_custom_call.1} parent=123 // pred_fallthru
          _
        // Predicated region
        $region161: #{tpu_custom_call.1} parent=123 // pred_check
          %p1047 = pneg %p608
        $region162: #{tpu_custom_call.1} parent=123 // pred_check_branch
          %1049 = sbr.rel (%p1047) target = $region164
        $region163: #{tpu_custom_call.1} parent=123 // pred_region
          %1050 = dma.done [#allocation19], 16
        $region164: #{tpu_custom_call.1} parent=123 // pred_fallthru
          _
        // Predicated region
        $region165: #{tpu_custom_call.1} parent=123 // pred_check
          %p1051 = pneg %p629
        $region166: #{tpu_custom_call.1} parent=123 // pred_check_branch
          %1053 = sbr.rel (%p1051) target = $region168
        $region167: #{tpu_custom_call.1} parent=123 // pred_region
          %1054 = dma.done [#allocation19], 16
        $region168: #{tpu_custom_call.1} parent=123 // pred_fallthru
          _
        %p1055 = pneg %p66
        %p1056 = pneg %p63
        %p1057 = pneg %p87
        %p1058 = pneg %p84
        %p1059 = pneg %p108
        %p1060 = pneg %p105
        %p1061 = pneg %p129
        %p1062 = pneg %p126
        %p1063 = pneg %p150
        %p1064 = pneg %p147
        %p1065 = pneg %p171
        %p1066 = pneg %p168
        %p1067 = scmp.lt.s32.totalorder %s50, 1
        %s1068 = scalar_select %p1067, %s50, 1
        %s1069 = scalar_lea.vmem %s6, %s1068
        %p1070 = pneg %p197
        %p1071 = pneg %p194
        %p1072 = scmp.lt.s32.totalorder %s50, 1
        %s1073 = scalar_select %p1072, %s50, 1
        %s1074 = scalar_lea.vmem %s7, %s1073
        %p1075 = pneg %p223
        %p1076 = pneg %p220
        %s1077 = sand.u32 %s50, 1
        %s1078 = scalar_lea.sflag [#allocation10], %s1077
        %s1079 = sand.u32 %s236, 1
        %s1080 = smul.addr %s1079, 64
        %s1081 = scalar_lea.vmem [#allocation9], %s1080
        %p1082 = pneg %p249
        %p1083 = pneg %p246
        %p1084 = scmp.lt.s32.totalorder %s50, 1
        %s1085 = scalar_select %p1084, %s50, 1
        %s1086 = scalar_lea.vmem %s9, %s1085
        %p1087 = pneg %p275
        %p1088 = pneg %p272
        %s1089 = sand.u32 %s50, 1
        %s1090 = scalar_lea.sflag [#allocation10], %s1089
        %s1091 = sand.u32 %s288, 1
        %s1092 = smul.addr %s1091, 64
        %s1093 = scalar_lea.vmem [#allocation11], %s1092
        %p1094 = pneg %p301
        %p1095 = pneg %p298
        %p1096 = scmp.lt.s32.totalorder %s50, 1
        %s1097 = scalar_select %p1096, %s50, 1
        %s1098 = scalar_lea.vmem %s11, %s1097
        %p1099 = pneg %p327
        %p1100 = pneg %p324
        %s1101 = sand.u32 %s50, 1
        %s1102 = scalar_lea.sflag [#allocation13], %s1101
        %s1103 = sand.u32 %s340, 1
        %s1104 = smul.addr %s1103, 64
        %s1105 = scalar_lea.vmem [#allocation12], %s1104
        %p1106 = pneg %p353
        %p1107 = pneg %p350
        %p1108 = scmp.lt.s32.totalorder %s50, 1
        %s1109 = scalar_select %p1108, %s50, 1
        %s1110 = scalar_lea.vmem %s13, %s1109
        %p1111 = pneg %p379
        %p1112 = pneg %p376
        %s1113 = sand.u32 %s50, 1
        %s1114 = scalar_lea.sflag [#allocation13], %s1113
        %s1115 = sand.u32 %s392, 1
        %s1116 = smul.addr %s1115, 64
        %s1117 = scalar_lea.vmem [#allocation14], %s1116
        %p1118 = pneg %p405
        %p1119 = pneg %p402
        %p1120 = scmp.lt.s32.totalorder %s50, 1
        %s1121 = scalar_select %p1120, %s50, 1
        %s1122 = scalar_lea.vmem %s15, %s1121
        %p1123 = pneg %p431
        %p1124 = pneg %p428
        %p1125 = scmp.lt.s32.totalorder %s50, 1
        %s1126 = scalar_select %p1125, %s50, 1
        %s1127 = scalar_lea.vmem %s16, %s1126
        %p1128 = pneg %p457
        %p1129 = pneg %p454
        %p1130 = scmp.lt.s32.totalorder %s50, 1
        %s1131 = scalar_select %p1130, %s50, 1
        %s1132 = scalar_lea.vmem %s17, %s1131
        %p1133 = pneg %p483
        %p1134 = pneg %p480
        %s1135 = sand.u32 %s50, 1
        %s1136 = scalar_lea.sflag [#allocation16], %s1135
        %s1137 = sand.u32 %s496, 1
        %s1138 = smul.addr %s1137, 256
        %s1139 = scalar_lea.vmem [#allocation15], %s1138
        %p1140 = pneg %p509
        %p1141 = pneg %p506
        %p1142 = scmp.lt.s32.totalorder %s50, 1
        %s1143 = scalar_select %p1142, %s50, 1
        %s1144 = smul.addr %s1143, 4
        %s1145 = scalar_lea.vmem %s19, %s1144
        %p1146 = pneg %p535
        %p1147 = pneg %p532
        %s1148 = sand.u32 %s50, 1
        %s1149 = scalar_lea.sflag [#allocation16], %s1148
        %s1150 = sand.u32 %s548, 1
        %s1151 = smul.addr %s1150, 256
        %s1152 = scalar_lea.vmem [#allocation17], %s1151
        %p1153 = pneg %p561
        %p1154 = pneg %p558
        %p1155 = scmp.lt.s32.totalorder %s50, 1
        %s1156 = scalar_select %p1155, %s50, 1
        %s1157 = scalar_lea.vmem %s21, %s1156
        %p1158 = pneg %p587
        %p1159 = pneg %p584
        %p1160 = pneg %p608
        %p1161 = pneg %p605
        %p1162 = pneg %p629
        %p1163 = pneg %p626
        %p1164 = pneg %p650
        %p1165 = pneg %p647
        %p1166 = pneg %p671
        %p1167 = pneg %p668
        %p1168 = pneg %p692
        %p1169 = pneg %p689
        %p1170 = scmp.lt.s32.totalorder %s50, 1
        %s1171 = scalar_select %p1170, %s50, 1
        %s1172 = scalar_lea.vmem %s6, %s1171
        %p1173 = scmp.lt.s32.totalorder %s50, 1
        %s1174 = scalar_select %p1173, %s50, 1
        %s1175 = scalar_lea.vmem %s7, %s1174
        %p1176 = scmp.lt.s32.totalorder %s50, 1
        %s1177 = scalar_select %p1176, %s50, 1
        %s1178 = scalar_lea.vmem %s9, %s1177
        %p1179 = scmp.lt.s32.totalorder %s50, 1
        %s1180 = scalar_select %p1179, %s50, 1
        %s1181 = scalar_lea.vmem %s11, %s1180
        %p1182 = scmp.lt.s32.totalorder %s50, 1
        %s1183 = scalar_select %p1182, %s50, 1
        %s1184 = scalar_lea.vmem %s13, %s1183
        %p1185 = scmp.lt.s32.totalorder %s50, 1
        %s1186 = scalar_select %p1185, %s50, 1
        %s1187 = scalar_lea.vmem %s15, %s1186
        %p1188 = scmp.lt.s32.totalorder %s50, 1
        %s1189 = scalar_select %p1188, %s50, 1
        %s1190 = scalar_lea.vmem %s16, %s1189
        %p1191 = scmp.lt.s32.totalorder %s50, 1
        %s1192 = scalar_select %p1191, %s50, 1
        %s1193 = scalar_lea.vmem %s17, %s1192
        %p1194 = scmp.lt.s32.totalorder %s50, 1
        %s1195 = scalar_select %p1194, %s50, 1
        %s1196 = smul.addr %s1195, 4
        %s1197 = scalar_lea.vmem %s19, %s1196
        %p1198 = scmp.lt.s32.totalorder %s50, 1
        %s1199 = scalar_select %p1198, %s50, 1
        %s1200 = scalar_lea.vmem %s21, %s1199
        %p1202 = scmp.eq.s32.totalorder %s50, 0
        // Predicated region
        $region169: #{tpu_custom_call.1} parent=123 // pred_check
          %p1203 = pneg %p1202
        $region170: #{tpu_custom_call.1} parent=123 // pred_check_branch
          %1205 = sbr.rel (%p1203) target = $region172
        $region171: #{tpu_custom_call.1} parent=123 // pred_region
          %v1206 = vld [vmem:[%s0] sm:$0xff]
          %v1207 = vld [vmem:[%s0 + $0x8] sm:$0xff]
          %v1208 = vld [vmem:[%s0 + $0x10] sm:$0xff]
          %v1209 = vld [vmem:[%s0 + $0x18] sm:$0xff]
          %1210 = vst [vmem:[#allocation2] sm:$0xff] %v1206
          %1211 = vst [vmem:[#allocation2 + $0x8] sm:$0xff] %v1207
          %1212 = vst [vmem:[#allocation2 + $0x10] sm:$0xff] %v1208
          %1213 = vst [vmem:[#allocation2 + $0x18] sm:$0xff] %v1209
        $region172: #{tpu_custom_call.1} parent=123 // pred_fallthru
          _
        %v1214 = vld [vmem:[#allocation3] sm:$0xff]
        %v1215 = vld [vmem:[#allocation3 + $0x8] sm:$0xff]
        %v1216 = vld [vmem:[#allocation6] sm:$0xff]
        %v1217 = vld [vmem:[#allocation6 + $0x8] sm:$0xff]
        %v1218 = vld [vmem:[#allocation8] sm:$0xff]
        %v1219 = vld [vmem:[#allocation8 + $0x8] sm:$0xff]
        %v1220 = vld [vmem:[%s4] sm:$0xff]
        %v1221 = vld [vmem:[%s4 + $0x8] sm:$0xff]
        %v1222 = vld [vmem:[%s4 + $0x10] sm:$0xff]
        %v1223 = vld [vmem:[%s4 + $0x18] sm:$0xff]
        %v1224 = vld [vmem:[%s5] sm:$0x1]
        %1226 = vset.pattern.permute.xlu0 0
        %1227 = vperm.xlu0 %1226, %v1220
        %v1228 = vpop.permute.xlu0 %1227
        %1231 = vset.pattern.permute.xlu0 0
        %1232 = vperm.xlu0 %1231, %v1221
        %v1233 = vpop.permute.xlu0 %1232
        %1236 = vset.pattern.permute.xlu0 0
        %1237 = vperm.xlu0 %1236, %v1222
        %v1238 = vpop.permute.xlu0 %1237
        %1241 = vset.pattern.permute.xlu0 0
        %1242 = vperm.xlu0 %1241, %v1223
        %v1243 = vpop.permute.xlu0 %1242
        %v1246 = vlaneseq
        %v1247 = vshrl.u32 %v1246, 7
        %v1248 = vsub.s32 0, %v1247
        %v1249 = vrot.slane %v1224, %v1248
        %vm1251 = vcmp.eq.f32.partialorder %v1228, %v1249
        %vm1252 = vcmp.eq.f32.partialorder %v1233, %v1249
        %vm1253 = vcmp.eq.f32.partialorder %v1238, %v1249
        %vm1254 = vcmp.eq.f32.partialorder %v1243, %v1249
        %v1255 = vsel %vm1251, 0.0, -1e+09
        %v1256 = vsel %vm1252, 0.0, -1e+09
        %v1257 = vsel %vm1253, 0.0, -1e+09
        %v1258 = vsel %vm1254, 0.0, -1e+09
        %v1259 = vld [vmem:[#allocation2] sm:$0xff]
        %v1260 = vld [vmem:[#allocation2 + $0x8] sm:$0xff]
        %v1261 = vld [vmem:[#allocation2 + $0x10] sm:$0xff]
        %v1262 = vld [vmem:[#allocation2 + $0x18] sm:$0xff]
        %v1263 = vld [vmem:[%s1172] sm:$0x1]
        %v1264 = vld [vmem:[%s1175] sm:$0x1]
        %v1265 = vld [vmem:[%s997] sm:$0xf]
        %v1266 = vld [vmem:[%s997 + $0x4] sm:$0xf]
        %v1267 = vld [vmem:[%s997 + $0x8] sm:$0xf]
        %v1268 = vld [vmem:[%s997 + $0xc] sm:$0xf]
        %v1269 = vld [vmem:[%s997 + $0x10] sm:$0xf]
        %v1270 = vld [vmem:[%s997 + $0x14] sm:$0xf]
        %v1271 = vld [vmem:[%s997 + $0x18] sm:$0xf]
        %v1272 = vld [vmem:[%s997 + $0x1c] sm:$0xf]
        %v1273 = vld [vmem:[%s997 + $0x20] sm:$0xf]
        %v1274 = vld [vmem:[%s997 + $0x24] sm:$0xf]
        %v1275 = vld [vmem:[%s997 + $0x28] sm:$0xf]
        %v1276 = vld [vmem:[%s997 + $0x2c] sm:$0xf]
        %v1277 = vld [vmem:[%s997 + $0x30] sm:$0xf]
        %v1278 = vld [vmem:[%s997 + $0x34] sm:$0xf]
        %v1279 = vld [vmem:[%s997 + $0x38] sm:$0xf]
        %v1280 = vld [vmem:[%s997 + $0x3c] sm:$0xf]
        %v1281 = vld [vmem:[%s1178] sm:$0x1]
        %v1282 = vld [vmem:[%s1006] sm:$0xf]
        %v1283 = vld [vmem:[%s1006 + $0x4] sm:$0xf]
        %v1284 = vld [vmem:[%s1006 + $0x8] sm:$0xf]
        %v1285 = vld [vmem:[%s1006 + $0xc] sm:$0xf]
        %v1286 = vld [vmem:[%s1006 + $0x10] sm:$0xf]
        %v1287 = vld [vmem:[%s1006 + $0x14] sm:$0xf]
        %v1288 = vld [vmem:[%s1006 + $0x18] sm:$0xf]
        %v1289 = vld [vmem:[%s1006 + $0x1c] sm:$0xf]
        %v1290 = vld [vmem:[%s1006 + $0x20] sm:$0xf]
        %v1291 = vld [vmem:[%s1006 + $0x24] sm:$0xf]
        %v1292 = vld [vmem:[%s1006 + $0x28] sm:$0xf]
        %v1293 = vld [vmem:[%s1006 + $0x2c] sm:$0xf]
        %v1294 = vld [vmem:[%s1006 + $0x30] sm:$0xf]
        %v1295 = vld [vmem:[%s1006 + $0x34] sm:$0xf]
        %v1296 = vld [vmem:[%s1006 + $0x38] sm:$0xf]
        %v1297 = vld [vmem:[%s1006 + $0x3c] sm:$0xf]
        %v1298 = vld [vmem:[%s1181] sm:$0x1]
        %v1299 = vld [vmem:[%s1015] sm:$0xf]
        %v1300 = vld [vmem:[%s1015 + $0x4] sm:$0xf]
        %v1301 = vld [vmem:[%s1015 + $0x8] sm:$0xf]
        %v1302 = vld [vmem:[%s1015 + $0xc] sm:$0xf]
        %v1303 = vld [vmem:[%s1015 + $0x10] sm:$0xf]
        %v1304 = vld [vmem:[%s1015 + $0x14] sm:$0xf]
        %v1305 = vld [vmem:[%s1015 + $0x18] sm:$0xf]
        %v1306 = vld [vmem:[%s1015 + $0x1c] sm:$0xf]
        %v1307 = vld [vmem:[%s1015 + $0x20] sm:$0xf]
        %v1308 = vld [vmem:[%s1015 + $0x24] sm:$0xf]
        %v1309 = vld [vmem:[%s1015 + $0x28] sm:$0xf]
        %v1310 = vld [vmem:[%s1015 + $0x2c] sm:$0xf]
        %v1311 = vld [vmem:[%s1015 + $0x30] sm:$0xf]
        %v1312 = vld [vmem:[%s1015 + $0x34] sm:$0xf]
        %v1313 = vld [vmem:[%s1015 + $0x38] sm:$0xf]
        %v1314 = vld [vmem:[%s1015 + $0x3c] sm:$0xf]
        %v1315 = vld [vmem:[%s1184] sm:$0x1]
        %v1316 = vld [vmem:[%s1024] sm:$0xf]
        %v1317 = vld [vmem:[%s1024 + $0x4] sm:$0xf]
        %v1318 = vld [vmem:[%s1024 + $0x8] sm:$0xf]
        %v1319 = vld [vmem:[%s1024 + $0xc] sm:$0xf]
        %v1320 = vld [vmem:[%s1024 + $0x10] sm:$0xf]
        %v1321 = vld [vmem:[%s1024 + $0x14] sm:$0xf]
        %v1322 = vld [vmem:[%s1024 + $0x18] sm:$0xf]
        %v1323 = vld [vmem:[%s1024 + $0x1c] sm:$0xf]
        %v1324 = vld [vmem:[%s1024 + $0x20] sm:$0xf]
        %v1325 = vld [vmem:[%s1024 + $0x24] sm:$0xf]
        %v1326 = vld [vmem:[%s1024 + $0x28] sm:$0xf]
        %v1327 = vld [vmem:[%s1024 + $0x2c] sm:$0xf]
        %v1328 = vld [vmem:[%s1024 + $0x30] sm:$0xf]
        %v1329 = vld [vmem:[%s1024 + $0x34] sm:$0xf]
        %v1330 = vld [vmem:[%s1024 + $0x38] sm:$0xf]
        %v1331 = vld [vmem:[%s1024 + $0x3c] sm:$0xf]
        %v1332 = vld [vmem:[%s1187] sm:$0x1]
        %v1333 = vld [vmem:[%s1190] sm:$0x1]
        %v1334 = vld [vmem:[%s1193] sm:$0x1]
        %v1335 = vld [vmem:[%s1033] sm:$0xff]
        %v1336 = vld [vmem:[%s1033 + $0x8] sm:$0xff]
        %v1337 = vld [vmem:[%s1033 + $0x10] sm:$0xff]
        %v1338 = vld [vmem:[%s1033 + $0x18] sm:$0xff]
        %v1339 = vld [vmem:[%s1033 + $0x20] sm:$0xff]
        %v1340 = vld [vmem:[%s1033 + $0x28] sm:$0xff]
        %v1341 = vld [vmem:[%s1033 + $0x30] sm:$0xff]
        %v1342 = vld [vmem:[%s1033 + $0x38] sm:$0xff]
        %v1343 = vld [vmem:[%s1033 + $0x40] sm:$0xff]
        %v1344 = vld [vmem:[%s1033 + $0x48] sm:$0xff]
        %v1345 = vld [vmem:[%s1033 + $0x50] sm:$0xff]
        %v1346 = vld [vmem:[%s1033 + $0x58] sm:$0xff]
        %v1347 = vld [vmem:[%s1033 + $0x60] sm:$0xff]
        %v1348 = vld [vmem:[%s1033 + $0x68] sm:$0xff]
        %v1349 = vld [vmem:[%s1033 + $0x70] sm:$0xff]
        %v1350 = vld [vmem:[%s1033 + $0x78] sm:$0xff]
        %v1351 = vld [vmem:[%s1033 + $0x80] sm:$0xff]
        %v1352 = vld [vmem:[%s1033 + $0x88] sm:$0xff]
        %v1353 = vld [vmem:[%s1033 + $0x90] sm:$0xff]
        %v1354 = vld [vmem:[%s1033 + $0x98] sm:$0xff]
        %v1355 = vld [vmem:[%s1033 + $0xa0] sm:$0xff]
        %v1356 = vld [vmem:[%s1033 + $0xa8] sm:$0xff]
        %v1357 = vld [vmem:[%s1033 + $0xb0] sm:$0xff]
        %v1358 = vld [vmem:[%s1033 + $0xb8] sm:$0xff]
        %v1359 = vld [vmem:[%s1033 + $0xc0] sm:$0xff]
        %v1360 = vld [vmem:[%s1033 + $0xc8] sm:$0xff]
        %v1361 = vld [vmem:[%s1033 + $0xd0] sm:$0xff]
        %v1362 = vld [vmem:[%s1033 + $0xd8] sm:$0xff]
        %v1363 = vld [vmem:[%s1033 + $0xe0] sm:$0xff]
        %v1364 = vld [vmem:[%s1033 + $0xe8] sm:$0xff]
        %v1365 = vld [vmem:[%s1033 + $0xf0] sm:$0xff]
        %v1366 = vld [vmem:[%s1033 + $0xf8] sm:$0xff]
        %v1367 = vld [vmem:[%s1197] sm:$0xf]
        %v1368 = vld [vmem:[%s1042] sm:$0xf]
        %v1369 = vld [vmem:[%s1042 + $0x4] sm:$0xf]
        %v1370 = vld [vmem:[%s1042 + $0x8] sm:$0xf]
        %v1371 = vld [vmem:[%s1042 + $0xc] sm:$0xf]
        %v1372 = vld [vmem:[%s1042 + $0x10] sm:$0xf]
        %v1373 = vld [vmem:[%s1042 + $0x14] sm:$0xf]
        %v1374 = vld [vmem:[%s1042 + $0x18] sm:$0xf]
        %v1375 = vld [vmem:[%s1042 + $0x1c] sm:$0xf]
        %v1376 = vld [vmem:[%s1042 + $0x20] sm:$0xf]
        %v1377 = vld [vmem:[%s1042 + $0x24] sm:$0xf]
        %v1378 = vld [vmem:[%s1042 + $0x28] sm:$0xf]
        %v1379 = vld [vmem:[%s1042 + $0x2c] sm:$0xf]
        %v1380 = vld [vmem:[%s1042 + $0x30] sm:$0xf]
        %v1381 = vld [vmem:[%s1042 + $0x34] sm:$0xf]
        %v1382 = vld [vmem:[%s1042 + $0x38] sm:$0xf]
        %v1383 = vld [vmem:[%s1042 + $0x3c] sm:$0xf]
        %v1384 = vld [vmem:[%s1042 + $0x40] sm:$0xf]
        %v1385 = vld [vmem:[%s1042 + $0x44] sm:$0xf]
        %v1386 = vld [vmem:[%s1042 + $0x48] sm:$0xf]
        %v1387 = vld [vmem:[%s1042 + $0x4c] sm:$0xf]
        %v1388 = vld [vmem:[%s1042 + $0x50] sm:$0xf]
        %v1389 = vld [vmem:[%s1042 + $0x54] sm:$0xf]
        %v1390 = vld [vmem:[%s1042 + $0x58] sm:$0xf]
        %v1391 = vld [vmem:[%s1042 + $0x5c] sm:$0xf]
        %v1392 = vld [vmem:[%s1042 + $0x60] sm:$0xf]
        %v1393 = vld [vmem:[%s1042 + $0x64] sm:$0xf]
        %v1394 = vld [vmem:[%s1042 + $0x68] sm:$0xf]
        %v1395 = vld [vmem:[%s1042 + $0x6c] sm:$0xf]
        %v1396 = vld [vmem:[%s1042 + $0x70] sm:$0xf]
        %v1397 = vld [vmem:[%s1042 + $0x74] sm:$0xf]
        %v1398 = vld [vmem:[%s1042 + $0x78] sm:$0xf]
        %v1399 = vld [vmem:[%s1042 + $0x7c] sm:$0xf]
        %v1400 = vld [vmem:[%s1042 + $0x80] sm:$0xf]
        %v1401 = vld [vmem:[%s1042 + $0x84] sm:$0xf]
        %v1402 = vld [vmem:[%s1042 + $0x88] sm:$0xf]
        %v1403 = vld [vmem:[%s1042 + $0x8c] sm:$0xf]
        %v1404 = vld [vmem:[%s1042 + $0x90] sm:$0xf]
        %v1405 = vld [vmem:[%s1042 + $0x94] sm:$0xf]
        %v1406 = vld [vmem:[%s1042 + $0x98] sm:$0xf]
        %v1407 = vld [vmem:[%s1042 + $0x9c] sm:$0xf]
        %v1408 = vld [vmem:[%s1042 + $0xa0] sm:$0xf]
        %v1409 = vld [vmem:[%s1042 + $0xa4] sm:$0xf]
        %v1410 = vld [vmem:[%s1042 + $0xa8] sm:$0xf]
        %v1411 = vld [vmem:[%s1042 + $0xac] sm:$0xf]
        %v1412 = vld [vmem:[%s1042 + $0xb0] sm:$0xf]
        %v1413 = vld [vmem:[%s1042 + $0xb4] sm:$0xf]
        %v1414 = vld [vmem:[%s1042 + $0xb8] sm:$0xf]
        %v1415 = vld [vmem:[%s1042 + $0xbc] sm:$0xf]
        %v1416 = vld [vmem:[%s1042 + $0xc0] sm:$0xf]
        %v1417 = vld [vmem:[%s1042 + $0xc4] sm:$0xf]
        %v1418 = vld [vmem:[%s1042 + $0xc8] sm:$0xf]
        %v1419 = vld [vmem:[%s1042 + $0xcc] sm:$0xf]
        %v1420 = vld [vmem:[%s1042 + $0xd0] sm:$0xf]
        %v1421 = vld [vmem:[%s1042 + $0xd4] sm:$0xf]
        %v1422 = vld [vmem:[%s1042 + $0xd8] sm:$0xf]
        %v1423 = vld [vmem:[%s1042 + $0xdc] sm:$0xf]
        %v1424 = vld [vmem:[%s1042 + $0xe0] sm:$0xf]
        %v1425 = vld [vmem:[%s1042 + $0xe4] sm:$0xf]
        %v1426 = vld [vmem:[%s1042 + $0xe8] sm:$0xf]
        %v1427 = vld [vmem:[%s1042 + $0xec] sm:$0xf]
        %v1428 = vld [vmem:[%s1042 + $0xf0] sm:$0xf]
        %v1429 = vld [vmem:[%s1042 + $0xf4] sm:$0xf]
        %v1430 = vld [vmem:[%s1042 + $0xf8] sm:$0xf]
        %v1431 = vld [vmem:[%s1042 + $0xfc] sm:$0xf]
        %v1432 = vld [vmem:[%s1200] sm:$0x1]
        %1433 = vadd.xlane.f32.xlu0 %v1259
        %v1434 = vpop.xlane.xlu0 %1433
        %1435 = vadd.xlane.f32.xlu0 %v1260
        %v1436 = vpop.xlane.xlu0 %1435
        %1437 = vadd.xlane.f32.xlu0 %v1261
        %v1438 = vpop.xlane.xlu0 %1437
        %1439 = vadd.xlane.f32.xlu0 %v1262
        %v1440 = vpop.xlane.xlu0 %1439
        %v1441 = vrcp.pop 128.0
        %v1442 = vmul.f32 %v1434, %v1441
        %v1443 = vmul.f32 %v1436, %v1441
        %v1444 = vmul.f32 %v1438, %v1441
        %v1445 = vmul.f32 %v1440, %v1441
        %v1446 = vsub.f32 %v1259, %v1442
        %v1447 = vsub.f32 %v1260, %v1443
        %v1448 = vsub.f32 %v1261, %v1444
        %v1449 = vsub.f32 %v1262, %v1445
        %v1450 = vmul.f32 %v1446, %v1446
        %v1451 = vmul.f32 %v1447, %v1447
        %v1452 = vmul.f32 %v1448, %v1448
        %v1453 = vmul.f32 %v1449, %v1449
        %1454 = vadd.xlane.f32.xlu0 %v1450
        %v1455 = vpop.xlane.xlu0 %1454
        %1456 = vadd.xlane.f32.xlu0 %v1451
        %v1457 = vpop.xlane.xlu0 %1456
        %1458 = vadd.xlane.f32.xlu0 %v1452
        %v1459 = vpop.xlane.xlu0 %1458
        %1460 = vadd.xlane.f32.xlu0 %v1453
        %v1461 = vpop.xlane.xlu0 %1460
        %v1462 = vmul.f32 %v1455, %v1441
        %v1463 = vmul.f32 %v1457, %v1441
        %v1464 = vmul.f32 %v1459, %v1441
        %v1465 = vmul.f32 %v1461, %v1441
        %v1466 = vadd.f32 %v1462, 1e-05
        %v1467 = vadd.f32 %v1463, 1e-05
        %v1468 = vadd.f32 %v1464, 1e-05
        %v1469 = vadd.f32 %v1465, 1e-05
        %v1470 = vrsqrt.pop %v1466
        %v1471 = vrsqrt.pop %v1467
        %v1472 = vrsqrt.pop %v1468
        %v1473 = vrsqrt.pop %v1469
        %v1474 = vmul.f32 %v1446, %v1470
        %v1475 = vmul.f32 %v1447, %v1471
        %v1476 = vmul.f32 %v1448, %v1472
        %v1477 = vmul.f32 %v1449, %v1473
        %v1479 = vlaneseq
        %v1480 = vshrl.u32 %v1479, 7
        %v1481 = vsub.s32 0, %v1480
        %v1482 = vrot.slane %v1263, %v1481
        %v1484 = vmul.f32 %v1474, %v1482
        %v1485 = vmul.f32 %v1475, %v1482
        %v1486 = vmul.f32 %v1476, %v1482
        %v1487 = vmul.f32 %v1477, %v1482
        %v1489 = vlaneseq
        %v1490 = vshrl.u32 %v1489, 7
        %v1491 = vsub.s32 0, %v1490
        %v1492 = vrot.slane %v1264, %v1491
        %v1494 = vadd.f32 %v1484, %v1492
        %v1495 = vadd.f32 %v1485, %v1492
        %v1496 = vadd.f32 %v1486, %v1492
        %v1497 = vadd.f32 %v1487, %v1492
        %v1498 = vpack.c.bf16 %v1495, %v1494
        %v1499 = vpack.c.bf16 %v1497, %v1496
        %v1501 = vlaneseq
        %v1502 = vshrl.u32 %v1501, 7
        %v1503 = vsub.s32 0, %v1502
        %v1504 = vrot.slane %v1281, %v1503
        %v1522 = vunpack.c.l.b16 %v1265
        %v1523 = vunpack.c.l.b16 %v1266
        %v1524 = vunpack.c.l.b16 %v1267
        %v1525 = vunpack.c.l.b16 %v1268
        %v1526 = vunpack.c.l.b16 %v1269
        %v1527 = vunpack.c.l.b16 %v1270
        %v1528 = vunpack.c.l.b16 %v1271
        %v1529 = vunpack.c.l.b16 %v1272
        %v1530 = vunpack.c.l.b16 %v1273
        %v1531 = vunpack.c.l.b16 %v1274
        %v1532 = vunpack.c.l.b16 %v1275
        %v1533 = vunpack.c.l.b16 %v1276
        %v1534 = vunpack.c.l.b16 %v1277
        %v1535 = vunpack.c.l.b16 %v1278
        %v1536 = vunpack.c.l.b16 %v1279
        %v1537 = vunpack.c.l.b16 %v1280
        %v1538 = vpack.c.b16 %v1523, %v1522
        %v1539 = vpack.c.b16 %v1525, %v1524
        %v1540 = vpack.c.b16 %v1527, %v1526
        %v1541 = vpack.c.b16 %v1529, %v1528
        %v1542 = vpack.c.b16 %v1531, %v1530
        %v1543 = vpack.c.b16 %v1533, %v1532
        %v1544 = vpack.c.b16 %v1535, %v1534
        %v1545 = vpack.c.b16 %v1537, %v1536
        %1554 = vmatprep.subr.bf16.mxu0 0
        %1555 = vmatpush1.bf16.msra.mxu0 %v1538
        %1556 = vmatprep.subr.bf16.mxu0 0
        %1557 = vmatpush1.bf16.msra.mxu0 %v1539
        %1558 = vmatprep.subr.bf16.mxu0 0
        %1559 = vmatpush1.bf16.msra.mxu0 %v1540
        %1560 = vmatprep.subr.bf16.mxu0 0
        %1561 = vmatpush1.bf16.msra.mxu0 %v1541
        %1562 = vmatprep.subr.bf16.mxu0 0
        %1563 = vmatpush1.bf16.msra.mxu0 %v1542
        %1564 = vmatprep.subr.bf16.mxu0 0
        %1565 = vmatpush1.bf16.msra.mxu0 %v1543
        %1566 = vmatprep.subr.bf16.mxu0 0
        %1567 = vmatpush1.bf16.msra.mxu0 %v1544
        %1568 = vmatprep.subr.bf16.mxu0 0
        %1569 = vmatpush1.bf16.msra.mxu0 %v1545
        %1570 = vmatprep.subr.bf16.mxu0 0
        %1571 = vmatpush1.bf16.msra.mxu0 0
        %1572 = vmatprep.subr.bf16.mxu0 0
        %1573 = vmatpush1.bf16.msra.mxu0 0
        %1574 = vmatprep.subr.bf16.mxu0 0
        %1575 = vmatpush1.bf16.msra.mxu0 0
        %1576 = vmatprep.subr.bf16.mxu0 0
        %1577 = vmatpush1.bf16.msra.mxu0 0
        %1578 = vmatprep.subr.bf16.mxu0 0
        %1579 = vmatpush1.bf16.msra.mxu0 0
        %1580 = vmatprep.subr.bf16.mxu0 0
        %1581 = vmatpush1.bf16.msra.mxu0 0
        %1582 = vmatprep.subr.bf16.mxu0 0
        %1583 = vmatpush1.bf16.msra.mxu0 0
        %1584 = vmatprep.subr.bf16.mxu0 0
        %1585 = vmatpush1.bf16.msra.mxu0 0
        %1586 = vmatprep.mubr.bf16.mxu0 0
        %1587 = vmatmul.mubr.bf16.gmra.mrb[0].mxu0 %v1498
        %v1588 = vpop.f32.mrb[0].mxu0
        %v1589 = vadd.f32 %v1504, %v1588
        %v1590 = vpop.f32.mrb[0].mxu0
        %v1591 = vpop.f32.mrb[0].mxu0
        %v1592 = vadd.f32 %v1504, %v1591
        %v1593 = vpop.f32.mrb[0].mxu0
        %1594 = vmatprep.mubr.bf16.mxu0 0
        %1595 = vmatmul.mubr.bf16.gmra.mrb[0].mxu0 %v1499
        %v1596 = vpop.f32.mrb[0].mxu0
        %v1597 = vadd.f32 %v1504, %v1596
        %v1598 = vpop.f32.mrb[0].mxu0
        %v1599 = vpop.f32.mrb[0].mxu0
        %v1600 = vadd.f32 %v1504, %v1599
        %v1601 = vpop.f32.mrb[0].mxu0
        %1602 = vdwg.mxu0
        %v1603 = vmul.f32 %v1589, 0.17677669
        %v1604 = vmul.f32 %v1592, 0.17677669
        %v1605 = vmul.f32 %v1597, 0.17677669
        %v1606 = vmul.f32 %v1600, 0.17677669
        %v1608 = vlaneseq
        %v1609 = vshrl.u32 %v1608, 7
        %v1610 = vsub.s32 0, %v1609
        %v1611 = vrot.slane %v1298, %v1610
        %v1629 = vunpack.c.l.b16 %v1282
        %v1630 = vunpack.c.l.b16 %v1283
        %v1631 = vunpack.c.l.b16 %v1284
        %v1632 = vunpack.c.l.b16 %v1285
        %v1633 = vunpack.c.l.b16 %v1286
        %v1634 = vunpack.c.l.b16 %v1287
        %v1635 = vunpack.c.l.b16 %v1288
        %v1636 = vunpack.c.l.b16 %v1289
        %v1637 = vunpack.c.l.b16 %v1290
        %v1638 = vunpack.c.l.b16 %v1291
        %v1639 = vunpack.c.l.b16 %v1292
        %v1640 = vunpack.c.l.b16 %v1293
        %v1641 = vunpack.c.l.b16 %v1294
        %v1642 = vunpack.c.l.b16 %v1295
        %v1643 = vunpack.c.l.b16 %v1296
        %v1644 = vunpack.c.l.b16 %v1297
        %v1645 = vpack.c.b16 %v1630, %v1629
        %v1646 = vpack.c.b16 %v1632, %v1631
        %v1647 = vpack.c.b16 %v1634, %v1633
        %v1648 = vpack.c.b16 %v1636, %v1635
        %v1649 = vpack.c.b16 %v1638, %v1637
        %v1650 = vpack.c.b16 %v1640, %v1639
        %v1651 = vpack.c.b16 %v1642, %v1641
        %v1652 = vpack.c.b16 %v1644, %v1643
        %1661 = vmatprep.subr.bf16.mxu0 0
        %1662 = vmatpush1.bf16.msra.mxu0 %v1645
        %1663 = vmatprep.subr.bf16.mxu0 0
        %1664 = vmatpush1.bf16.msra.mxu0 %v1646
        %1665 = vmatprep.subr.bf16.mxu0 0
        %1666 = vmatpush1.bf16.msra.mxu0 %v1647
        %1667 = vmatprep.subr.bf16.mxu0 0
        %1668 = vmatpush1.bf16.msra.mxu0 %v1648
        %1669 = vmatprep.subr.bf16.mxu0 0
        %1670 = vmatpush1.bf16.msra.mxu0 %v1649
        %1671 = vmatprep.subr.bf16.mxu0 0
        %1672 = vmatpush1.bf16.msra.mxu0 %v1650
        %1673 = vmatprep.subr.bf16.mxu0 0
        %1674 = vmatpush1.bf16.msra.mxu0 %v1651
        %1675 = vmatprep.subr.bf16.mxu0 0
        %1676 = vmatpush1.bf16.msra.mxu0 %v1652
        %1677 = vmatprep.subr.bf16.mxu0 0
        %1678 = vmatpush1.bf16.msra.mxu0 0
        %1679 = vmatprep.subr.bf16.mxu0 0
        %1680 = vmatpush1.bf16.msra.mxu0 0
        %1681 = vmatprep.subr.bf16.mxu0 0
        %1682 = vmatpush1.bf16.msra.mxu0 0
        %1683 = vmatprep.subr.bf16.mxu0 0
        %1684 = vmatpush1.bf16.msra.mxu0 0
        %1685 = vmatprep.subr.bf16.mxu0 0
        %1686 = vmatpush1.bf16.msra.mxu0 0
        %1687 = vmatprep.subr.bf16.mxu0 0
        %1688 = vmatpush1.bf16.msra.mxu0 0
        %1689 = vmatprep.subr.bf16.mxu0 0
        %1690 = vmatpush1.bf16.msra.mxu0 0
        %1691 = vmatprep.subr.bf16.mxu0 0
        %1692 = vmatpush1.bf16.msra.mxu0 0
        %1693 = vmatprep.mubr.bf16.mxu0 0
        %1694 = vmatmul.mubr.bf16.gmra.mrb[0].mxu0 %v1498
        %v1695 = vpop.f32.mrb[0].mxu0
        %v1696 = vadd.f32 %v1611, %v1695
        %v1697 = vpop.f32.mrb[0].mxu0
        %v1698 = vpop.f32.mrb[0].mxu0
        %v1699 = vadd.f32 %v1611, %v1698
        %v1700 = vpop.f32.mrb[0].mxu0
        %1701 = vmatprep.mubr.bf16.mxu0 0
        %1702 = vmatmul.mubr.bf16.gmra.mrb[0].mxu0 %v1499
        %v1703 = vpop.f32.mrb[0].mxu0
        %v1704 = vadd.f32 %v1611, %v1703
        %v1705 = vpop.f32.mrb[0].mxu0
        %v1706 = vpop.f32.mrb[0].mxu0
        %v1707 = vadd.f32 %v1611, %v1706
        %v1708 = vpop.f32.mrb[0].mxu0
        %1709 = vdwg.mxu0
        %v1711 = vlaneseq
        %v1712 = vshrl.u32 %v1711, 7
        %v1713 = vsub.s32 0, %v1712
        %v1714 = vrot.slane %v1315, %v1713
        %v1732 = vunpack.c.l.b16 %v1299
        %v1733 = vunpack.c.l.b16 %v1300
        %v1734 = vunpack.c.l.b16 %v1301
        %v1735 = vunpack.c.l.b16 %v1302
        %v1736 = vunpack.c.l.b16 %v1303
        %v1737 = vunpack.c.l.b16 %v1304
        %v1738 = vunpack.c.l.b16 %v1305
        %v1739 = vunpack.c.l.b16 %v1306
        %v1740 = vunpack.c.l.b16 %v1307
        %v1741 = vunpack.c.l.b16 %v1308
        %v1742 = vunpack.c.l.b16 %v1309
        %v1743 = vunpack.c.l.b16 %v1310
        %v1744 = vunpack.c.l.b16 %v1311
        %v1745 = vunpack.c.l.b16 %v1312
        %v1746 = vunpack.c.l.b16 %v1313
        %v1747 = vunpack.c.l.b16 %v1314
        %v1748 = vpack.c.b16 %v1733, %v1732
        %v1749 = vpack.c.b16 %v1735, %v1734
        %v1750 = vpack.c.b16 %v1737, %v1736
        %v1751 = vpack.c.b16 %v1739, %v1738
        %v1752 = vpack.c.b16 %v1741, %v1740
        %v1753 = vpack.c.b16 %v1743, %v1742
        %v1754 = vpack.c.b16 %v1745, %v1744
        %v1755 = vpack.c.b16 %v1747, %v1746
        %1764 = vmatprep.subr.bf16.mxu0 0
        %1765 = vmatpush1.bf16.msra.mxu0 %v1748
        %1766 = vmatprep.subr.bf16.mxu0 0
        %1767 = vmatpush1.bf16.msra.mxu0 %v1749
        %1768 = vmatprep.subr.bf16.mxu0 0
        %1769 = vmatpush1.bf16.msra.mxu0 %v1750
        %1770 = vmatprep.subr.bf16.mxu0 0
        %1771 = vmatpush1.bf16.msra.mxu0 %v1751
        %1772 = vmatprep.subr.bf16.mxu0 0
        %1773 = vmatpush1.bf16.msra.mxu0 %v1752
        %1774 = vmatprep.subr.bf16.mxu0 0
        %1775 = vmatpush1.bf16.msra.mxu0 %v1753
        %1776 = vmatprep.subr.bf16.mxu0 0
        %1777 = vmatpush1.bf16.msra.mxu0 %v1754
        %1778 = vmatprep.subr.bf16.mxu0 0
        %1779 = vmatpush1.bf16.msra.mxu0 %v1755
        %1780 = vmatprep.subr.bf16.mxu0 0
        %1781 = vmatpush1.bf16.msra.mxu0 0
        %1782 = vmatprep.subr.bf16.mxu0 0
        %1783 = vmatpush1.bf16.msra.mxu0 0
        %1784 = vmatprep.subr.bf16.mxu0 0
        %1785 = vmatpush1.bf16.msra.mxu0 0
        %1786 = vmatprep.subr.bf16.mxu0 0
        %1787 = vmatpush1.bf16.msra.mxu0 0
        %1788 = vmatprep.subr.bf16.mxu0 0
        %1789 = vmatpush1.bf16.msra.mxu0 0
        %1790 = vmatprep.subr.bf16.mxu0 0
        %1791 = vmatpush1.bf16.msra.mxu0 0
        %1792 = vmatprep.subr.bf16.mxu0 0
        %1793 = vmatpush1.bf16.msra.mxu0 0
        %1794 = vmatprep.subr.bf16.mxu0 0
        %1795 = vmatpush1.bf16.msra.mxu0 0
        %1796 = vmatprep.mubr.bf16.mxu0 0
        %1797 = vmatmul.mubr.bf16.gmra.mrb[0].mxu0 %v1498
        %v1798 = vpop.f32.mrb[0].mxu0
        %v1799 = vadd.f32 %v1714, %v1798
        %v1800 = vpop.f32.mrb[0].mxu0
        %v1801 = vpop.f32.mrb[0].mxu0
        %v1802 = vadd.f32 %v1714, %v1801
        %v1803 = vpop.f32.mrb[0].mxu0
        %1804 = vmatprep.mubr.bf16.mxu0 0
        %1805 = vmatmul.mubr.bf16.gmra.mrb[0].mxu0 %v1499
        %v1806 = vpop.f32.mrb[0].mxu0
        %v1807 = vadd.f32 %v1714, %v1806
        %v1808 = vpop.f32.mrb[0].mxu0
        %v1809 = vpop.f32.mrb[0].mxu0
        %v1810 = vadd.f32 %v1714, %v1809
        %v1811 = vpop.f32.mrb[0].mxu0
        %1812 = vdwg.mxu0
        %v1813 = vmul.f32 %v1603, %v1214
        %v1814 = vmul.f32 %v1604, %v1215
        %v1815 = vmul.f32 %v1605, %v1214
        %v1816 = vmul.f32 %v1606, %v1215
        %1817 = vrot.lane.b32.xlu0 %v1603, 112
        %v1818 = vpop.permute.xlu0 %1817
        %1819 = vrot.lane.b32.xlu0 %v1604, 112
        %v1820 = vpop.permute.xlu0 %1819
        %1821 = vrot.lane.b32.xlu0 %v1605, 112
        %v1822 = vpop.permute.xlu0 %1821
        %1823 = vrot.lane.b32.xlu0 %v1606, 112
        %v1824 = vpop.permute.xlu0 %1823
        %v1825 = vmul.f32 %v1818, %v1216
        %v1826 = vmul.f32 %v1820, %v1217
        %v1827 = vmul.f32 %v1822, %v1216
        %v1828 = vmul.f32 %v1824, %v1217
        %v1829 = vadd.f32 %v1813, %v1825
        %v1830 = vadd.f32 %v1814, %v1826
        %v1831 = vadd.f32 %v1815, %v1827
        %v1832 = vadd.f32 %v1816, %v1828
        %1833 = vrot.lane.b32.xlu0 %v1603, 16
        %v1834 = vpop.permute.xlu0 %1833
        %1835 = vrot.lane.b32.xlu0 %v1604, 16
        %v1836 = vpop.permute.xlu0 %1835
        %1837 = vrot.lane.b32.xlu0 %v1605, 16
        %v1838 = vpop.permute.xlu0 %1837
        %1839 = vrot.lane.b32.xlu0 %v1606, 16
        %v1840 = vpop.permute.xlu0 %1839
        %v1841 = vmul.f32 %v1834, %v1218
        %v1842 = vmul.f32 %v1836, %v1219
        %v1843 = vmul.f32 %v1838, %v1218
        %v1844 = vmul.f32 %v1840, %v1219
        %v1845 = vadd.f32 %v1829, %v1841
        %v1846 = vadd.f32 %v1830, %v1842
        %v1847 = vadd.f32 %v1831, %v1843
        %v1848 = vadd.f32 %v1832, %v1844
        %v1849 = vpack.c.bf16 %v1846, %v1845
        %v1850 = vpack.c.bf16 %v1848, %v1847
        %v1851 = vmul.f32 %v1696, %v1214
        %v1852 = vmul.f32 %v1699, %v1215
        %v1853 = vmul.f32 %v1704, %v1214
        %v1854 = vmul.f32 %v1707, %v1215
        %1855 = vrot.lane.b32.xlu0 %v1696, 112
        %v1856 = vpop.permute.xlu0 %1855
        %1857 = vrot.lane.b32.xlu0 %v1699, 112
        %v1858 = vpop.permute.xlu0 %1857
        %1859 = vrot.lane.b32.xlu0 %v1704, 112
        %v1860 = vpop.permute.xlu0 %1859
        %1861 = vrot.lane.b32.xlu0 %v1707, 112
        %v1862 = vpop.permute.xlu0 %1861
        %v1863 = vmul.f32 %v1856, %v1216
        %v1864 = vmul.f32 %v1858, %v1217
        %v1865 = vmul.f32 %v1860, %v1216
        %v1866 = vmul.f32 %v1862, %v1217
        %v1867 = vadd.f32 %v1851, %v1863
        %v1868 = vadd.f32 %v1852, %v1864
        %v1869 = vadd.f32 %v1853, %v1865
        %v1870 = vadd.f32 %v1854, %v1866
        %1871 = vrot.lane.b32.xlu0 %v1696, 16
        %v1872 = vpop.permute.xlu0 %1871
        %1873 = vrot.lane.b32.xlu0 %v1699, 16
        %v1874 = vpop.permute.xlu0 %1873
        %1875 = vrot.lane.b32.xlu0 %v1704, 16
        %v1876 = vpop.permute.xlu0 %1875
        %1877 = vrot.lane.b32.xlu0 %v1707, 16
        %v1878 = vpop.permute.xlu0 %1877
        %v1879 = vmul.f32 %v1872, %v1218
        %v1880 = vmul.f32 %v1874, %v1219
        %v1881 = vmul.f32 %v1876, %v1218
        %v1882 = vmul.f32 %v1878, %v1219
        %v1883 = vadd.f32 %v1867, %v1879
        %v1884 = vadd.f32 %v1868, %v1880
        %v1885 = vadd.f32 %v1869, %v1881
        %v1886 = vadd.f32 %v1870, %v1882
        %v1887 = vpack.c.bf16 %v1884, %v1883
        %v1888 = vpack.c.bf16 %v1886, %v1885
        %v1889 = vpack.c.bf16 %v1802, %v1799
        %v1890 = vpack.c.bf16 %v1810, %v1807
        %vm1891 = vcmask 261120
        %v1893 = vsel %vm1891, %v1849, 0
        %v1896 = vsel %vm1891, %v1850, 0
        %v1899 = vsel %vm1891, %v1887, 0
        %v1902 = vsel %vm1891, %v1888, 0
        %1904 = vmatprep.subr.bf16.mxu0 0
        %1905 = vmatpush1.bf16.xpose.msra.mxu0 %v1899
        %1906 = vmatprep.subr.bf16.mxu0 0
        %1907 = vmatpush1.bf16.xpose.msra.mxu0 %v1902
        %1908 = vmatprep.subr.bf16.mxu0 0
        %1909 = vmatpush1.bf16.xpose.msra.mxu0 0
        %1910 = vmatprep.subr.bf16.mxu0 0
        %1911 = vmatpush1.bf16.xpose.msra.mxu0 0
        %1912 = vmatprep.subr.bf16.mxu0 0
        %1913 = vmatpush1.bf16.xpose.msra.mxu0 0
        %1914 = vmatprep.subr.bf16.mxu0 0
        %1915 = vmatpush1.bf16.xpose.msra.mxu0 0
        %1916 = vmatprep.subr.bf16.mxu0 0
        %1917 = vmatpush1.bf16.xpose.msra.mxu0 0
        %1918 = vmatprep.subr.bf16.mxu0 0
        %1919 = vmatpush1.bf16.xpose.msra.mxu0 0
        %1920 = vmatprep.subr.bf16.mxu0 0
        %1921 = vmatpush1.bf16.xpose.msra.mxu0 0
        %1922 = vmatprep.subr.bf16.mxu0 0
        %1923 = vmatpush1.bf16.xpose.msra.mxu0 0
        %1924 = vmatprep.subr.bf16.mxu0 0
        %1925 = vmatpush1.bf16.xpose.msra.mxu0 0
        %1926 = vmatprep.subr.bf16.mxu0 0
        %1927 = vmatpush1.bf16.xpose.msra.mxu0 0
        %1928 = vmatprep.subr.bf16.mxu0 0
        %1929 = vmatpush1.bf16.xpose.msra.mxu0 0
        %1930 = vmatprep.subr.bf16.mxu0 0
        %1931 = vmatpush1.bf16.xpose.msra.mxu0 0
        %1932 = vmatprep.subr.bf16.mxu0 0
        %1933 = vmatpush1.bf16.xpose.msra.mxu0 0
        %1934 = vmatprep.subr.bf16.mxu0 0
        %1935 = vmatpush1.bf16.xpose.msra.mxu0 0
        %1936 = vmatprep.mubr.bf16.mxu0 0
        %1937 = vmatmul.mubr.bf16.gmra.mrb[0].mxu0 %v1893
        %v1938 = vpop.f32.mrb[0].mxu0
        %v1939 = vadd.f32 %v1255, %v1938
        %v1940 = vpop.f32.mrb[0].mxu0
        %v1941 = vpop.f32.mrb[0].mxu0
        %v1942 = vadd.f32 %v1256, %v1941
        %v1943 = vpop.f32.mrb[0].mxu0
        %1944 = vmatprep.mubr.bf16.mxu0 0
        %1945 = vmatmul.mubr.bf16.gmra.mrb[0].mxu0 %v1896
        %v1946 = vpop.f32.mrb[0].mxu0
        %v1947 = vadd.f32 %v1257, %v1946
        %v1948 = vpop.f32.mrb[0].mxu0
        %v1949 = vpop.f32.mrb[0].mxu0
        %v1950 = vadd.f32 %v1258, %v1949
        %v1951 = vpop.f32.mrb[0].mxu0
        %1952 = vdwg.mxu0
        %v1953 = vsel %vm1891, %v1939, -inf
        %1954 = vmax.xlane.f32.xlu0 %v1953
        %v1955 = vpop.xlane.xlu0 %1954
        %v1956 = vsel %vm1891, %v1942, -inf
        %1957 = vmax.xlane.f32.xlu0 %v1956
        %v1958 = vpop.xlane.xlu0 %1957
        %v1959 = vsel %vm1891, %v1947, -inf
        %1960 = vmax.xlane.f32.xlu0 %v1959
        %v1961 = vpop.xlane.xlu0 %1960
        %v1962 = vsel %vm1891, %v1950, -inf
        %1963 = vmax.xlane.f32.xlu0 %v1962
        %v1964 = vpop.xlane.xlu0 %1963
        %v1965 = vsub.f32 %v1939, %v1955
        %v1966 = vsub.f32 %v1942, %v1958
        %v1967 = vsub.f32 %v1947, %v1961
        %v1968 = vsub.f32 %v1950, %v1964
        %v1969 = vmul.f32 %v1965, 1.442695
        %v1970 = vpow.pop %v1969
        %v1971 = vmul.f32 %v1966, 1.442695
        %v1972 = vpow.pop %v1971
        %v1973 = vmul.f32 %v1967, 1.442695
        %v1974 = vpow.pop %v1973
        %v1975 = vmul.f32 %v1968, 1.442695
        %v1976 = vpow.pop %v1975
        %v1977 = vsel %vm1891, %v1970, 0.0
        %1978 = vadd.xlane.f32.xlu0 %v1977
        %v1979 = vpop.xlane.xlu0 %1978
        %v1980 = vsel %vm1891, %v1972, 0.0
        %1981 = vadd.xlane.f32.xlu0 %v1980
        %v1982 = vpop.xlane.xlu0 %1981
        %v1983 = vsel %vm1891, %v1974, 0.0
        %1984 = vadd.xlane.f32.xlu0 %v1983
        %v1985 = vpop.xlane.xlu0 %1984
        %v1986 = vsel %vm1891, %v1976, 0.0
        %1987 = vadd.xlane.f32.xlu0 %v1986
        %v1988 = vpop.xlane.xlu0 %1987
        %v1989 = vrcp.pop %v1979
        %v1990 = vrcp.pop %v1982
        %v1991 = vrcp.pop %v1985
        %v1992 = vrcp.pop %v1988
        %v1993 = vmul.f32 %v1970, %v1989
        %v1994 = vmul.f32 %v1972, %v1990
        %v1995 = vmul.f32 %v1974, %v1991
        %v1996 = vmul.f32 %v1976, %v1992
        %v1997 = vpack.c.bf16 %v1994, %v1993
        %v1998 = vpack.c.bf16 %v1996, %v1995
        %v2000 = vsel %vm1891, %v1997, 0
        %v2003 = vsel %vm1891, %v1998, 0
        %2005 = vmatprep.subr.bf16.mxu0 0
        %2006 = vmatpush1.bf16.msra.mxu0 %v1889
        %2007 = vmatprep.subr.bf16.mxu0 0
        %2008 = vmatpush1.bf16.msra.mxu0 %v1890
        %2009 = vmatprep.subr.bf16.mxu0 0
        %2010 = vmatpush1.bf16.msra.mxu0 0
        %2011 = vmatprep.subr.bf16.mxu0 0
        %2012 = vmatpush1.bf16.msra.mxu0 0
        %2013 = vmatprep.subr.bf16.mxu0 0
        %2014 = vmatpush1.bf16.msra.mxu0 0
        %2015 = vmatprep.subr.bf16.mxu0 0
        %2016 = vmatpush1.bf16.msra.mxu0 0
        %2017 = vmatprep.subr.bf16.mxu0 0
        %2018 = vmatpush1.bf16.msra.mxu0 0
        %2019 = vmatprep.subr.bf16.mxu0 0
        %2020 = vmatpush1.bf16.msra.mxu0 0
        %2021 = vmatprep.subr.bf16.mxu0 0
        %2022 = vmatpush1.bf16.msra.mxu0 0
        %2023 = vmatprep.subr.bf16.mxu0 0
        %2024 = vmatpush1.bf16.msra.mxu0 0
        %2025 = vmatprep.subr.bf16.mxu0 0
        %2026 = vmatpush1.bf16.msra.mxu0 0
        %2027 = vmatprep.subr.bf16.mxu0 0
        %2028 = vmatpush1.bf16.msra.mxu0 0
        %2029 = vmatprep.subr.bf16.mxu0 0
        %2030 = vmatpush1.bf16.msra.mxu0 0
        %2031 = vmatprep.subr.bf16.mxu0 0
        %2032 = vmatpush1.bf16.msra.mxu0 0
        %2033 = vmatprep.subr.bf16.mxu0 0
        %2034 = vmatpush1.bf16.msra.mxu0 0
        %2035 = vmatprep.subr.bf16.mxu0 0
        %2036 = vmatpush1.bf16.msra.mxu0 0
        %2037 = vmatprep.mubr.bf16.mxu0 0
        %2038 = vmatmul.mubr.bf16.gmra.mrb[0].mxu0 %v2000
        %v2039 = vpop.f32.mrb[0].mxu0
        %v2040 = vadd.f32 0.0, %v2039
        %v2041 = vpop.f32.mrb[0].mxu0
        %v2042 = vpop.f32.mrb[0].mxu0
        %v2043 = vadd.f32 0.0, %v2042
        %v2044 = vpop.f32.mrb[0].mxu0
        %2045 = vmatprep.mubr.bf16.mxu0 0
        %2046 = vmatmul.mubr.bf16.gmra.mrb[0].mxu0 %v2003
        %v2047 = vpop.f32.mrb[0].mxu0
        %v2048 = vadd.f32 0.0, %v2047
        %v2049 = vpop.f32.mrb[0].mxu0
        %v2050 = vpop.f32.mrb[0].mxu0
        %v2051 = vadd.f32 0.0, %v2050
        %v2052 = vpop.f32.mrb[0].mxu0
        %2053 = vdwg.mxu0
        %2056 = vrot.lane.b32.xlu0 %v1849, 96
        %v2057 = vpop.permute.xlu0 %2056
        %2058 = vrot.lane.b32.xlu0 %v1850, 96
        %v2059 = vpop.permute.xlu0 %2058
        %2062 = vrot.lane.b32.xlu0 %v1887, 96
        %v2063 = vpop.permute.xlu0 %2062
        %2064 = vrot.lane.b32.xlu0 %v1888, 96
        %v2065 = vpop.permute.xlu0 %2064
        %v2067 = vsel %vm1891, %v2057, 0
        %v2070 = vsel %vm1891, %v2059, 0
        %v2073 = vsel %vm1891, %v2063, 0
        %v2076 = vsel %vm1891, %v2065, 0
        %2078 = vmatprep.subr.bf16.mxu0 0
        %2079 = vmatpush1.bf16.xpose.msra.mxu0 %v2073
        %2080 = vmatprep.subr.bf16.mxu0 0
        %2081 = vmatpush1.bf16.xpose.msra.mxu0 %v2076
        %2082 = vmatprep.subr.bf16.mxu0 0
        %2083 = vmatpush1.bf16.xpose.msra.mxu0 0
        %2084 = vmatprep.subr.bf16.mxu0 0
        %2085 = vmatpush1.bf16.xpose.msra.mxu0 0
        %2086 = vmatprep.subr.bf16.mxu0 0
        %2087 = vmatpush1.bf16.xpose.msra.mxu0 0
        %2088 = vmatprep.subr.bf16.mxu0 0
        %2089 = vmatpush1.bf16.xpose.msra.mxu0 0
        %2090 = vmatprep.subr.bf16.mxu0 0
        %2091 = vmatpush1.bf16.xpose.msra.mxu0 0
        %2092 = vmatprep.subr.bf16.mxu0 0
        %2093 = vmatpush1.bf16.xpose.msra.mxu0 0
        %2094 = vmatprep.subr.bf16.mxu0 0
        %2095 = vmatpush1.bf16.xpose.msra.mxu0 0
        %2096 = vmatprep.subr.bf16.mxu0 0
        %2097 = vmatpush1.bf16.xpose.msra.mxu0 0
        %2098 = vmatprep.subr.bf16.mxu0 0
        %2099 = vmatpush1.bf16.xpose.msra.mxu0 0
        %2100 = vmatprep.subr.bf16.mxu0 0
        %2101 = vmatpush1.bf16.xpose.msra.mxu0 0
        %2102 = vmatprep.subr.bf16.mxu0 0
        %2103 = vmatpush1.bf16.xpose.msra.mxu0 0
        %2104 = vmatprep.subr.bf16.mxu0 0
        %2105 = vmatpush1.bf16.xpose.msra.mxu0 0
        %2106 = vmatprep.subr.bf16.mxu0 0
        %2107 = vmatpush1.bf16.xpose.msra.mxu0 0
        %2108 = vmatprep.subr.bf16.mxu0 0
        %2109 = vmatpush1.bf16.xpose.msra.mxu0 0
        %2110 = vmatprep.mubr.bf16.mxu0 0
        %2111 = vmatmul.mubr.bf16.gmra.mrb[0].mxu0 %v2067
        %v2112 = vpop.f32.mrb[0].mxu0
        %v2113 = vadd.f32 %v1255, %v2112
        %v2114 = vpop.f32.mrb[0].mxu0
        %v2115 = vpop.f32.mrb[0].mxu0
        %v2116 = vadd.f32 %v1256, %v2115
        %v2117 = vpop.f32.mrb[0].mxu0
        %2118 = vmatprep.mubr.bf16.mxu0 0
        %2119 = vmatmul.mubr.bf16.gmra.mrb[0].mxu0 %v2070
        %v2120 = vpop.f32.mrb[0].mxu0
        %v2121 = vadd.f32 %v1257, %v2120
        %v2122 = vpop.f32.mrb[0].mxu0
        %v2123 = vpop.f32.mrb[0].mxu0
        %v2124 = vadd.f32 %v1258, %v2123
        %v2125 = vpop.f32.mrb[0].mxu0
        %2126 = vdwg.mxu0
        %v2127 = vsel %vm1891, %v2113, -inf
        %2128 = vmax.xlane.f32.xlu0 %v2127
        %v2129 = vpop.xlane.xlu0 %2128
        %v2130 = vsel %vm1891, %v2116, -inf
        %2131 = vmax.xlane.f32.xlu0 %v2130
        %v2132 = vpop.xlane.xlu0 %2131
        %v2133 = vsel %vm1891, %v2121, -inf
        %2134 = vmax.xlane.f32.xlu0 %v2133
        %v2135 = vpop.xlane.xlu0 %2134
        %v2136 = vsel %vm1891, %v2124, -inf
        %2137 = vmax.xlane.f32.xlu0 %v2136
        %v2138 = vpop.xlane.xlu0 %2137
        %v2139 = vsub.f32 %v2113, %v2129
        %v2140 = vsub.f32 %v2116, %v2132
        %v2141 = vsub.f32 %v2121, %v2135
        %v2142 = vsub.f32 %v2124, %v2138
        %v2143 = vmul.f32 %v2139, 1.442695
        %v2144 = vpow.pop %v2143
        %v2145 = vmul.f32 %v2140, 1.442695
        %v2146 = vpow.pop %v2145
        %v2147 = vmul.f32 %v2141, 1.442695
        %v2148 = vpow.pop %v2147
        %v2149 = vmul.f32 %v2142, 1.442695
        %v2150 = vpow.pop %v2149
        %v2151 = vsel %vm1891, %v2144, 0.0
        %2152 = vadd.xlane.f32.xlu0 %v2151
        %v2153 = vpop.xlane.xlu0 %2152
        %v2154 = vsel %vm1891, %v2146, 0.0
        %2155 = vadd.xlane.f32.xlu0 %v2154
        %v2156 = vpop.xlane.xlu0 %2155
        %v2157 = vsel %vm1891, %v2148, 0.0
        %2158 = vadd.xlane.f32.xlu0 %v2157
        %v2159 = vpop.xlane.xlu0 %2158
        %v2160 = vsel %vm1891, %v2150, 0.0
        %2161 = vadd.xlane.f32.xlu0 %v2160
        %v2162 = vpop.xlane.xlu0 %2161
        %v2163 = vrcp.pop %v2153
        %v2164 = vrcp.pop %v2156
        %v2165 = vrcp.pop %v2159
        %v2166 = vrcp.pop %v2162
        %v2167 = vmul.f32 %v2144, %v2163
        %v2168 = vmul.f32 %v2146, %v2164
        %v2169 = vmul.f32 %v2148, %v2165
        %v2170 = vmul.f32 %v2150, %v2166
        %v2171 = vpack.c.bf16 %v2168, %v2167
        %v2172 = vpack.c.bf16 %v2170, %v2169
        %2175 = vrot.lane.b32.xlu0 %v1889, 96
        %v2176 = vpop.permute.xlu0 %2175
        %2177 = vrot.lane.b32.xlu0 %v1890, 96
        %v2178 = vpop.permute.xlu0 %2177
        %v2182 = vsel %vm1891, %v2171, 0
        %v2185 = vsel %vm1891, %v2172, 0
        %2187 = vmatprep.subr.bf16.mxu0 0
        %2188 = vmatpush1.bf16.msra.mxu0 %v2176
        %2189 = vmatprep.subr.bf16.mxu0 0
        %2190 = vmatpush1.bf16.msra.mxu0 %v2178
        %2191 = vmatprep.subr.bf16.mxu0 0
        %2192 = vmatpush1.bf16.msra.mxu0 0
        %2193 = vmatprep.subr.bf16.mxu0 0
        %2194 = vmatpush1.bf16.msra.mxu0 0
        %2195 = vmatprep.subr.bf16.mxu0 0
        %2196 = vmatpush1.bf16.msra.mxu0 0
        %2197 = vmatprep.subr.bf16.mxu0 0
        %2198 = vmatpush1.bf16.msra.mxu0 0
        %2199 = vmatprep.subr.bf16.mxu0 0
        %2200 = vmatpush1.bf16.msra.mxu0 0
        %2201 = vmatprep.subr.bf16.mxu0 0
        %2202 = vmatpush1.bf16.msra.mxu0 0
        %2203 = vmatprep.subr.bf16.mxu0 0
        %2204 = vmatpush1.bf16.msra.mxu0 0
        %2205 = vmatprep.subr.bf16.mxu0 0
        %2206 = vmatpush1.bf16.msra.mxu0 0
        %2207 = vmatprep.subr.bf16.mxu0 0
        %2208 = vmatpush1.bf16.msra.mxu0 0
        %2209 = vmatprep.subr.bf16.mxu0 0
        %2210 = vmatpush1.bf16.msra.mxu0 0
        %2211 = vmatprep.subr.bf16.mxu0 0
        %2212 = vmatpush1.bf16.msra.mxu0 0
        %2213 = vmatprep.subr.bf16.mxu0 0
        %2214 = vmatpush1.bf16.msra.mxu0 0
        %2215 = vmatprep.subr.bf16.mxu0 0
        %2216 = vmatpush1.bf16.msra.mxu0 0
        %2217 = vmatprep.subr.bf16.mxu0 0
        %2218 = vmatpush1.bf16.msra.mxu0 0
        %2219 = vmatprep.mubr.bf16.mxu0 0
        %2220 = vmatmul.mubr.bf16.gmra.mrb[0].mxu0 %v2182
        %v2221 = vpop.f32.mrb[0].mxu0
        %v2222 = vadd.f32 0.0, %v2221
        %v2223 = vpop.f32.mrb[0].mxu0
        %v2224 = vpop.f32.mrb[0].mxu0
        %v2225 = vadd.f32 0.0, %v2224
        %v2226 = vpop.f32.mrb[0].mxu0
        %2227 = vmatprep.mubr.bf16.mxu0 0
        %2228 = vmatmul.mubr.bf16.gmra.mrb[0].mxu0 %v2185
        %v2229 = vpop.f32.mrb[0].mxu0
        %v2230 = vadd.f32 0.0, %v2229
        %v2231 = vpop.f32.mrb[0].mxu0
        %v2232 = vpop.f32.mrb[0].mxu0
        %v2233 = vadd.f32 0.0, %v2232
        %v2234 = vpop.f32.mrb[0].mxu0
        %2235 = vdwg.mxu0
        %2236 = vrot.lane.b32.xlu0 %v1849, 64
        %v2237 = vpop.permute.xlu0 %2236
        %2238 = vrot.lane.b32.xlu0 %v1850, 64
        %v2239 = vpop.permute.xlu0 %2238
        %2240 = vrot.lane.b32.xlu0 %v1887, 64
        %v2241 = vpop.permute.xlu0 %2240
        %2242 = vrot.lane.b32.xlu0 %v1888, 64
        %v2243 = vpop.permute.xlu0 %2242
        %v2245 = vsel %vm1891, %v2237, 0
        %v2248 = vsel %vm1891, %v2239, 0
        %v2251 = vsel %vm1891, %v2241, 0
        %v2254 = vsel %vm1891, %v2243, 0
        %2256 = vmatprep.subr.bf16.mxu0 0
        %2257 = vmatpush1.bf16.xpose.msra.mxu0 %v2251
        %2258 = vmatprep.subr.bf16.mxu0 0
        %2259 = vmatpush1.bf16.xpose.msra.mxu0 %v2254
        %2260 = vmatprep.subr.bf16.mxu0 0
        %2261 = vmatpush1.bf16.xpose.msra.mxu0 0
        %2262 = vmatprep.subr.bf16.mxu0 0
        %2263 = vmatpush1.bf16.xpose.msra.mxu0 0
        %2264 = vmatprep.subr.bf16.mxu0 0
        %2265 = vmatpush1.bf16.xpose.msra.mxu0 0
        %2266 = vmatprep.subr.bf16.mxu0 0
        %2267 = vmatpush1.bf16.xpose.msra.mxu0 0
        %2268 = vmatprep.subr.bf16.mxu0 0
        %2269 = vmatpush1.bf16.xpose.msra.mxu0 0
        %2270 = vmatprep.subr.bf16.mxu0 0
        %2271 = vmatpush1.bf16.xpose.msra.mxu0 0
        %2272 = vmatprep.subr.bf16.mxu0 0
        %2273 = vmatpush1.bf16.xpose.msra.mxu0 0
        %2274 = vmatprep.subr.bf16.mxu0 0
        %2275 = vmatpush1.bf16.xpose.msra.mxu0 0
        %2276 = vmatprep.subr.bf16.mxu0 0
        %2277 = vmatpush1.bf16.xpose.msra.mxu0 0
        %2278 = vmatprep.subr.bf16.mxu0 0
        %2279 = vmatpush1.bf16.xpose.msra.mxu0 0
        %2280 = vmatprep.subr.bf16.mxu0 0
        %2281 = vmatpush1.bf16.xpose.msra.mxu0 0
        %2282 = vmatprep.subr.bf16.mxu0 0
        %2283 = vmatpush1.bf16.xpose.msra.mxu0 0
        %2284 = vmatprep.subr.bf16.mxu0 0
        %2285 = vmatpush1.bf16.xpose.msra.mxu0 0
        %2286 = vmatprep.subr.bf16.mxu0 0
        %2287 = vmatpush1.bf16.xpose.msra.mxu0 0
        %2288 = vmatprep.mubr.bf16.mxu0 0
        %2289 = vmatmul.mubr.bf16.gmra.mrb[0].mxu0 %v2245
        %v2290 = vpop.f32.mrb[0].mxu0
        %v2291 = vadd.f32 %v1255, %v2290
        %v2292 = vpop.f32.mrb[0].mxu0
        %v2293 = vpop.f32.mrb[0].mxu0
        %v2294 = vadd.f32 %v1256, %v2293
        %v2295 = vpop.f32.mrb[0].mxu0
        %2296 = vmatprep.mubr.bf16.mxu0 0
        %2297 = vmatmul.mubr.bf16.gmra.mrb[0].mxu0 %v2248
        %v2298 = vpop.f32.mrb[0].mxu0
        %v2299 = vadd.f32 %v1257, %v2298
        %v2300 = vpop.f32.mrb[0].mxu0
        %v2301 = vpop.f32.mrb[0].mxu0
        %v2302 = vadd.f32 %v1258, %v2301
        %v2303 = vpop.f32.mrb[0].mxu0
        %2304 = vdwg.mxu0
        %v2305 = vsel %vm1891, %v2291, -inf
        %2306 = vmax.xlane.f32.xlu0 %v2305
        %v2307 = vpop.xlane.xlu0 %2306
        %v2308 = vsel %vm1891, %v2294, -inf
        %2309 = vmax.xlane.f32.xlu0 %v2308
        %v2310 = vpop.xlane.xlu0 %2309
        %v2311 = vsel %vm1891, %v2299, -inf
        %2312 = vmax.xlane.f32.xlu0 %v2311
        %v2313 = vpop.xlane.xlu0 %2312
        %v2314 = vsel %vm1891, %v2302, -inf
        %2315 = vmax.xlane.f32.xlu0 %v2314
        %v2316 = vpop.xlane.xlu0 %2315
        %v2317 = vsub.f32 %v2291, %v2307
        %v2318 = vsub.f32 %v2294, %v2310
        %v2319 = vsub.f32 %v2299, %v2313
        %v2320 = vsub.f32 %v2302, %v2316
        %v2321 = vmul.f32 %v2317, 1.442695
        %v2322 = vpow.pop %v2321
        %v2323 = vmul.f32 %v2318, 1.442695
        %v2324 = vpow.pop %v2323
        %v2325 = vmul.f32 %v2319, 1.442695
        %v2326 = vpow.pop %v2325
        %v2327 = vmul.f32 %v2320, 1.442695
        %v2328 = vpow.pop %v2327
        %v2329 = vsel %vm1891, %v2322, 0.0
        %2330 = vadd.xlane.f32.xlu0 %v2329
        %v2331 = vpop.xlane.xlu0 %2330
        %v2332 = vsel %vm1891, %v2324, 0.0
        %2333 = vadd.xlane.f32.xlu0 %v2332
        %v2334 = vpop.xlane.xlu0 %2333
        %v2335 = vsel %vm1891, %v2326, 0.0
        %2336 = vadd.xlane.f32.xlu0 %v2335
        %v2337 = vpop.xlane.xlu0 %2336
        %v2338 = vsel %vm1891, %v2328, 0.0
        %2339 = vadd.xlane.f32.xlu0 %v2338
        %v2340 = vpop.xlane.xlu0 %2339
        %v2341 = vrcp.pop %v2331
        %v2342 = vrcp.pop %v2334
        %v2343 = vrcp.pop %v2337
        %v2344 = vrcp.pop %v2340
        %v2345 = vmul.f32 %v2322, %v2341
        %v2346 = vmul.f32 %v2324, %v2342
        %v2347 = vmul.f32 %v2326, %v2343
        %v2348 = vmul.f32 %v2328, %v2344
        %v2349 = vpack.c.bf16 %v2346, %v2345
        %v2350 = vpack.c.bf16 %v2348, %v2347
        %2351 = vrot.lane.b32.xlu0 %v1889, 64
        %v2352 = vpop.permute.xlu0 %2351
        %2353 = vrot.lane.b32.xlu0 %v1890, 64
        %v2354 = vpop.permute.xlu0 %2353
        %v2358 = vsel %vm1891, %v2349, 0
        %v2361 = vsel %vm1891, %v2350, 0
        %2363 = vmatprep.subr.bf16.mxu0 0
        %2364 = vmatpush1.bf16.msra.mxu0 %v2352
        %2365 = vmatprep.subr.bf16.mxu0 0
        %2366 = vmatpush1.bf16.msra.mxu0 %v2354
        %2367 = vmatprep.subr.bf16.mxu0 0
        %2368 = vmatpush1.bf16.msra.mxu0 0
        %2369 = vmatprep.subr.bf16.mxu0 0
        %2370 = vmatpush1.bf16.msra.mxu0 0
        %2371 = vmatprep.subr.bf16.mxu0 0
        %2372 = vmatpush1.bf16.msra.mxu0 0
        %2373 = vmatprep.subr.bf16.mxu0 0
        %2374 = vmatpush1.bf16.msra.mxu0 0
        %2375 = vmatprep.subr.bf16.mxu0 0
        %2376 = vmatpush1.bf16.msra.mxu0 0
        %2377 = vmatprep.subr.bf16.mxu0 0
        %2378 = vmatpush1.bf16.msra.mxu0 0
        %2379 = vmatprep.subr.bf16.mxu0 0
        %2380 = vmatpush1.bf16.msra.mxu0 0
        %2381 = vmatprep.subr.bf16.mxu0 0
        %2382 = vmatpush1.bf16.msra.mxu0 0
        %2383 = vmatprep.subr.bf16.mxu0 0
        %2384 = vmatpush1.bf16.msra.mxu0 0
        %2385 = vmatprep.subr.bf16.mxu0 0
        %2386 = vmatpush1.bf16.msra.mxu0 0
        %2387 = vmatprep.subr.bf16.mxu0 0
        %2388 = vmatpush1.bf16.msra.mxu0 0
        %2389 = vmatprep.subr.bf16.mxu0 0
        %2390 = vmatpush1.bf16.msra.mxu0 0
        %2391 = vmatprep.subr.bf16.mxu0 0
        %2392 = vmatpush1.bf16.msra.mxu0 0
        %2393 = vmatprep.subr.bf16.mxu0 0
        %2394 = vmatpush1.bf16.msra.mxu0 0
        %2395 = vmatprep.mubr.bf16.mxu0 0
        %2396 = vmatmul.mubr.bf16.gmra.mrb[0].mxu0 %v2358
        %v2397 = vpop.f32.mrb[0].mxu0
        %v2398 = vadd.f32 0.0, %v2397
        %v2399 = vpop.f32.mrb[0].mxu0
        %v2400 = vpop.f32.mrb[0].mxu0
        %v2401 = vadd.f32 0.0, %v2400
        %v2402 = vpop.f32.mrb[0].mxu0
        %2403 = vmatprep.mubr.bf16.mxu0 0
        %2404 = vmatmul.mubr.bf16.gmra.mrb[0].mxu0 %v2361
        %v2405 = vpop.f32.mrb[0].mxu0
        %v2406 = vadd.f32 0.0, %v2405
        %v2407 = vpop.f32.mrb[0].mxu0
        %v2408 = vpop.f32.mrb[0].mxu0
        %v2409 = vadd.f32 0.0, %v2408
        %v2410 = vpop.f32.mrb[0].mxu0
        %2411 = vdwg.mxu0
        %2412 = vrot.lane.b32.xlu0 %v1849, 32
        %v2413 = vpop.permute.xlu0 %2412
        %2414 = vrot.lane.b32.xlu0 %v1850, 32
        %v2415 = vpop.permute.xlu0 %2414
        %2416 = vrot.lane.b32.xlu0 %v1887, 32
        %v2417 = vpop.permute.xlu0 %2416
        %2418 = vrot.lane.b32.xlu0 %v1888, 32
        %v2419 = vpop.permute.xlu0 %2418
        %v2421 = vsel %vm1891, %v2413, 0
        %v2424 = vsel %vm1891, %v2415, 0
        %v2427 = vsel %vm1891, %v2417, 0
        %v2430 = vsel %vm1891, %v2419, 0
        %2432 = vmatprep.subr.bf16.mxu0 0
        %2433 = vmatpush1.bf16.xpose.msra.mxu0 %v2427
        %2434 = vmatprep.subr.bf16.mxu0 0
        %2435 = vmatpush1.bf16.xpose.msra.mxu0 %v2430
        %2436 = vmatprep.subr.bf16.mxu0 0
        %2437 = vmatpush1.bf16.xpose.msra.mxu0 0
        %2438 = vmatprep.subr.bf16.mxu0 0
        %2439 = vmatpush1.bf16.xpose.msra.mxu0 0
        %2440 = vmatprep.subr.bf16.mxu0 0
        %2441 = vmatpush1.bf16.xpose.msra.mxu0 0
        %2442 = vmatprep.subr.bf16.mxu0 0
        %2443 = vmatpush1.bf16.xpose.msra.mxu0 0
        %2444 = vmatprep.subr.bf16.mxu0 0
        %2445 = vmatpush1.bf16.xpose.msra.mxu0 0
        %2446 = vmatprep.subr.bf16.mxu0 0
        %2447 = vmatpush1.bf16.xpose.msra.mxu0 0
        %2448 = vmatprep.subr.bf16.mxu0 0
        %2449 = vmatpush1.bf16.xpose.msra.mxu0 0
        %2450 = vmatprep.subr.bf16.mxu0 0
        %2451 = vmatpush1.bf16.xpose.msra.mxu0 0
        %2452 = vmatprep.subr.bf16.mxu0 0
        %2453 = vmatpush1.bf16.xpose.msra.mxu0 0
        %2454 = vmatprep.subr.bf16.mxu0 0
        %2455 = vmatpush1.bf16.xpose.msra.mxu0 0
        %2456 = vmatprep.subr.bf16.mxu0 0
        %2457 = vmatpush1.bf16.xpose.msra.mxu0 0
        %2458 = vmatprep.subr.bf16.mxu0 0
        %2459 = vmatpush1.bf16.xpose.msra.mxu0 0
        %2460 = vmatprep.subr.bf16.mxu0 0
        %2461 = vmatpush1.bf16.xpose.msra.mxu0 0
        %2462 = vmatprep.subr.bf16.mxu0 0
        %2463 = vmatpush1.bf16.xpose.msra.mxu0 0
        %2464 = vmatprep.mubr.bf16.mxu0 0
        %2465 = vmatmul.mubr.bf16.gmra.mrb[0].mxu0 %v2421
        %v2466 = vpop.f32.mrb[0].mxu0
        %v2467 = vadd.f32 %v1255, %v2466
        %v2468 = vpop.f32.mrb[0].mxu0
        %v2469 = vpop.f32.mrb[0].mxu0
        %v2470 = vadd.f32 %v1256, %v2469
        %v2471 = vpop.f32.mrb[0].mxu0
        %2472 = vmatprep.mubr.bf16.mxu0 0
        %2473 = vmatmul.mubr.bf16.gmra.mrb[0].mxu0 %v2424
        %v2474 = vpop.f32.mrb[0].mxu0
        %v2475 = vadd.f32 %v1257, %v2474
        %v2476 = vpop.f32.mrb[0].mxu0
        %v2477 = vpop.f32.mrb[0].mxu0
        %v2478 = vadd.f32 %v1258, %v2477
        %v2479 = vpop.f32.mrb[0].mxu0
        %2480 = vdwg.mxu0
        %v2481 = vsel %vm1891, %v2467, -inf
        %2482 = vmax.xlane.f32.xlu0 %v2481
        %v2483 = vpop.xlane.xlu0 %2482
        %v2484 = vsel %vm1891, %v2470, -inf
        %2485 = vmax.xlane.f32.xlu0 %v2484
        %v2486 = vpop.xlane.xlu0 %2485
        %v2487 = vsel %vm1891, %v2475, -inf
        %2488 = vmax.xlane.f32.xlu0 %v2487
        %v2489 = vpop.xlane.xlu0 %2488
        %v2490 = vsel %vm1891, %v2478, -inf
        %2491 = vmax.xlane.f32.xlu0 %v2490
        %v2492 = vpop.xlane.xlu0 %2491
        %v2493 = vsub.f32 %v2467, %v2483
        %v2494 = vsub.f32 %v2470, %v2486
        %v2495 = vsub.f32 %v2475, %v2489
        %v2496 = vsub.f32 %v2478, %v2492
        %v2497 = vmul.f32 %v2493, 1.442695
        %v2498 = vpow.pop %v2497
        %v2499 = vmul.f32 %v2494, 1.442695
        %v2500 = vpow.pop %v2499
        %v2501 = vmul.f32 %v2495, 1.442695
        %v2502 = vpow.pop %v2501
        %v2503 = vmul.f32 %v2496, 1.442695
        %v2504 = vpow.pop %v2503
        %v2505 = vsel %vm1891, %v2498, 0.0
        %2506 = vadd.xlane.f32.xlu0 %v2505
        %v2507 = vpop.xlane.xlu0 %2506
        %v2508 = vsel %vm1891, %v2500, 0.0
        %2509 = vadd.xlane.f32.xlu0 %v2508
        %v2510 = vpop.xlane.xlu0 %2509
        %v2511 = vsel %vm1891, %v2502, 0.0
        %2512 = vadd.xlane.f32.xlu0 %v2511
        %v2513 = vpop.xlane.xlu0 %2512
        %v2514 = vsel %vm1891, %v2504, 0.0
        %2515 = vadd.xlane.f32.xlu0 %v2514
        %v2516 = vpop.xlane.xlu0 %2515
        %v2517 = vrcp.pop %v2507
        %v2518 = vrcp.pop %v2510
        %v2519 = vrcp.pop %v2513
        %v2520 = vrcp.pop %v2516
        %v2521 = vmul.f32 %v2498, %v2517
        %v2522 = vmul.f32 %v2500, %v2518
        %v2523 = vmul.f32 %v2502, %v2519
        %v2524 = vmul.f32 %v2504, %v2520
        %v2525 = vpack.c.bf16 %v2522, %v2521
        %v2526 = vpack.c.bf16 %v2524, %v2523
        %2527 = vrot.lane.b32.xlu0 %v1889, 32
        %v2528 = vpop.permute.xlu0 %2527
        %2529 = vrot.lane.b32.xlu0 %v1890, 32
        %v2530 = vpop.permute.xlu0 %2529
        %v2534 = vsel %vm1891, %v2525, 0
        %v2537 = vsel %vm1891, %v2526, 0
        %2539 = vmatprep.subr.bf16.mxu0 0
        %2540 = vmatpush1.bf16.msra.mxu0 %v2528
        %2541 = vmatprep.subr.bf16.mxu0 0
        %2542 = vmatpush1.bf16.msra.mxu0 %v2530
        %2543 = vmatprep.subr.bf16.mxu0 0
        %2544 = vmatpush1.bf16.msra.mxu0 0
        %2545 = vmatprep.subr.bf16.mxu0 0
        %2546 = vmatpush1.bf16.msra.mxu0 0
        %2547 = vmatprep.subr.bf16.mxu0 0
        %2548 = vmatpush1.bf16.msra.mxu0 0
        %2549 = vmatprep.subr.bf16.mxu0 0
        %2550 = vmatpush1.bf16.msra.mxu0 0
        %2551 = vmatprep.subr.bf16.mxu0 0
        %2552 = vmatpush1.bf16.msra.mxu0 0
        %2553 = vmatprep.subr.bf16.mxu0 0
        %2554 = vmatpush1.bf16.msra.mxu0 0
        %2555 = vmatprep.subr.bf16.mxu0 0
        %2556 = vmatpush1.bf16.msra.mxu0 0
        %2557 = vmatprep.subr.bf16.mxu0 0
        %2558 = vmatpush1.bf16.msra.mxu0 0
        %2559 = vmatprep.subr.bf16.mxu0 0
        %2560 = vmatpush1.bf16.msra.mxu0 0
        %2561 = vmatprep.subr.bf16.mxu0 0
        %2562 = vmatpush1.bf16.msra.mxu0 0
        %2563 = vmatprep.subr.bf16.mxu0 0
        %2564 = vmatpush1.bf16.msra.mxu0 0
        %2565 = vmatprep.subr.bf16.mxu0 0
        %2566 = vmatpush1.bf16.msra.mxu0 0
        %2567 = vmatprep.subr.bf16.mxu0 0
        %2568 = vmatpush1.bf16.msra.mxu0 0
        %2569 = vmatprep.subr.bf16.mxu0 0
        %2570 = vmatpush1.bf16.msra.mxu0 0
        %2571 = vmatprep.mubr.bf16.mxu0 0
        %2572 = vmatmul.mubr.bf16.gmra.mrb[0].mxu0 %v2534
        %v2573 = vpop.f32.mrb[0].mxu0
        %v2574 = vadd.f32 0.0, %v2573
        %v2575 = vpop.f32.mrb[0].mxu0
        %v2576 = vpop.f32.mrb[0].mxu0
        %v2577 = vadd.f32 0.0, %v2576
        %v2578 = vpop.f32.mrb[0].mxu0
        %2579 = vmatprep.mubr.bf16.mxu0 0
        %2580 = vmatmul.mubr.bf16.gmra.mrb[0].mxu0 %v2537
        %v2581 = vpop.f32.mrb[0].mxu0
        %v2582 = vadd.f32 0.0, %v2581
        %v2583 = vpop.f32.mrb[0].mxu0
        %v2584 = vpop.f32.mrb[0].mxu0
        %v2585 = vadd.f32 0.0, %v2584
        %v2586 = vpop.f32.mrb[0].mxu0
        %2587 = vdwg.mxu0
        %2592 = vrot.lane.b32.xlu0 %v2222, 32
        %v2593 = vpop.permute.xlu0 %2592
        %2594 = vrot.lane.b32.xlu0 %v2225, 32
        %v2595 = vpop.permute.xlu0 %2594
        %2596 = vrot.lane.b32.xlu0 %v2230, 32
        %v2597 = vpop.permute.xlu0 %2596
        %2598 = vrot.lane.b32.xlu0 %v2233, 32
        %v2599 = vpop.permute.xlu0 %2598
        %2608 = vrot.lane.b32.xlu0 %v2398, 64
        %v2609 = vpop.permute.xlu0 %2608
        %2610 = vrot.lane.b32.xlu0 %v2401, 64
        %v2611 = vpop.permute.xlu0 %2610
        %2612 = vrot.lane.b32.xlu0 %v2406, 64
        %v2613 = vpop.permute.xlu0 %2612
        %2614 = vrot.lane.b32.xlu0 %v2409, 64
        %v2615 = vpop.permute.xlu0 %2614
        %2624 = vrot.lane.b32.xlu0 %v2574, 96
        %v2625 = vpop.permute.xlu0 %2624
        %2626 = vrot.lane.b32.xlu0 %v2577, 96
        %v2627 = vpop.permute.xlu0 %2626
        %2628 = vrot.lane.b32.xlu0 %v2582, 96
        %v2629 = vpop.permute.xlu0 %2628
        %2630 = vrot.lane.b32.xlu0 %v2585, 96
        %v2631 = vpop.permute.xlu0 %2630
        %v2636 = vsel %vm1891, %v2040, %v2593
        %v2637 = vsel %vm1891, %v2043, %v2595
        %v2638 = vsel %vm1891, %v2048, %v2597
        %v2639 = vsel %vm1891, %v2051, %v2599
        %vm2640 = vcmask 523264
        %v2641 = vsel %vm2640, %v2636, %v2609
        %v2642 = vsel %vm2640, %v2637, %v2611
        %v2643 = vsel %vm2640, %v2638, %v2613
        %v2644 = vsel %vm2640, %v2639, %v2615
        %vm2645 = vcmask 785408
        %v2646 = vsel %vm2645, %v2641, %v2625
        %v2647 = vsel %vm2645, %v2642, %v2627
        %v2648 = vsel %vm2645, %v2643, %v2629
        %v2649 = vsel %vm2645, %v2644, %v2631
        %v2650 = vpack.c.bf16 %v2647, %v2646
        %v2651 = vpack.c.bf16 %v2649, %v2648
        %v2653 = vlaneseq
        %v2654 = vshrl.u32 %v2653, 7
        %v2655 = vsub.s32 0, %v2654
        %v2656 = vrot.slane %v1332, %v2655
        %v2674 = vunpack.c.l.b16 %v1316
        %v2675 = vunpack.c.l.b16 %v1317
        %v2676 = vunpack.c.l.b16 %v1318
        %v2677 = vunpack.c.l.b16 %v1319
        %v2678 = vunpack.c.l.b16 %v1320
        %v2679 = vunpack.c.l.b16 %v1321
        %v2680 = vunpack.c.l.b16 %v1322
        %v2681 = vunpack.c.l.b16 %v1323
        %v2682 = vunpack.c.l.b16 %v1324
        %v2683 = vunpack.c.l.b16 %v1325
        %v2684 = vunpack.c.l.b16 %v1326
        %v2685 = vunpack.c.l.b16 %v1327
        %v2686 = vunpack.c.l.b16 %v1328
        %v2687 = vunpack.c.l.b16 %v1329
        %v2688 = vunpack.c.l.b16 %v1330
        %v2689 = vunpack.c.l.b16 %v1331
        %v2690 = vpack.c.b16 %v2675, %v2674
        %v2691 = vpack.c.b16 %v2677, %v2676
        %v2692 = vpack.c.b16 %v2679, %v2678
        %v2693 = vpack.c.b16 %v2681, %v2680
        %v2694 = vpack.c.b16 %v2683, %v2682
        %v2695 = vpack.c.b16 %v2685, %v2684
        %v2696 = vpack.c.b16 %v2687, %v2686
        %v2697 = vpack.c.b16 %v2689, %v2688
        %2706 = vmatprep.subr.bf16.mxu0 0
        %2707 = vmatpush1.bf16.msra.mxu0 %v2690
        %2708 = vmatprep.subr.bf16.mxu0 0
        %2709 = vmatpush1.bf16.msra.mxu0 %v2691
        %2710 = vmatprep.subr.bf16.mxu0 0
        %2711 = vmatpush1.bf16.msra.mxu0 %v2692
        %2712 = vmatprep.subr.bf16.mxu0 0
        %2713 = vmatpush1.bf16.msra.mxu0 %v2693
        %2714 = vmatprep.subr.bf16.mxu0 0
        %2715 = vmatpush1.bf16.msra.mxu0 %v2694
        %2716 = vmatprep.subr.bf16.mxu0 0
        %2717 = vmatpush1.bf16.msra.mxu0 %v2695
        %2718 = vmatprep.subr.bf16.mxu0 0
        %2719 = vmatpush1.bf16.msra.mxu0 %v2696
        %2720 = vmatprep.subr.bf16.mxu0 0
        %2721 = vmatpush1.bf16.msra.mxu0 %v2697
        %2722 = vmatprep.subr.bf16.mxu0 0
        %2723 = vmatpush1.bf16.msra.mxu0 0
        %2724 = vmatprep.subr.bf16.mxu0 0
        %2725 = vmatpush1.bf16.msra.mxu0 0
        %2726 = vmatprep.subr.bf16.mxu0 0
        %2727 = vmatpush1.bf16.msra.mxu0 0
        %2728 = vmatprep.subr.bf16.mxu0 0
        %2729 = vmatpush1.bf16.msra.mxu0 0
        %2730 = vmatprep.subr.bf16.mxu0 0
        %2731 = vmatpush1.bf16.msra.mxu0 0
        %2732 = vmatprep.subr.bf16.mxu0 0
        %2733 = vmatpush1.bf16.msra.mxu0 0
        %2734 = vmatprep.subr.bf16.mxu0 0
        %2735 = vmatpush1.bf16.msra.mxu0 0
        %2736 = vmatprep.subr.bf16.mxu0 0
        %2737 = vmatpush1.bf16.msra.mxu0 0
        %2738 = vmatprep.mubr.bf16.mxu0 0
        %2739 = vmatmul.mubr.bf16.gmra.mrb[0].mxu0 %v2650
        %v2740 = vpop.f32.mrb[0].mxu0
        %v2741 = vadd.f32 %v2656, %v2740
        %v2742 = vpop.f32.mrb[0].mxu0
        %v2743 = vpop.f32.mrb[0].mxu0
        %v2744 = vadd.f32 %v2656, %v2743
        %v2745 = vpop.f32.mrb[0].mxu0
        %2746 = vmatprep.mubr.bf16.mxu0 0
        %2747 = vmatmul.mubr.bf16.gmra.mrb[0].mxu0 %v2651
        %v2748 = vpop.f32.mrb[0].mxu0
        %v2749 = vadd.f32 %v2656, %v2748
        %v2750 = vpop.f32.mrb[0].mxu0
        %v2751 = vpop.f32.mrb[0].mxu0
        %v2752 = vadd.f32 %v2656, %v2751
        %v2753 = vpop.f32.mrb[0].mxu0
        %2754 = vdwg.mxu0
        %v2755 = vadd.f32 %v1259, %v2741
        %v2756 = vadd.f32 %v1260, %v2744
        %v2757 = vadd.f32 %v1261, %v2749
        %v2758 = vadd.f32 %v1262, %v2752
        %2759 = vadd.xlane.f32.xlu0 %v2755
        %v2760 = vpop.xlane.xlu0 %2759
        %2761 = vadd.xlane.f32.xlu0 %v2756
        %v2762 = vpop.xlane.xlu0 %2761
        %2763 = vadd.xlane.f32.xlu0 %v2757
        %v2764 = vpop.xlane.xlu0 %2763
        %2765 = vadd.xlane.f32.xlu0 %v2758
        %v2766 = vpop.xlane.xlu0 %2765
        %v2767 = vmul.f32 %v2760, %v1441
        %v2768 = vmul.f32 %v2762, %v1441
        %v2769 = vmul.f32 %v2764, %v1441
        %v2770 = vmul.f32 %v2766, %v1441
        %v2771 = vsub.f32 %v2755, %v2767
        %v2772 = vsub.f32 %v2756, %v2768
        %v2773 = vsub.f32 %v2757, %v2769
        %v2774 = vsub.f32 %v2758, %v2770
        %v2775 = vmul.f32 %v2771, %v2771
        %v2776 = vmul.f32 %v2772, %v2772
        %v2777 = vmul.f32 %v2773, %v2773
        %v2778 = vmul.f32 %v2774, %v2774
        %2779 = vadd.xlane.f32.xlu0 %v2775
        %v2780 = vpop.xlane.xlu0 %2779
        %2781 = vadd.xlane.f32.xlu0 %v2776
        %v2782 = vpop.xlane.xlu0 %2781
        %2783 = vadd.xlane.f32.xlu0 %v2777
        %v2784 = vpop.xlane.xlu0 %2783
        %2785 = vadd.xlane.f32.xlu0 %v2778
        %v2786 = vpop.xlane.xlu0 %2785
        %v2787 = vmul.f32 %v2780, %v1441
        %v2788 = vmul.f32 %v2782, %v1441
        %v2789 = vmul.f32 %v2784, %v1441
        %v2790 = vmul.f32 %v2786, %v1441
        %v2791 = vadd.f32 %v2787, 1e-05
        %v2792 = vadd.f32 %v2788, 1e-05
        %v2793 = vadd.f32 %v2789, 1e-05
        %v2794 = vadd.f32 %v2790, 1e-05
        %v2795 = vrsqrt.pop %v2791
        %v2796 = vrsqrt.pop %v2792
        %v2797 = vrsqrt.pop %v2793
        %v2798 = vrsqrt.pop %v2794
        %v2799 = vmul.f32 %v2771, %v2795
        %v2800 = vmul.f32 %v2772, %v2796
        %v2801 = vmul.f32 %v2773, %v2797
        %v2802 = vmul.f32 %v2774, %v2798
        %v2804 = vlaneseq
        %v2805 = vshrl.u32 %v2804, 7
        %v2806 = vsub.s32 0, %v2805
        %v2807 = vrot.slane %v1333, %v2806
        %v2809 = vmul.f32 %v2799, %v2807
        %v2810 = vmul.f32 %v2800, %v2807
        %v2811 = vmul.f32 %v2801, %v2807
        %v2812 = vmul.f32 %v2802, %v2807
        %v2814 = vlaneseq
        %v2815 = vshrl.u32 %v2814, 7
        %v2816 = vsub.s32 0, %v2815
        %v2817 = vrot.slane %v1334, %v2816
        %v2819 = vadd.f32 %v2809, %v2817
        %v2820 = vadd.f32 %v2810, %v2817
        %v2821 = vadd.f32 %v2811, %v2817
        %v2822 = vadd.f32 %v2812, %v2817
        %v2823 = vpack.c.bf16 %v2820, %v2819
        %v2824 = vpack.c.bf16 %v2822, %v2821
        %v2826 = vlaneseq
        %v2827 = vshrl.u32 %v2826, 7
        %v2828 = vsub.s32 0, %v2827
        %v2829 = vrot.slane %v1367, %v2828
        %v2830 = vlaneseq
        %v2831 = vshrl.u32 %v2830, 7
        %v2832 = vsub.s32 1, %v2831
        %v2833 = vrot.slane %v1367, %v2832
        %v2834 = vlaneseq
        %v2835 = vshrl.u32 %v2834, 7
        %v2836 = vsub.s32 2, %v2835
        %v2837 = vrot.slane %v1367, %v2836
        %v2838 = vlaneseq
        %v2839 = vshrl.u32 %v2838, 7
        %v2840 = vsub.s32 3, %v2839
        %v2841 = vrot.slane %v1367, %v2840
        %v2878 = vunpack.c.l.b16 %v1335
        %v2879 = vunpack.c.h.b16 %v1335
        %v2880 = vunpack.c.l.b16 %v1336
        %v2881 = vunpack.c.h.b16 %v1336
        %v2882 = vunpack.c.l.b16 %v1337
        %v2883 = vunpack.c.h.b16 %v1337
        %v2884 = vunpack.c.l.b16 %v1338
        %v2885 = vunpack.c.h.b16 %v1338
        %v2886 = vunpack.c.l.b16 %v1339
        %v2887 = vunpack.c.h.b16 %v1339
        %v2888 = vunpack.c.l.b16 %v1340
        %v2889 = vunpack.c.h.b16 %v1340
        %v2890 = vunpack.c.l.b16 %v1341
        %v2891 = vunpack.c.h.b16 %v1341
        %v2892 = vunpack.c.l.b16 %v1342
        %v2893 = vunpack.c.h.b16 %v1342
        %v2894 = vunpack.c.l.b16 %v1343
        %v2895 = vunpack.c.h.b16 %v1343
        %v2896 = vunpack.c.l.b16 %v1344
        %v2897 = vunpack.c.h.b16 %v1344
        %v2898 = vunpack.c.l.b16 %v1345
        %v2899 = vunpack.c.h.b16 %v1345
        %v2900 = vunpack.c.l.b16 %v1346
        %v2901 = vunpack.c.h.b16 %v1346
        %v2902 = vunpack.c.l.b16 %v1347
        %v2903 = vunpack.c.h.b16 %v1347
        %v2904 = vunpack.c.l.b16 %v1348
        %v2905 = vunpack.c.h.b16 %v1348
        %v2906 = vunpack.c.l.b16 %v1349
        %v2907 = vunpack.c.h.b16 %v1349
        %v2908 = vunpack.c.l.b16 %v1350
        %v2909 = vunpack.c.h.b16 %v1350
        %v2910 = vunpack.c.l.b16 %v1351
        %v2911 = vunpack.c.h.b16 %v1351
        %v2912 = vunpack.c.l.b16 %v1352
        %v2913 = vunpack.c.h.b16 %v1352
        %v2914 = vunpack.c.l.b16 %v1353
        %v2915 = vunpack.c.h.b16 %v1353
        %v2916 = vunpack.c.l.b16 %v1354
        %v2917 = vunpack.c.h.b16 %v1354
        %v2918 = vunpack.c.l.b16 %v1355
        %v2919 = vunpack.c.h.b16 %v1355
        %v2920 = vunpack.c.l.b16 %v1356
        %v2921 = vunpack.c.h.b16 %v1356
        %v2922 = vunpack.c.l.b16 %v1357
        %v2923 = vunpack.c.h.b16 %v1357
        %v2924 = vunpack.c.l.b16 %v1358
        %v2925 = vunpack.c.h.b16 %v1358
        %v2926 = vunpack.c.l.b16 %v1359
        %v2927 = vunpack.c.h.b16 %v1359
        %v2928 = vunpack.c.l.b16 %v1360
        %v2929 = vunpack.c.h.b16 %v1360
        %v2930 = vunpack.c.l.b16 %v1361
        %v2931 = vunpack.c.h.b16 %v1361
        %v2932 = vunpack.c.l.b16 %v1362
        %v2933 = vunpack.c.h.b16 %v1362
        %v2934 = vunpack.c.l.b16 %v1363
        %v2935 = vunpack.c.h.b16 %v1363
        %v2936 = vunpack.c.l.b16 %v1364
        %v2937 = vunpack.c.h.b16 %v1364
        %v2938 = vunpack.c.l.b16 %v1365
        %v2939 = vunpack.c.h.b16 %v1365
        %v2940 = vunpack.c.l.b16 %v1366
        %v2941 = vunpack.c.h.b16 %v1366
        %v2942 = vpack.c.b16 %v2882, %v2878
        %v2943 = vpack.c.b16 %v2883, %v2879
        %v2944 = vpack.c.b16 %v2884, %v2880
        %v2945 = vpack.c.b16 %v2885, %v2881
        %v2946 = vpack.c.b16 %v2890, %v2886
        %v2947 = vpack.c.b16 %v2891, %v2887
        %v2948 = vpack.c.b16 %v2892, %v2888
        %v2949 = vpack.c.b16 %v2893, %v2889
        %v2950 = vpack.c.b16 %v2898, %v2894
        %v2951 = vpack.c.b16 %v2899, %v2895
        %v2952 = vpack.c.b16 %v2900, %v2896
        %v2953 = vpack.c.b16 %v2901, %v2897
        %v2954 = vpack.c.b16 %v2906, %v2902
        %v2955 = vpack.c.b16 %v2907, %v2903
        %v2956 = vpack.c.b16 %v2908, %v2904
        %v2957 = vpack.c.b16 %v2909, %v2905
        %v2958 = vpack.c.b16 %v2914, %v2910
        %v2959 = vpack.c.b16 %v2915, %v2911
        %v2960 = vpack.c.b16 %v2916, %v2912
        %v2961 = vpack.c.b16 %v2917, %v2913
        %v2962 = vpack.c.b16 %v2922, %v2918
        %v2963 = vpack.c.b16 %v2923, %v2919
        %v2964 = vpack.c.b16 %v2924, %v2920
        %v2965 = vpack.c.b16 %v2925, %v2921
        %v2966 = vpack.c.b16 %v2930, %v2926
        %v2967 = vpack.c.b16 %v2931, %v2927
        %v2968 = vpack.c.b16 %v2932, %v2928
        %v2969 = vpack.c.b16 %v2933, %v2929
        %v2970 = vpack.c.b16 %v2938, %v2934
        %v2971 = vpack.c.b16 %v2939, %v2935
        %v2972 = vpack.c.b16 %v2940, %v2936
        %v2973 = vpack.c.b16 %v2941, %v2937
        %3006 = vmatprep.subr.bf16.mxu0 %v2943
        %3007 = vmatpush1.bf16.msra.mxu0 %v2942
        %3008 = vmatprep.subr.bf16.mxu0 %v2947
        %3009 = vmatpush1.bf16.msra.mxu0 %v2946
        %3010 = vmatprep.subr.bf16.mxu0 %v2951
        %3011 = vmatpush1.bf16.msra.mxu0 %v2950
        %3012 = vmatprep.subr.bf16.mxu0 %v2955
        %3013 = vmatpush1.bf16.msra.mxu0 %v2954
        %3014 = vmatprep.subr.bf16.mxu0 %v2959
        %3015 = vmatpush1.bf16.msra.mxu0 %v2958
        %3016 = vmatprep.subr.bf16.mxu0 %v2963
        %3017 = vmatpush1.bf16.msra.mxu0 %v2962
        %3018 = vmatprep.subr.bf16.mxu0 %v2967
        %3019 = vmatpush1.bf16.msra.mxu0 %v2966
        %3020 = vmatprep.subr.bf16.mxu0 %v2971
        %3021 = vmatpush1.bf16.msra.mxu0 %v2970
        %3022 = vmatprep.subr.bf16.mxu0 0
        %3023 = vmatpush1.bf16.msra.mxu0 0
        %3024 = vmatprep.subr.bf16.mxu0 0
        %3025 = vmatpush1.bf16.msra.mxu0 0
        %3026 = vmatprep.subr.bf16.mxu0 0
        %3027 = vmatpush1.bf16.msra.mxu0 0
        %3028 = vmatprep.subr.bf16.mxu0 0
        %3029 = vmatpush1.bf16.msra.mxu0 0
        %3030 = vmatprep.subr.bf16.mxu0 0
        %3031 = vmatpush1.bf16.msra.mxu0 0
        %3032 = vmatprep.subr.bf16.mxu0 0
        %3033 = vmatpush1.bf16.msra.mxu0 0
        %3034 = vmatprep.subr.bf16.mxu0 0
        %3035 = vmatpush1.bf16.msra.mxu0 0
        %3036 = vmatprep.subr.bf16.mxu0 0
        %3037 = vmatpush1.bf16.msra.mxu0 0
        %3038 = vmatprep.mubr.bf16.mxu0 0
        %3039 = vmatmul.mubr.bf16.gmra.mrb[0].mxu0 %v2823
        %v3040 = vpop.f32.mrb[0].mxu0
        %v3041 = vadd.f32 %v2829, %v3040
        %v3042 = vpop.f32.mrb[0].mxu0
        %v3043 = vadd.f32 %v2833, %v3042
        %v3044 = vpop.f32.mrb[0].mxu0
        %v3045 = vadd.f32 %v2829, %v3044
        %v3046 = vpop.f32.mrb[0].mxu0
        %v3047 = vadd.f32 %v2833, %v3046
        %3048 = vmatprep.mubr.bf16.mxu0 0
        %3049 = vmatmul.mubr.bf16.gmra.mrb[0].mxu0 %v2824
        %v3050 = vpop.f32.mrb[0].mxu0
        %v3051 = vadd.f32 %v2829, %v3050
        %v3052 = vpop.f32.mrb[0].mxu0
        %v3053 = vadd.f32 %v2833, %v3052
        %v3054 = vpop.f32.mrb[0].mxu0
        %v3055 = vadd.f32 %v2829, %v3054
        %v3056 = vpop.f32.mrb[0].mxu0
        %v3057 = vadd.f32 %v2833, %v3056
        %3058 = vdwg.mxu0
        %3059 = vmatprep.subr.bf16.mxu0 %v2945
        %3060 = vmatpush1.bf16.msra.mxu0 %v2944
        %3061 = vmatprep.subr.bf16.mxu0 %v2949
        %3062 = vmatpush1.bf16.msra.mxu0 %v2948
        %3063 = vmatprep.subr.bf16.mxu0 %v2953
        %3064 = vmatpush1.bf16.msra.mxu0 %v2952
        %3065 = vmatprep.subr.bf16.mxu0 %v2957
        %3066 = vmatpush1.bf16.msra.mxu0 %v2956
        %3067 = vmatprep.subr.bf16.mxu0 %v2961
        %3068 = vmatpush1.bf16.msra.mxu0 %v2960
        %3069 = vmatprep.subr.bf16.mxu0 %v2965
        %3070 = vmatpush1.bf16.msra.mxu0 %v2964
        %3071 = vmatprep.subr.bf16.mxu0 %v2969
        %3072 = vmatpush1.bf16.msra.mxu0 %v2968
        %3073 = vmatprep.subr.bf16.mxu0 %v2973
        %3074 = vmatpush1.bf16.msra.mxu0 %v2972
        %3075 = vmatprep.subr.bf16.mxu0 0
        %3076 = vmatpush1.bf16.msra.mxu0 0
        %3077 = vmatprep.subr.bf16.mxu0 0
        %3078 = vmatpush1.bf16.msra.mxu0 0
        %3079 = vmatprep.subr.bf16.mxu0 0
        %3080 = vmatpush1.bf16.msra.mxu0 0
        %3081 = vmatprep.subr.bf16.mxu0 0
        %3082 = vmatpush1.bf16.msra.mxu0 0
        %3083 = vmatprep.subr.bf16.mxu0 0
        %3084 = vmatpush1.bf16.msra.mxu0 0
        %3085 = vmatprep.subr.bf16.mxu0 0
        %3086 = vmatpush1.bf16.msra.mxu0 0
        %3087 = vmatprep.subr.bf16.mxu0 0
        %3088 = vmatpush1.bf16.msra.mxu0 0
        %3089 = vmatprep.subr.bf16.mxu0 0
        %3090 = vmatpush1.bf16.msra.mxu0 0
        %3091 = vmatprep.mubr.bf16.mxu0 0
        %3092 = vmatmul.mubr.bf16.gmra.mrb[0].mxu0 %v2823
        %v3093 = vpop.f32.mrb[0].mxu0
        %v3094 = vadd.f32 %v2837, %v3093
        %v3095 = vpop.f32.mrb[0].mxu0
        %v3096 = vadd.f32 %v2841, %v3095
        %v3097 = vpop.f32.mrb[0].mxu0
        %v3098 = vadd.f32 %v2837, %v3097
        %v3099 = vpop.f32.mrb[0].mxu0
        %v3100 = vadd.f32 %v2841, %v3099
        %3101 = vmatprep.mubr.bf16.mxu0 0
        %3102 = vmatmul.mubr.bf16.gmra.mrb[0].mxu0 %v2824
        %v3103 = vpop.f32.mrb[0].mxu0
        %v3104 = vadd.f32 %v2837, %v3103
        %v3105 = vpop.f32.mrb[0].mxu0
        %v3106 = vadd.f32 %v2841, %v3105
        %v3107 = vpop.f32.mrb[0].mxu0
        %v3108 = vadd.f32 %v2837, %v3107
        %v3109 = vpop.f32.mrb[0].mxu0
        %v3110 = vadd.f32 %v2841, %v3109
        %3111 = vdwg.mxu0
        %v3112 = vmul.f32 %v3041, 0.5
        %v3113 = vmul.f32 %v3043, 0.5
        %v3114 = vmul.f32 %v3094, 0.5
        %v3115 = vmul.f32 %v3096, 0.5
        %v3116 = vmul.f32 %v3045, 0.5
        %v3117 = vmul.f32 %v3047, 0.5
        %v3118 = vmul.f32 %v3098, 0.5
        %v3119 = vmul.f32 %v3100, 0.5
        %v3120 = vmul.f32 %v3051, 0.5
        %v3121 = vmul.f32 %v3053, 0.5
        %v3122 = vmul.f32 %v3104, 0.5
        %v3123 = vmul.f32 %v3106, 0.5
        %v3124 = vmul.f32 %v3055, 0.5
        %v3125 = vmul.f32 %v3057, 0.5
        %v3126 = vmul.f32 %v3108, 0.5
        %v3127 = vmul.f32 %v3110, 0.5
        %v3128 = vrcp.pop 1.4142135
        %v3129 = vmul.f32 %v3041, %v3128
        %v3130 = vmul.f32 %v3043, %v3128
        %v3131 = vmul.f32 %v3094, %v3128
        %v3132 = vmul.f32 %v3096, %v3128
        %v3133 = vmul.f32 %v3045, %v3128
        %v3134 = vmul.f32 %v3047, %v3128
        %v3135 = vmul.f32 %v3098, %v3128
        %v3136 = vmul.f32 %v3100, %v3128
        %v3137 = vmul.f32 %v3051, %v3128
        %v3138 = vmul.f32 %v3053, %v3128
        %v3139 = vmul.f32 %v3104, %v3128
        %v3140 = vmul.f32 %v3106, %v3128
        %v3141 = vmul.f32 %v3055, %v3128
        %v3142 = vmul.f32 %v3057, %v3128
        %v3143 = vmul.f32 %v3108, %v3128
        %v3144 = vmul.f32 %v3110, %v3128
        %v3145 = verf.f32.pop %v3129
        %v3146 = verf.f32.pop %v3130
        %v3147 = verf.f32.pop %v3131
        %v3148 = verf.f32.pop %v3132
        %v3149 = verf.f32.pop %v3133
        %v3150 = verf.f32.pop %v3134
        %v3151 = verf.f32.pop %v3135
        %v3152 = verf.f32.pop %v3136
        %v3153 = verf.f32.pop %v3137
        %v3154 = verf.f32.pop %v3138
        %v3155 = verf.f32.pop %v3139
        %v3156 = verf.f32.pop %v3140
        %v3157 = verf.f32.pop %v3141
        %v3158 = verf.f32.pop %v3142
        %v3159 = verf.f32.pop %v3143
        %v3160 = verf.f32.pop %v3144
        %v3161 = vadd.f32 %v3145, 1.0
        %v3162 = vadd.f32 %v3146, 1.0
        %v3163 = vadd.f32 %v3147, 1.0
        %v3164 = vadd.f32 %v3148, 1.0
        %v3165 = vadd.f32 %v3149, 1.0
        %v3166 = vadd.f32 %v3150, 1.0
        %v3167 = vadd.f32 %v3151, 1.0
        %v3168 = vadd.f32 %v3152, 1.0
        %v3169 = vadd.f32 %v3153, 1.0
        %v3170 = vadd.f32 %v3154, 1.0
        %v3171 = vadd.f32 %v3155, 1.0
        %v3172 = vadd.f32 %v3156, 1.0
        %v3173 = vadd.f32 %v3157, 1.0
        %v3174 = vadd.f32 %v3158, 1.0
        %v3175 = vadd.f32 %v3159, 1.0
        %v3176 = vadd.f32 %v3160, 1.0
        %v3177 = vmul.f32 %v3112, %v3161
        %v3178 = vmul.f32 %v3113, %v3162
        %v3179 = vmul.f32 %v3114, %v3163
        %v3180 = vmul.f32 %v3115, %v3164
        %v3181 = vmul.f32 %v3116, %v3165
        %v3182 = vmul.f32 %v3117, %v3166
        %v3183 = vmul.f32 %v3118, %v3167
        %v3184 = vmul.f32 %v3119, %v3168
        %v3185 = vmul.f32 %v3120, %v3169
        %v3186 = vmul.f32 %v3121, %v3170
        %v3187 = vmul.f32 %v3122, %v3171
        %v3188 = vmul.f32 %v3123, %v3172
        %v3189 = vmul.f32 %v3124, %v3173
        %v3190 = vmul.f32 %v3125, %v3174
        %v3191 = vmul.f32 %v3126, %v3175
        %v3192 = vmul.f32 %v3127, %v3176
        %v3193 = vpack.c.bf16 %v3181, %v3177
        %v3194 = vpack.c.bf16 %v3182, %v3178
        %v3195 = vpack.c.bf16 %v3183, %v3179
        %v3196 = vpack.c.bf16 %v3184, %v3180
        %v3197 = vpack.c.bf16 %v3189, %v3185
        %v3198 = vpack.c.bf16 %v3190, %v3186
        %v3199 = vpack.c.bf16 %v3191, %v3187
        %v3200 = vpack.c.bf16 %v3192, %v3188
        %v3202 = vlaneseq
        %v3203 = vshrl.u32 %v3202, 7
        %v3204 = vsub.s32 0, %v3203
        %v3205 = vrot.slane %v1432, %v3204
        %v3271 = vunpack.c.l.b16 %v1368
        %v3272 = vunpack.c.l.b16 %v1369
        %v3273 = vunpack.c.l.b16 %v1370
        %v3274 = vunpack.c.l.b16 %v1371
        %v3275 = vunpack.c.l.b16 %v1372
        %v3276 = vunpack.c.l.b16 %v1373
        %v3277 = vunpack.c.l.b16 %v1374
        %v3278 = vunpack.c.l.b16 %v1375
        %v3279 = vunpack.c.l.b16 %v1376
        %v3280 = vunpack.c.l.b16 %v1377
        %v3281 = vunpack.c.l.b16 %v1378
        %v3282 = vunpack.c.l.b16 %v1379
        %v3283 = vunpack.c.l.b16 %v1380
        %v3284 = vunpack.c.l.b16 %v1381
        %v3285 = vunpack.c.l.b16 %v1382
        %v3286 = vunpack.c.l.b16 %v1383
        %v3287 = vunpack.c.l.b16 %v1384
        %v3288 = vunpack.c.l.b16 %v1385
        %v3289 = vunpack.c.l.b16 %v1386
        %v3290 = vunpack.c.l.b16 %v1387
        %v3291 = vunpack.c.l.b16 %v1388
        %v3292 = vunpack.c.l.b16 %v1389
        %v3293 = vunpack.c.l.b16 %v1390
        %v3294 = vunpack.c.l.b16 %v1391
        %v3295 = vunpack.c.l.b16 %v1392
        %v3296 = vunpack.c.l.b16 %v1393
        %v3297 = vunpack.c.l.b16 %v1394
        %v3298 = vunpack.c.l.b16 %v1395
        %v3299 = vunpack.c.l.b16 %v1396
        %v3300 = vunpack.c.l.b16 %v1397
        %v3301 = vunpack.c.l.b16 %v1398
        %v3302 = vunpack.c.l.b16 %v1399
        %v3303 = vunpack.c.l.b16 %v1400
        %v3304 = vunpack.c.l.b16 %v1401
        %v3305 = vunpack.c.l.b16 %v1402
        %v3306 = vunpack.c.l.b16 %v1403
        %v3307 = vunpack.c.l.b16 %v1404
        %v3308 = vunpack.c.l.b16 %v1405
        %v3309 = vunpack.c.l.b16 %v1406
        %v3310 = vunpack.c.l.b16 %v1407
        %v3311 = vunpack.c.l.b16 %v1408
        %v3312 = vunpack.c.l.b16 %v1409
        %v3313 = vunpack.c.l.b16 %v1410
        %v3314 = vunpack.c.l.b16 %v1411
        %v3315 = vunpack.c.l.b16 %v1412
        %v3316 = vunpack.c.l.b16 %v1413
        %v3317 = vunpack.c.l.b16 %v1414
        %v3318 = vunpack.c.l.b16 %v1415
        %v3319 = vunpack.c.l.b16 %v1416
        %v3320 = vunpack.c.l.b16 %v1417
        %v3321 = vunpack.c.l.b16 %v1418
        %v3322 = vunpack.c.l.b16 %v1419
        %v3323 = vunpack.c.l.b16 %v1420
        %v3324 = vunpack.c.l.b16 %v1421
        %v3325 = vunpack.c.l.b16 %v1422
        %v3326 = vunpack.c.l.b16 %v1423
        %v3327 = vunpack.c.l.b16 %v1424
        %v3328 = vunpack.c.l.b16 %v1425
        %v3329 = vunpack.c.l.b16 %v1426
        %v3330 = vunpack.c.l.b16 %v1427
        %v3331 = vunpack.c.l.b16 %v1428
        %v3332 = vunpack.c.l.b16 %v1429
        %v3333 = vunpack.c.l.b16 %v1430
        %v3334 = vunpack.c.l.b16 %v1431
        %v3335 = vpack.c.b16 %v3272, %v3271
        %v3336 = vpack.c.b16 %v3274, %v3273
        %v3337 = vpack.c.b16 %v3276, %v3275
        %v3338 = vpack.c.b16 %v3278, %v3277
        %v3339 = vpack.c.b16 %v3280, %v3279
        %v3340 = vpack.c.b16 %v3282, %v3281
        %v3341 = vpack.c.b16 %v3284, %v3283
        %v3342 = vpack.c.b16 %v3286, %v3285
        %v3343 = vpack.c.b16 %v3288, %v3287
        %v3344 = vpack.c.b16 %v3290, %v3289
        %v3345 = vpack.c.b16 %v3292, %v3291
        %v3346 = vpack.c.b16 %v3294, %v3293
        %v3347 = vpack.c.b16 %v3296, %v3295
        %v3348 = vpack.c.b16 %v3298, %v3297
        %v3349 = vpack.c.b16 %v3300, %v3299
        %v3350 = vpack.c.b16 %v3302, %v3301
        %v3351 = vpack.c.b16 %v3304, %v3303
        %v3352 = vpack.c.b16 %v3306, %v3305
        %v3353 = vpack.c.b16 %v3308, %v3307
        %v3354 = vpack.c.b16 %v3310, %v3309
        %v3355 = vpack.c.b16 %v3312, %v3311
        %v3356 = vpack.c.b16 %v3314, %v3313
        %v3357 = vpack.c.b16 %v3316, %v3315
        %v3358 = vpack.c.b16 %v3318, %v3317
        %v3359 = vpack.c.b16 %v3320, %v3319
        %v3360 = vpack.c.b16 %v3322, %v3321
        %v3361 = vpack.c.b16 %v3324, %v3323
        %v3362 = vpack.c.b16 %v3326, %v3325
        %v3363 = vpack.c.b16 %v3328, %v3327
        %v3364 = vpack.c.b16 %v3330, %v3329
        %v3365 = vpack.c.b16 %v3332, %v3331
        %v3366 = vpack.c.b16 %v3334, %v3333
        %3399 = vmatprep.subr.bf16.mxu0 0
        %3400 = vmatpush1.bf16.msra.mxu0 %v3335
        %3401 = vmatprep.subr.bf16.mxu0 0
        %3402 = vmatpush1.bf16.msra.mxu0 %v3336
        %3403 = vmatprep.subr.bf16.mxu0 0
        %3404 = vmatpush1.bf16.msra.mxu0 %v3337
        %3405 = vmatprep.subr.bf16.mxu0 0
        %3406 = vmatpush1.bf16.msra.mxu0 %v3338
        %3407 = vmatprep.subr.bf16.mxu0 0
        %3408 = vmatpush1.bf16.msra.mxu0 %v3339
        %3409 = vmatprep.subr.bf16.mxu0 0
        %3410 = vmatpush1.bf16.msra.mxu0 %v3340
        %3411 = vmatprep.subr.bf16.mxu0 0
        %3412 = vmatpush1.bf16.msra.mxu0 %v3341
        %3413 = vmatprep.subr.bf16.mxu0 0
        %3414 = vmatpush1.bf16.msra.mxu0 %v3342
        %3415 = vmatprep.subr.bf16.mxu0 0
        %3416 = vmatpush1.bf16.msra.mxu0 %v3343
        %3417 = vmatprep.subr.bf16.mxu0 0
        %3418 = vmatpush1.bf16.msra.mxu0 %v3344
        %3419 = vmatprep.subr.bf16.mxu0 0
        %3420 = vmatpush1.bf16.msra.mxu0 %v3345
        %3421 = vmatprep.subr.bf16.mxu0 0
        %3422 = vmatpush1.bf16.msra.mxu0 %v3346
        %3423 = vmatprep.subr.bf16.mxu0 0
        %3424 = vmatpush1.bf16.msra.mxu0 %v3347
        %3425 = vmatprep.subr.bf16.mxu0 0
        %3426 = vmatpush1.bf16.msra.mxu0 %v3348
        %3427 = vmatprep.subr.bf16.mxu0 0
        %3428 = vmatpush1.bf16.msra.mxu0 %v3349
        %3429 = vmatprep.subr.bf16.mxu0 0
        %3430 = vmatpush1.bf16.msra.mxu0 %v3350
        %3431 = vmatprep.mubr.bf16.mxu0 %v3194
        %3432 = vmatmul.mubr.bf16.gmra.mrb[0].mxu0 %v3193
        %v3433 = vpop.f32.mrb[0].mxu0
        %v3434 = vadd.f32 %v3205, %v3433
        %v3435 = vpop.f32.mrb[0].mxu0
        %v3436 = vpop.f32.mrb[0].mxu0
        %v3437 = vadd.f32 %v3205, %v3436
        %v3438 = vpop.f32.mrb[0].mxu0
        %3439 = vmatprep.mubr.bf16.mxu0 %v3198
        %3440 = vmatmul.mubr.bf16.gmra.mrb[0].mxu0 %v3197
        %v3441 = vpop.f32.mrb[0].mxu0
        %v3442 = vadd.f32 %v3205, %v3441
        %v3443 = vpop.f32.mrb[0].mxu0
        %v3444 = vpop.f32.mrb[0].mxu0
        %v3445 = vadd.f32 %v3205, %v3444
        %v3446 = vpop.f32.mrb[0].mxu0
        %3447 = vdwg.mxu0
        %3448 = vmatprep.subr.bf16.mxu0 0
        %3449 = vmatpush1.bf16.msra.mxu0 %v3351
        %3450 = vmatprep.subr.bf16.mxu0 0
        %3451 = vmatpush1.bf16.msra.mxu0 %v3352
        %3452 = vmatprep.subr.bf16.mxu0 0
        %3453 = vmatpush1.bf16.msra.mxu0 %v3353
        %3454 = vmatprep.subr.bf16.mxu0 0
        %3455 = vmatpush1.bf16.msra.mxu0 %v3354
        %3456 = vmatprep.subr.bf16.mxu0 0
        %3457 = vmatpush1.bf16.msra.mxu0 %v3355
        %3458 = vmatprep.subr.bf16.mxu0 0
        %3459 = vmatpush1.bf16.msra.mxu0 %v3356
        %3460 = vmatprep.subr.bf16.mxu0 0
        %3461 = vmatpush1.bf16.msra.mxu0 %v3357
        %3462 = vmatprep.subr.bf16.mxu0 0
        %3463 = vmatpush1.bf16.msra.mxu0 %v3358
        %3464 = vmatprep.subr.bf16.mxu0 0
        %3465 = vmatpush1.bf16.msra.mxu0 %v3359
        %3466 = vmatprep.subr.bf16.mxu0 0
        %3467 = vmatpush1.bf16.msra.mxu0 %v3360
        %3468 = vmatprep.subr.bf16.mxu0 0
        %3469 = vmatpush1.bf16.msra.mxu0 %v3361
        %3470 = vmatprep.subr.bf16.mxu0 0
        %3471 = vmatpush1.bf16.msra.mxu0 %v3362
        %3472 = vmatprep.subr.bf16.mxu0 0
        %3473 = vmatpush1.bf16.msra.mxu0 %v3363
        %3474 = vmatprep.subr.bf16.mxu0 0
        %3475 = vmatpush1.bf16.msra.mxu0 %v3364
        %3476 = vmatprep.subr.bf16.mxu0 0
        %3477 = vmatpush1.bf16.msra.mxu0 %v3365
        %3478 = vmatprep.subr.bf16.mxu0 0
        %3479 = vmatpush1.bf16.msra.mxu0 %v3366
        %3480 = vmatprep.mubr.bf16.mxu0 %v3196
        %3481 = vmatmul.mubr.bf16.gmra.mrb[0].mxu0 %v3195
        %v3482 = vpop.f32.mrb[0].mxu0
        %v3483 = vadd.f32 %v3434, %v3482
        %v3484 = vpop.f32.mrb[0].mxu0
        %v3485 = vpop.f32.mrb[0].mxu0
        %v3486 = vadd.f32 %v3437, %v3485
        %v3487 = vpop.f32.mrb[0].mxu0
        %3488 = vmatprep.mubr.bf16.mxu0 %v3200
        %3489 = vmatmul.mubr.bf16.gmra.mrb[0].mxu0 %v3199
        %v3490 = vpop.f32.mrb[0].mxu0
        %v3491 = vadd.f32 %v3442, %v3490
        %v3492 = vpop.f32.mrb[0].mxu0
        %v3493 = vpop.f32.mrb[0].mxu0
        %v3494 = vadd.f32 %v3445, %v3493
        %v3495 = vpop.f32.mrb[0].mxu0
        %3496 = vdwg.mxu0
        %v3497 = vadd.f32 %v2755, %v3483
        %v3498 = vadd.f32 %v2756, %v3486
        %v3499 = vadd.f32 %v2757, %v3491
        %v3500 = vadd.f32 %v2758, %v3494
        %3501 = vst [vmem:[#allocation2] sm:$0xff] %v3497
        %3502 = vst [vmem:[#allocation2 + $0x8] sm:$0xff] %v3498
        %3503 = vst [vmem:[#allocation2 + $0x10] sm:$0xff] %v3499
        %3504 = vst [vmem:[#allocation2 + $0x18] sm:$0xff] %v3500
        %p3505 = scmp.eq.s32.totalorder %s50, 1
        // Predicated region
        $region173: #{tpu_custom_call.1} parent=123 // pred_check
          %p3506 = pneg %p3505
        $region174: #{tpu_custom_call.1} parent=123 // pred_check_branch
          %3508 = sbr.rel (%p3506) target = $region176
        $region175: #{tpu_custom_call.1} parent=123 // pred_region
          %v3509 = vld [vmem:[#allocation18] sm:$0x1]
          %v3510 = vld [vmem:[#allocation20] sm:$0x1]
          %3511 = vadd.xlane.f32.xlu0 %v3497
          %v3512 = vpop.xlane.xlu0 %3511
          %3513 = vadd.xlane.f32.xlu0 %v3498
          %v3514 = vpop.xlane.xlu0 %3513
          %3515 = vadd.xlane.f32.xlu0 %v3499
          %v3516 = vpop.xlane.xlu0 %3515
          %3517 = vadd.xlane.f32.xlu0 %v3500
          %v3518 = vpop.xlane.xlu0 %3517
          %v3519 = vmul.f32 %v3512, %v1441
          %v3520 = vmul.f32 %v3514, %v1441
          %v3521 = vmul.f32 %v3516, %v1441
          %v3522 = vmul.f32 %v3518, %v1441
          %v3523 = vsub.f32 %v3497, %v3519
          %v3524 = vsub.f32 %v3498, %v3520
          %v3525 = vsub.f32 %v3499, %v3521
          %v3526 = vsub.f32 %v3500, %v3522
          %v3527 = vmul.f32 %v3523, %v3523
          %v3528 = vmul.f32 %v3524, %v3524
          %v3529 = vmul.f32 %v3525, %v3525
          %v3530 = vmul.f32 %v3526, %v3526
          %3531 = vadd.xlane.f32.xlu0 %v3527
          %v3532 = vpop.xlane.xlu0 %3531
          %3533 = vadd.xlane.f32.xlu0 %v3528
          %v3534 = vpop.xlane.xlu0 %3533
          %3535 = vadd.xlane.f32.xlu0 %v3529
          %v3536 = vpop.xlane.xlu0 %3535
          %3537 = vadd.xlane.f32.xlu0 %v3530
          %v3538 = vpop.xlane.xlu0 %3537
          %v3539 = vmul.f32 %v3532, %v1441
          %v3540 = vmul.f32 %v3534, %v1441
          %v3541 = vmul.f32 %v3536, %v1441
          %v3542 = vmul.f32 %v3538, %v1441
          %v3543 = vadd.f32 %v3539, 1e-05
          %v3544 = vadd.f32 %v3540, 1e-05
          %v3545 = vadd.f32 %v3541, 1e-05
          %v3546 = vadd.f32 %v3542, 1e-05
          %v3547 = vrsqrt.pop %v3543
          %v3548 = vrsqrt.pop %v3544
          %v3549 = vrsqrt.pop %v3545
          %v3550 = vrsqrt.pop %v3546
          %v3551 = vmul.f32 %v3523, %v3547
          %v3552 = vmul.f32 %v3524, %v3548
          %v3553 = vmul.f32 %v3525, %v3549
          %v3554 = vmul.f32 %v3526, %v3550
          %v3556 = vlaneseq
          %v3557 = vshrl.u32 %v3556, 7
          %v3558 = vsub.s32 0, %v3557
          %v3559 = vrot.slane %v3509, %v3558
          %v3561 = vmul.f32 %v3551, %v3559
          %v3562 = vmul.f32 %v3552, %v3559
          %v3563 = vmul.f32 %v3553, %v3559
          %v3564 = vmul.f32 %v3554, %v3559
          %v3566 = vlaneseq
          %v3567 = vshrl.u32 %v3566, 7
          %v3568 = vsub.s32 0, %v3567
          %v3569 = vrot.slane %v3510, %v3568
          %v3571 = vadd.f32 %v3561, %v3569
          %v3572 = vadd.f32 %v3562, %v3569
          %v3573 = vadd.f32 %v3563, %v3569
          %v3574 = vadd.f32 %v3564, %v3569
          %v3575 = vpack.c.bf16 %v3572, %v3571
          %v3576 = vpack.c.bf16 %v3574, %v3573
          %v3577 = vld [vmem:[%s24] sm:$0xf]
          %v3578 = vld [vmem:[%s24 + $0x4] sm:$0xf]
          %v3579 = vld [vmem:[%s24 + $0x8] sm:$0xf]
          %v3580 = vld [vmem:[%s24 + $0xc] sm:$0xf]
          %v3581 = vld [vmem:[%s24 + $0x10] sm:$0xf]
          %v3582 = vld [vmem:[%s24 + $0x14] sm:$0xf]
          %v3583 = vld [vmem:[%s24 + $0x18] sm:$0xf]
          %v3584 = vld [vmem:[%s24 + $0x1c] sm:$0xf]
          %v3585 = vld [vmem:[%s24 + $0x20] sm:$0xf]
          %v3586 = vld [vmem:[%s24 + $0x24] sm:$0xf]
          %v3587 = vld [vmem:[%s24 + $0x28] sm:$0xf]
          %v3588 = vld [vmem:[%s24 + $0x2c] sm:$0xf]
          %v3589 = vld [vmem:[%s24 + $0x30] sm:$0xf]
          %v3590 = vld [vmem:[%s24 + $0x34] sm:$0xf]
          %v3591 = vld [vmem:[%s24 + $0x38] sm:$0xf]
          %v3592 = vld [vmem:[%s24 + $0x3c] sm:$0xf]
          %v3593 = vld [vmem:[%s25] sm:$0x1]
          %v3595 = vlaneseq
          %v3596 = vshrl.u32 %v3595, 7
          %v3597 = vsub.s32 0, %v3596
          %v3598 = vrot.slane %v3593, %v3597
          %v3616 = vunpack.c.l.b16 %v3577
          %v3617 = vunpack.c.l.b16 %v3578
          %v3618 = vunpack.c.l.b16 %v3579
          %v3619 = vunpack.c.l.b16 %v3580
          %v3620 = vunpack.c.l.b16 %v3581
          %v3621 = vunpack.c.l.b16 %v3582
          %v3622 = vunpack.c.l.b16 %v3583
          %v3623 = vunpack.c.l.b16 %v3584
          %v3624 = vunpack.c.l.b16 %v3585
          %v3625 = vunpack.c.l.b16 %v3586
          %v3626 = vunpack.c.l.b16 %v3587
          %v3627 = vunpack.c.l.b16 %v3588
          %v3628 = vunpack.c.l.b16 %v3589
          %v3629 = vunpack.c.l.b16 %v3590
          %v3630 = vunpack.c.l.b16 %v3591
          %v3631 = vunpack.c.l.b16 %v3592
          %v3632 = vpack.c.b16 %v3617, %v3616
          %v3633 = vpack.c.b16 %v3619, %v3618
          %v3634 = vpack.c.b16 %v3621, %v3620
          %v3635 = vpack.c.b16 %v3623, %v3622
          %v3636 = vpack.c.b16 %v3625, %v3624
          %v3637 = vpack.c.b16 %v3627, %v3626
          %v3638 = vpack.c.b16 %v3629, %v3628
          %v3639 = vpack.c.b16 %v3631, %v3630
          %3648 = vmatprep.subr.bf16.mxu0 0
          %3649 = vmatpush1.bf16.msra.mxu0 %v3632
          %3650 = vmatprep.subr.bf16.mxu0 0
          %3651 = vmatpush1.bf16.msra.mxu0 %v3633
          %3652 = vmatprep.subr.bf16.mxu0 0
          %3653 = vmatpush1.bf16.msra.mxu0 %v3634
          %3654 = vmatprep.subr.bf16.mxu0 0
          %3655 = vmatpush1.bf16.msra.mxu0 %v3635
          %3656 = vmatprep.subr.bf16.mxu0 0
          %3657 = vmatpush1.bf16.msra.mxu0 %v3636
          %3658 = vmatprep.subr.bf16.mxu0 0
          %3659 = vmatpush1.bf16.msra.mxu0 %v3637
          %3660 = vmatprep.subr.bf16.mxu0 0
          %3661 = vmatpush1.bf16.msra.mxu0 %v3638
          %3662 = vmatprep.subr.bf16.mxu0 0
          %3663 = vmatpush1.bf16.msra.mxu0 %v3639
          %3664 = vmatprep.subr.bf16.mxu0 0
          %3665 = vmatpush1.bf16.msra.mxu0 0
          %3666 = vmatprep.subr.bf16.mxu0 0
          %3667 = vmatpush1.bf16.msra.mxu0 0
          %3668 = vmatprep.subr.bf16.mxu0 0
          %3669 = vmatpush1.bf16.msra.mxu0 0
          %3670 = vmatprep.subr.bf16.mxu0 0
          %3671 = vmatpush1.bf16.msra.mxu0 0
          %3672 = vmatprep.subr.bf16.mxu0 0
          %3673 = vmatpush1.bf16.msra.mxu0 0
          %3674 = vmatprep.subr.bf16.mxu0 0
          %3675 = vmatpush1.bf16.msra.mxu0 0
          %3676 = vmatprep.subr.bf16.mxu0 0
          %3677 = vmatpush1.bf16.msra.mxu0 0
          %3678 = vmatprep.subr.bf16.mxu0 0
          %3679 = vmatpush1.bf16.msra.mxu0 0
          %3680 = vmatprep.mubr.bf16.mxu0 0
          %3681 = vmatmul.mubr.bf16.gmra.mrb[0].mxu0 %v3575
          %v3682 = vpop.f32.mrb[0].mxu0
          %v3683 = vadd.f32 %v3598, %v3682
          %v3684 = vpop.f32.mrb[0].mxu0
          %v3685 = vpop.f32.mrb[0].mxu0
          %v3686 = vadd.f32 %v3598, %v3685
          %v3687 = vpop.f32.mrb[0].mxu0
          %3688 = vmatprep.mubr.bf16.mxu0 0
          %3689 = vmatmul.mubr.bf16.gmra.mrb[0].mxu0 %v3576
          %v3690 = vpop.f32.mrb[0].mxu0
          %v3691 = vadd.f32 %v3598, %v3690
          %v3692 = vpop.f32.mrb[0].mxu0
          %v3693 = vpop.f32.mrb[0].mxu0
          %v3694 = vadd.f32 %v3598, %v3693
          %v3695 = vpop.f32.mrb[0].mxu0
          %3696 = vdwg.mxu0
          %3697 = vst [vmem:[#allocation21] sm:$0xff] %v3683
          %3698 = vst [vmem:[#allocation21 + $0x8] sm:$0xff] %v3686
          %3699 = vst [vmem:[#allocation21 + $0x10] sm:$0xff] %v3691
          %3700 = vst [vmem:[#allocation21 + $0x18] sm:$0xff] %v3694
        $region176: #{tpu_custom_call.1} parent=123 // pred_fallthru
          _
        // Predicated region
        $region177: #{tpu_custom_call.1} parent=123 // pred_check
          %p3701 = pneg %p689
        $region178: #{tpu_custom_call.1} parent=123 // pred_check_branch
          %3703 = sbr.rel (%p3701) target = $region180
        $region179: #{tpu_custom_call.1} parent=123 // pred_region
          %s3705 = ssub.s32 512, 512
          %3706 = vsyncadd [#allocation5], %s3705
          %s3707 = sshll.u32 [#allocation21], 4
          %s3708 = int_to_ptr.vmem [resolvable:$true] %s3707
          %3713 = dma.vmem_to_hbm [thread:$0]  %s3708, 512, %s26, [#allocation5], 128, 128, 8
        $region180: #{tpu_custom_call.1} parent=123 // pred_fallthru
          _
        // Predicated region
        $region181: #{tpu_custom_call.1} parent=123 // pred_check
          %p3714 = pneg %p689
        $region182: #{tpu_custom_call.1} parent=123 // pred_check_branch
          %3716 = sbr.rel (%p3714) target = $region184
        $region183: #{tpu_custom_call.1} parent=123 // pred_region
          %3717 = dma.done [#allocation5], 512
        $region184: #{tpu_custom_call.1} parent=123 // pred_fallthru
          _
      $region124: #{tpu_custom_call.1} parent=5 // pred_fallthru
        _
      %p3718 = scmp.le.s32.totalorder 2, %s45
      // Predicated region
      $region185: #{tpu_custom_call.1} parent=5 // pred_check
        %p3719 = pneg %p3718
      $region186: #{tpu_custom_call.1} parent=5 // pred_check_branch
        %3721 = sbr.rel (%p3719) target = $region188
      $region187: #{tpu_custom_call.1} parent=5 // pred_region
        %s3722 = ssub.s32 %s45, 2
      $region188: #{tpu_custom_call.1} parent=5 // pred_fallthru
        _
    $region6: #{tpu_custom_call.1} parent=1 // loop_footer
      %s49 = sadd.s32 1, %s45
    $region7: #{tpu_custom_call.1} parent=1 // loop_footer_branch
      %44 = sbr.rel target = $region3
    $region8: #{tpu_custom_call.1} parent=1 // loop_exit
      _
    %3723 = vsyncpa [#allocation4], 1
    %s3724 = scalar_lea.sflag [#allocation4], 1
    %3725 = vsyncpa %s3724, 1
    %3726 = vsyncpa [#allocation7], 1
    %3727 = vsyncpa [#allocation10], 1
    %s3728 = scalar_lea.sflag [#allocation10], 1
    %3729 = vsyncpa %s3728, 1
    %3730 = vsyncpa [#allocation13], 1
    %s3731 = scalar_lea.sflag [#allocation13], 1
    %3732 = vsyncpa %s3731, 1
    %3733 = vsyncpa [#allocation16], 1
    %s3734 = scalar_lea.sflag [#allocation16], 1
    %3735 = vsyncpa %s3734, 1
    %3736 = vsyncpa [#allocation19], 1
    %3737 = vsyncpa [#allocation5], 1
    %s3738 = scalar_lea.sflag [#allocation5], 1
    %3739 = vsyncpa %s3738, 1

</llo_original>
